<compile_context>
chip_gen: v5e
topology: v5e:2x2
jax: 0.10.0
libtpu: 0.0.40
codegen_flags: <defaults>
</compile_context>

<pallas_src>
import functools

import jax
import jax.numpy as jnp
from jax.experimental import pallas as pl
from jax.experimental.pallas import tpu as pltpu


# ----------------------------------------------------------------------------
# In-kernel epilogue: Mish with a single transcendental.
# ----------------------------------------------------------------------------
def _mish_f32(y):
    # mish(y) = y * tanh(softplus(y)) = y * t*(t+2) / (t*(t+2) + 2),  t = exp(y).
    # Clamp the exp argument; for y > 20, mish(y) == y to f32 precision anyway.
    t = jnp.exp(jnp.minimum(y, 20.0))
    n = t * (t + 2.0)
    return y * (n * pl.reciprocal(n + 2.0, approx=True))


# ----------------------------------------------------------------------------
# Fused pointwise (1x1) conv kernels:  out = Mish(sum_i A_i @ W_i + bias)
# ----------------------------------------------------------------------------
def _gemm1_bias_mish_kernel(a_ref, w_ref, b_ref, o_ref):
    y = jnp.dot(a_ref[...], w_ref[...], preferred_element_type=jnp.float32)
    o_ref[...] = _mish_f32(y + b_ref[...]).astype(o_ref.dtype)


def _gemm2_bias_mish_kernel(a1_ref, w1_ref, a2_ref, w2_ref, b_ref, o_ref):
    y = jnp.dot(a1_ref[...], w1_ref[...], preferred_element_type=jnp.float32)
    y = y + jnp.dot(a2_ref[...], w2_ref[...], preferred_element_type=jnp.float32)
    o_ref[...] = _mish_f32(y + b_ref[...]).astype(o_ref.dtype)


def _round_up(x, m):
    return (x + m - 1) // m * m


def _pick_tm(m, tm_max=512):
    # Large M tiles amortize the ~0.35us per-grid-step overhead, but keep at least
    # two grid steps so both v7x TensorCores get work on the "parallel" axis.
    return max(8, min(tm_max, _round_up((m + 1) // 2, 8)))


def _mosaic_params(block_bytes, semantics=("parallel",)):
    # ~2x for double buffering plus headroom, clamped so it is valid on every TPU
    # generation (v7x has only 64 MiB physical VMEM per TensorCore).
    limit = int(min(max(2 * block_bytes + (8 << 20), 32 << 20), 48 << 20))
    return pltpu.CompilerParams(dimension_semantics=semantics,
                                vmem_limit_bytes=limit)


def fused_pointwise_conv(a_list, w_list, bias, out_dtype=jnp.bfloat16):
    """out = Mish(sum_i A_i @ W_i + bias);  A_i: (M, K_i), W_i: (K_i, Cout) bf16."""
    m = a_list[0].shape[0]
    cout = w_list[0].shape[1]
    tm = _pick_tm(m)
    grid = (pl.cdiv(m, tm),)          # ragged last block OK: OOB rows masked on store

    inputs, in_specs = [], []
    block_bytes = cout * 4 + tm * cout * 4
    for a, w in zip(a_list, w_list):
        k = a.shape[1]
        inputs += [a.astype(jnp.bfloat16), w]
        in_specs += [pl.BlockSpec((tm, k), lambda i: (i, 0)),
                     pl.BlockSpec((k, cout), lambda i: (0, 0))]
        block_bytes += tm * k * 2 + k * cout * 2
    inputs.append(bias)
    in_specs.append(pl.BlockSpec((1, cout), lambda i: (0, 0)))

    kernel = _gemm1_bias_mish_kernel if len(a_list) == 1 else _gemm2_bias_mish_kernel
    # NOTE: the lane (last) dim equals Cout; real CSPDarknet channel counts (64..512)
    # are lane-dense. The tiny demo (Cout=8) uses masked stores rather than padding
    # channels 16x.
    return pl.pallas_call(
        kernel,
        out_shape=jax.ShapeDtypeStruct((m, cout), out_dtype),
        grid=grid,
        in_specs=in_specs,
        out_specs=pl.BlockSpec((tm, cout), lambda i: (i, 0)),
        compiler_params=_mosaic_params(block_bytes),
    )(*inputs)


# ----------------------------------------------------------------------------
# Fused 3x3 conv kernel (no HBM im2col): accumulate 9 shifted dots over the
# flattened (phased) padded image, then bias + Mish.
# ----------------------------------------------------------------------------
def _conv3x3_bias_mish_kernel(ph_ref, w_ref, b_ref, o_ref, *, taps):
    # ph_ref: (P, Pf, Cin) bf16 flattened padded phase(s) of ONE image
    # w_ref : (9, Cin, Cout) bf16 (BN scale folded in)
    # b_ref : (1, Cout) f32 ;  o_ref: (Mo, Cout)
    mo, cout = o_ref.shape
    phases = [ph_ref[p] for p in range(ph_ref.shape[0])]
    acc = jnp.zeros((mo, cout), jnp.float32)
    for t, (p, off) in enumerate(taps):
        a = phases[p][off:off + mo, :]                       # static row-offset slice
        acc = acc + jnp.dot(a, w_ref[t], preferred_element_type=jnp.float32)
    o_ref[...] = _mish_f32(acc + b_ref[...]).astype(o_ref.dtype)


# ----------------------------------------------------------------------------
# BasicConv wrappers (BN folded into weights; everything fused into one kernel)
# ----------------------------------------------------------------------------
def _fold_bn(p, eps=1e-5):
    scale = p['gamma'] / jnp.sqrt(p['var'] + eps)
    bias = (p['beta'] - p['mean'] * scale).reshape(1, -1).astype(jnp.float32)
    return scale, bias


def _w1x1(p, scale):
    return (p['w'][:, :, 0, 0] * scale[:, None]).T          # (Cin, Cout), f32


def basic_conv1x1(x_nhwc, p, out_dtype=jnp.bfloat16):
    n, h, w_, c = x_nhwc.shape
    cout = p['w'].shape[0]
    scale, bias = _fold_bn(p)
    wmat = _w1x1(p, scale).astype(jnp.bfloat16)
    y = fused_pointwise_conv([x_nhwc.reshape(n * h * w_, c)], [wmat], bias, out_dtype)
    return y.reshape(n, h, w_, cout)


def basic_conv1x1_sum(xa, xb, p, out_dtype=jnp.bfloat16):
    """BasicConv(1x1) applied to (xa + xb); the add is fused via (xa+xb)@W = xa@W + xb@W."""
    n, h, w_, c = xa.shape
    cout = p['w'].shape[0]
    scale, bias = _fold_bn(p)
    wmat = _w1x1(p, scale).astype(jnp.bfloat16)
    y = fused_pointwise_conv([xa.reshape(n * h * w_, c), xb.reshape(n * h * w_, c)],
                             [wmat, wmat], bias, out_dtype)
    return y.reshape(n, h, w_, cout)


def basic_conv1x1_concat(xa, xb, p, out_dtype=jnp.bfloat16):
    """BasicConv(1x1) on concat([xa, xb], channels); W split along K instead of
    materializing the concatenated activation in HBM."""
    n, h, w_, ca = xa.shape
    cb = xb.shape[-1]
    cout = p['w'].shape[0]
    scale, bias = _fold_bn(p)
    wfull = _w1x1(p, scale)                                  # (Ca+Cb, Cout)
    y = fused_pointwise_conv(
        [xa.reshape(n * h * w_, ca), xb.reshape(n * h * w_, cb)],
        [wfull[:ca].astype(jnp.bfloat16), wfull[ca:].astype(jnp.bfloat16)],
        bias, out_dtype)
    return y.reshape(n, h, w_, cout)


def basic_conv3x3(x_nhwc, p, stride=1, out_dtype=jnp.bfloat16):
    """BasicConv(3x3, pad=1, stride in {1,2}) without an HBM im2col matrix."""
    n, h, w_, cin = x_nhwc.shape
    cout = p['w'].shape[0]
    scale, bias = _fold_bn(p)
    # torch (Cout, Cin, 3, 3) * scale -> (3, 3, Cin, Cout) -> (9, Cin, Cout), bf16
    wt = jnp.transpose(p['w'] * scale[:, None, None, None], (2, 3, 1, 0))
    wt = wt.reshape(9, cin, cout).astype(jnp.bfloat16)

    if stride == 1:
        ho, wo = h, w_
        wq = w_ + 2                                   # flattened row length (2 junk cols)
        xp = jnp.pad(x_nhwc, ((0, 0), (1, 2), (1, 1), (0, 0)))
        phases = xp.reshape(n, 1, (h + 3) * wq, cin)
        taps = tuple((0, ky * wq + kx) for ky in range(3) for kx in range(3))
    elif stride == 2:
        ho = (h - 1) // 2 + 1
        wo = (w_ - 1) // 2 + 1
        wq = wo + 1                                   # phase row length (1 junk col)
        pb = 2 * ho + 4 - (h + 1)                     # both row-phases get ho + 2 rows
        pr = 2 * wq - (w_ + 1)                        # both col-phases get exactly wq cols
        xp = jnp.pad(x_nhwc, ((0, 0), (1, pb), (1, pr), (0, 0)))
        # space-to-depth into 4 stride-1 phases (same total bytes as the input,
        # versus a 9x im2col inflation)
        ph = [xp[:, a::2, b::2, :] for a in (0, 1) for b in (0, 1)]
        phases = jnp.stack(ph, axis=1)                # (N, 4, ho+2, wq, Cin)
        phases = phases.reshape(n, 4, phases.shape[2] * wq, cin)
        taps = tuple(((ky % 2) * 2 + (kx % 2), (ky // 2) * wq + (kx // 2))
                     for ky in range(3) for kx in range(3))
    else:
        raise ValueError("only stride 1 or 2 supported")

    nph, pf = phases.shape[1], phases.shape[2]
    mo = ho * wq
    block_bytes = (nph * pf * cin * 2 + 9 * cin * cout * 2 + cout * 4
                   + 2 * mo * cout * 4)
    out = pl.pallas_call(
        functools.partial(_conv3x3_bias_mish_kernel, taps=taps),
        out_shape=jax.ShapeDtypeStruct((n, mo, cout), out_dtype),
        grid=(n,),                                    # one image per (parallel) step
        in_specs=[
            pl.BlockSpec((None, nph, pf, cin), lambda i: (i, 0, 0, 0)),
            pl.BlockSpec((9, cin, cout), lambda i: (0, 0, 0)),
            pl.BlockSpec((1, cout), lambda i: (0, 0)),
        ],
        out_specs=pl.BlockSpec((None, mo, cout), lambda i: (i, 0, 0)),
        compiler_params=_mosaic_params(block_bytes),
    )(phases, wt, bias)
    # drop the junk columns produced by the flattened-row trick
    return out.reshape(n, ho, wq, cout)[:, :, :wo, :]


# ----------------------------------------------------------------------------
# Resblock_body(in_channels, out_channels, num_blocks=1, first=True).forward
# ----------------------------------------------------------------------------
def resblock_body_forward(x_nchw, params):
    x = jnp.transpose(x_nchw, (0, 2, 3, 1)).astype(jnp.bfloat16)   # NCHW -> NHWC, bf16
    x = basic_conv3x3(x, params['down'], stride=2)       # downsample_conv (3x3 /2)
    x0 = basic_conv1x1(x, params['split0'])              # split_conv0
    x1 = basic_conv1x1(x, params['split1'])              # split_conv1
    h = basic_conv1x1(x1, params['rb1'])                 # Resblock: 1x1 -> hidden
    r = basic_conv3x3(h, params['rb2'], stride=1)        # Resblock: 3x3
    # Resblock skip (x1 + r) feeds blocks_conv's final 1x1; fuse the add into it.
    x1 = basic_conv1x1_sum(x1, r, params['blocks_out'])
    # concat_conv over cat([x1, x0], C), fused by splitting its weight along K.
    out = basic_conv1x1_concat(x1, x0, params['concat'], out_dtype=jnp.float32)
    return jnp.transpose(out, (0, 3, 1, 2))              # NHWC -> NCHW (f32)


# ----------------------------------------------------------------------------
# Deterministic parameter construction
# ----------------------------------------------------------------------------
def make_bconv_params(key, cin, cout, k):
    k1, k2, k3, k4, k5 = jax.random.split(key, 5)
    return dict(
        w=0.1 * jax.random.normal(k1, (cout, cin, k, k), jnp.float32),
        gamma=1.0 + 0.1 * jax.random.normal(k2, (cout,), jnp.float32),
        beta=0.1 * jax.random.normal(k3, (cout,), jnp.float32),
        mean=0.1 * jax.random.normal(k4, (cout,), jnp.float32),
        var=0.5 + jnp.abs(jax.random.normal(k5, (cout,), jnp.float32)),
    )


if __name__ == "__main__":
    key = jax.random.PRNGKey(0)
    N, C_in, H, W = 2, 4, 16, 16
    C_out = 8                 # Resblock_body(in=4, out=8, num_blocks=1, first=True)

    keys = jax.random.split(key, 8)
    x = jax.random.normal(keys[0], (N, C_in, H, W), jnp.float32)

    params = {
        'down':       make_bconv_params(keys[1], C_in, C_out, 3),
        'split0':     make_bconv_params(keys[2], C_out, C_out, 1),
        'split1':     make_bconv_params(keys[3], C_out, C_out, 1),
        'rb1':        make_bconv_params(keys[4], C_out, C_out // 2, 1),
        'rb2':        make_bconv_params(keys[5], C_out // 2, C_out, 3),
        'blocks_out': make_bconv_params(keys[6], C_out, C_out, 1),
        'concat':     make_bconv_params(keys[7], 2 * C_out, C_out, 1),
    }

    fwd = jax.jit(functools.partial(resblock_body_forward, params=params))
    out = fwd(x)
    jax.block_until_ready(out)
    assert out.shape == (N, C_out, H // 2, W // 2), out.shape
    assert out.dtype == jnp.float32
    assert jnp.all(jnp.isfinite(out))
    print("KERNEL_OK")
</pallas_src>

<mosaic_0001>
module attributes {stable_mosaic.version = 11 : i64} {
  func.func @_conv3x3_bias_mish_kernel(%arg0: i32, %arg1: memref<1x4x90x4xbf16, #tpu.memory_space<vmem>>, %arg2: memref<9x4x8xbf16, #tpu.memory_space<vmem>>, %arg3: memref<1x8xf32, #tpu.memory_space<vmem>>, %arg4: memref<1x72x8xbf16, #tpu.memory_space<vmem>>) attributes {dimension_semantics = [#tpu.dimension_semantics<parallel>], iteration_bounds = array<i64: 2>, scalar_prefetch = 0 : i64, scratch_operands = 0 : i64, tpu.core_type = #tpu.core_type<tc>, window_params = [{transform_indices = @transform_0, window_bounds = array<i64: 1, 4, 90, 4>}, {pipeline_mode = #tpu.pipeline_mode<synchronous>, transform_indices = @transform_1, window_bounds = array<i64: 9, 4, 8>}, {pipeline_mode = #tpu.pipeline_mode<synchronous>, transform_indices = @transform_2, window_bounds = array<i64: 1, 8>}, {transform_indices = @transform_3, window_bounds = array<i64: 1, 72, 8>}]} {
    %c0 = arith.constant 0 : index
    %c0_0 = arith.constant 0 : index
    %c0_1 = arith.constant 0 : index
    %c0_2 = arith.constant 0 : index
    %0 = vector.load %arg1[%c0, %c0_0, %c0_1, %c0_2] : memref<1x4x90x4xbf16, #tpu.memory_space<vmem>>, vector<1x1x90x4xbf16>
    %1 = vector.shape_cast %0 : vector<1x1x90x4xbf16> to vector<90x4xbf16>
    %c0_3 = arith.constant 0 : index
    %c1 = arith.constant 1 : index
    %c0_4 = arith.constant 0 : index
    %c0_5 = arith.constant 0 : index
    %2 = vector.load %arg1[%c0_3, %c1, %c0_4, %c0_5] : memref<1x4x90x4xbf16, #tpu.memory_space<vmem>>, vector<1x1x90x4xbf16>
    %3 = vector.shape_cast %2 : vector<1x1x90x4xbf16> to vector<90x4xbf16>
    %c0_6 = arith.constant 0 : index
    %c2 = arith.constant 2 : index
    %c0_7 = arith.constant 0 : index
    %c0_8 = arith.constant 0 : index
    %4 = vector.load %arg1[%c0_6, %c2, %c0_7, %c0_8] : memref<1x4x90x4xbf16, #tpu.memory_space<vmem>>, vector<1x1x90x4xbf16>
    %5 = vector.shape_cast %4 : vector<1x1x90x4xbf16> to vector<90x4xbf16>
    %c0_9 = arith.constant 0 : index
    %c3 = arith.constant 3 : index
    %c0_10 = arith.constant 0 : index
    %c0_11 = arith.constant 0 : index
    %6 = vector.load %arg1[%c0_9, %c3, %c0_10, %c0_11] : memref<1x4x90x4xbf16, #tpu.memory_space<vmem>>, vector<1x1x90x4xbf16>
    %7 = vector.shape_cast %6 : vector<1x1x90x4xbf16> to vector<90x4xbf16>
    %cst = arith.constant 0.000000e+00 : f32
    %8 = vector.broadcast %cst : f32 to vector<72x8xf32>
    %9 = vector.extract_strided_slice %1 {offsets = [0, 0], sizes = [72, 4], strides = [1, 1]} : vector<90x4xbf16> to vector<72x4xbf16>
    %c0_12 = arith.constant 0 : index
    %c0_13 = arith.constant 0 : index
    %c0_14 = arith.constant 0 : index
    %10 = vector.load %arg2[%c0_12, %c0_13, %c0_14] : memref<9x4x8xbf16, #tpu.memory_space<vmem>>, vector<1x4x8xbf16>
    %11 = vector.shape_cast %10 : vector<1x4x8xbf16> to vector<4x8xbf16>
    %cst_15 = arith.constant dense<0.000000e+00> : vector<72x8xf32>
    %12 = tpu.matmul %9, %11, %cst_15 {dimension_numbers = #tpu.dot_dimension_numbers<[1], [0], [0], [1], [0, 0, 1, 1], [], []>} : vector<72x4xbf16>, vector<4x8xbf16>, vector<72x8xf32> -> vector<72x8xf32>
    %13 = arith.addf %8, %12 : vector<72x8xf32>
    %14 = vector.extract_strided_slice %3 {offsets = [0, 0], sizes = [72, 4], strides = [1, 1]} : vector<90x4xbf16> to vector<72x4xbf16>
    %c1_16 = arith.constant 1 : index
    %c0_17 = arith.constant 0 : index
    %c0_18 = arith.constant 0 : index
    %15 = vector.load %arg2[%c1_16, %c0_17, %c0_18] : memref<9x4x8xbf16, #tpu.memory_space<vmem>>, vector<1x4x8xbf16>
    %16 = vector.shape_cast %15 : vector<1x4x8xbf16> to vector<4x8xbf16>
    %cst_19 = arith.constant dense<0.000000e+00> : vector<72x8xf32>
    %17 = tpu.matmul %14, %16, %cst_19 {dimension_numbers = #tpu.dot_dimension_numbers<[1], [0], [0], [1], [0, 0, 1, 1], [], []>} : vector<72x4xbf16>, vector<4x8xbf16>, vector<72x8xf32> -> vector<72x8xf32>
    %18 = arith.addf %13, %17 : vector<72x8xf32>
    %19 = vector.extract_strided_slice %1 {offsets = [1, 0], sizes = [72, 4], strides = [1, 1]} : vector<90x4xbf16> to vector<72x4xbf16>
    %c2_20 = arith.constant 2 : index
    %c0_21 = arith.constant 0 : index
    %c0_22 = arith.constant 0 : index
    %20 = vector.load %arg2[%c2_20, %c0_21, %c0_22] : memref<9x4x8xbf16, #tpu.memory_space<vmem>>, vector<1x4x8xbf16>
    %21 = vector.shape_cast %20 : vector<1x4x8xbf16> to vector<4x8xbf16>
    %cst_23 = arith.constant dense<0.000000e+00> : vector<72x8xf32>
    %22 = tpu.matmul %19, %21, %cst_23 {dimension_numbers = #tpu.dot_dimension_numbers<[1], [0], [0], [1], [0, 0, 1, 1], [], []>} : vector<72x4xbf16>, vector<4x8xbf16>, vector<72x8xf32> -> vector<72x8xf32>
    %23 = arith.addf %18, %22 : vector<72x8xf32>
    %24 = vector.extract_strided_slice %5 {offsets = [0, 0], sizes = [72, 4], strides = [1, 1]} : vector<90x4xbf16> to vector<72x4xbf16>
    %c3_24 = arith.constant 3 : index
    %c0_25 = arith.constant 0 : index
    %c0_26 = arith.constant 0 : index
    %25 = vector.load %arg2[%c3_24, %c0_25, %c0_26] : memref<9x4x8xbf16, #tpu.memory_space<vmem>>, vector<1x4x8xbf16>
    %26 = vector.shape_cast %25 : vector<1x4x8xbf16> to vector<4x8xbf16>
    %cst_27 = arith.constant dense<0.000000e+00> : vector<72x8xf32>
    %27 = tpu.matmul %24, %26, %cst_27 {dimension_numbers = #tpu.dot_dimension_numbers<[1], [0], [0], [1], [0, 0, 1, 1], [], []>} : vector<72x4xbf16>, vector<4x8xbf16>, vector<72x8xf32> -> vector<72x8xf32>
    %28 = arith.addf %23, %27 : vector<72x8xf32>
    %29 = vector.extract_strided_slice %7 {offsets = [0, 0], sizes = [72, 4], strides = [1, 1]} : vector<90x4xbf16> to vector<72x4xbf16>
    %c4 = arith.constant 4 : index
    %c0_28 = arith.constant 0 : index
    %c0_29 = arith.constant 0 : index
    %30 = vector.load %arg2[%c4, %c0_28, %c0_29] : memref<9x4x8xbf16, #tpu.memory_space<vmem>>, vector<1x4x8xbf16>
    %31 = vector.shape_cast %30 : vector<1x4x8xbf16> to vector<4x8xbf16>
    %cst_30 = arith.constant dense<0.000000e+00> : vector<72x8xf32>
    %32 = tpu.matmul %29, %31, %cst_30 {dimension_numbers = #tpu.dot_dimension_numbers<[1], [0], [0], [1], [0, 0, 1, 1], [], []>} : vector<72x4xbf16>, vector<4x8xbf16>, vector<72x8xf32> -> vector<72x8xf32>
    %33 = arith.addf %28, %32 : vector<72x8xf32>
    %34 = vector.extract_strided_slice %5 {offsets = [1, 0], sizes = [72, 4], strides = [1, 1]} : vector<90x4xbf16> to vector<72x4xbf16>
    %c5 = arith.constant 5 : index
    %c0_31 = arith.constant 0 : index
    %c0_32 = arith.constant 0 : index
    %35 = vector.load %arg2[%c5, %c0_31, %c0_32] : memref<9x4x8xbf16, #tpu.memory_space<vmem>>, vector<1x4x8xbf16>
    %36 = vector.shape_cast %35 : vector<1x4x8xbf16> to vector<4x8xbf16>
    %cst_33 = arith.constant dense<0.000000e+00> : vector<72x8xf32>
    %37 = tpu.matmul %34, %36, %cst_33 {dimension_numbers = #tpu.dot_dimension_numbers<[1], [0], [0], [1], [0, 0, 1, 1], [], []>} : vector<72x4xbf16>, vector<4x8xbf16>, vector<72x8xf32> -> vector<72x8xf32>
    %38 = arith.addf %33, %37 : vector<72x8xf32>
    %39 = vector.extract_strided_slice %1 {offsets = [9, 0], sizes = [72, 4], strides = [1, 1]} : vector<90x4xbf16> to vector<72x4xbf16>
    %c6 = arith.constant 6 : index
    %c0_34 = arith.constant 0 : index
    %c0_35 = arith.constant 0 : index
    %40 = vector.load %arg2[%c6, %c0_34, %c0_35] : memref<9x4x8xbf16, #tpu.memory_space<vmem>>, vector<1x4x8xbf16>
    %41 = vector.shape_cast %40 : vector<1x4x8xbf16> to vector<4x8xbf16>
    %cst_36 = arith.constant dense<0.000000e+00> : vector<72x8xf32>
    %42 = tpu.matmul %39, %41, %cst_36 {dimension_numbers = #tpu.dot_dimension_numbers<[1], [0], [0], [1], [0, 0, 1, 1], [], []>} : vector<72x4xbf16>, vector<4x8xbf16>, vector<72x8xf32> -> vector<72x8xf32>
    %43 = arith.addf %38, %42 : vector<72x8xf32>
    %44 = vector.extract_strided_slice %3 {offsets = [9, 0], sizes = [72, 4], strides = [1, 1]} : vector<90x4xbf16> to vector<72x4xbf16>
    %c7 = arith.constant 7 : index
    %c0_37 = arith.constant 0 : index
    %c0_38 = arith.constant 0 : index
    %45 = vector.load %arg2[%c7, %c0_37, %c0_38] : memref<9x4x8xbf16, #tpu.memory_space<vmem>>, vector<1x4x8xbf16>
    %46 = vector.shape_cast %45 : vector<1x4x8xbf16> to vector<4x8xbf16>
    %cst_39 = arith.constant dense<0.000000e+00> : vector<72x8xf32>
    %47 = tpu.matmul %44, %46, %cst_39 {dimension_numbers = #tpu.dot_dimension_numbers<[1], [0], [0], [1], [0, 0, 1, 1], [], []>} : vector<72x4xbf16>, vector<4x8xbf16>, vector<72x8xf32> -> vector<72x8xf32>
    %48 = arith.addf %43, %47 : vector<72x8xf32>
    %49 = vector.extract_strided_slice %1 {offsets = [10, 0], sizes = [72, 4], strides = [1, 1]} : vector<90x4xbf16> to vector<72x4xbf16>
    %c8 = arith.constant 8 : index
    %c0_40 = arith.constant 0 : index
    %c0_41 = arith.constant 0 : index
    %50 = vector.load %arg2[%c8, %c0_40, %c0_41] : memref<9x4x8xbf16, #tpu.memory_space<vmem>>, vector<1x4x8xbf16>
    %51 = vector.shape_cast %50 : vector<1x4x8xbf16> to vector<4x8xbf16>
    %cst_42 = arith.constant dense<0.000000e+00> : vector<72x8xf32>
    %52 = tpu.matmul %49, %51, %cst_42 {dimension_numbers = #tpu.dot_dimension_numbers<[1], [0], [0], [1], [0, 0, 1, 1], [], []>} : vector<72x4xbf16>, vector<4x8xbf16>, vector<72x8xf32> -> vector<72x8xf32>
    %53 = arith.addf %48, %52 : vector<72x8xf32>
    %c0_43 = arith.constant 0 : index
    %c0_44 = arith.constant 0 : index
    %54 = vector.load %arg3[%c0_43, %c0_44] : memref<1x8xf32, #tpu.memory_space<vmem>>, vector<1x8xf32>
    %55 = vector.broadcast %54 : vector<1x8xf32> to vector<72x8xf32>
    %56 = arith.addf %53, %55 : vector<72x8xf32>
    %cst_45 = arith.constant 2.000000e+01 : f32
    %57 = vector.broadcast %cst_45 : f32 to vector<72x8xf32>
    %58 = arith.minimumf %56, %57 : vector<72x8xf32>
    %59 = math.exp %58 : vector<72x8xf32>
    %cst_46 = arith.constant 2.000000e+00 : f32
    %60 = vector.broadcast %cst_46 : f32 to vector<72x8xf32>
    %61 = arith.addf %59, %60 : vector<72x8xf32>
    %62 = arith.mulf %59, %61 : vector<72x8xf32>
    %cst_47 = arith.constant 2.000000e+00 : f32
    %63 = vector.broadcast %cst_47 : f32 to vector<72x8xf32>
    %64 = arith.addf %62, %63 : vector<72x8xf32>
    %65 = tpu.reciprocal %64 {approx = true} : vector<72x8xf32> -> vector<72x8xf32>
    %66 = arith.mulf %62, %65 : vector<72x8xf32>
    %67 = arith.mulf %56, %66 : vector<72x8xf32>
    %68 = arith.truncf %67 : vector<72x8xf32> to vector<72x8xbf16>
    %c0_48 = arith.constant 0 : index
    %c0_49 = arith.constant 0 : index
    %c0_50 = arith.constant 0 : index
    %69 = vector.load %arg4[%c0_48, %c0_49, %c0_50] : memref<1x72x8xbf16, #tpu.memory_space<vmem>>, vector<1x72x8xbf16>
    %70 = vector.shape_cast %69 : vector<1x72x8xbf16> to vector<72x8xbf16>
    %71 = vector.shape_cast %68 : vector<72x8xbf16> to vector<1x72x8xbf16>
    tpu.vector_store %arg4[%c0_48, %c0_49, %c0_50], %71 {strides = array<i32>} : memref<1x72x8xbf16, #tpu.memory_space<vmem>>, vector<1x72x8xbf16>,
    return
  }
  func.func @transform_0(%arg0: i32) -> (i32, i32, i32, i32) {
    %c0_i32 = arith.constant 0 : i32
    %c0_i32_0 = arith.constant 0 : i32
    %c0_i32_1 = arith.constant 0 : i32
    %c0_i32_2 = arith.constant 0 : i32
    return %arg0, %c0_i32, %c0_i32_0, %c0_i32_1 : i32, i32, i32, i32
  }
  func.func @transform_1(%arg0: i32) -> (i32, i32, i32) {
    %c0_i32 = arith.constant 0 : i32
    %c0_i32_0 = arith.constant 0 : i32
    %c0_i32_1 = arith.constant 0 : i32
    %c0_i32_2 = arith.constant 0 : i32
    return %c0_i32, %c0_i32_0, %c0_i32_1 : i32, i32, i32
  }
  func.func @transform_2(%arg0: i32) -> (i32, i32) {
    %c0_i32 = arith.constant 0 : i32
    %c0_i32_0 = arith.constant 0 : i32
    %c0_i32_1 = arith.constant 0 : i32
    return %c0_i32, %c0_i32_0 : i32, i32
  }
  func.func @transform_3(%arg0: i32) -> (i32, i32, i32) {
    %c0_i32 = arith.constant 0 : i32
    %c0_i32_0 = arith.constant 0 : i32
    %c0_i32_1 = arith.constant 0 : i32
    return %arg0, %c0_i32, %c0_i32_0 : i32, i32, i32
  }
}

module attributes {stable_mosaic.version = 11 : i64} {
  func.func @_gemm1_bias_mish_kernel(%arg0: i32, %arg1: memref<64x8xbf16, #tpu.memory_space<vmem>>, %arg2: memref<8x8xbf16, #tpu.memory_space<vmem>>, %arg3: memref<1x8xf32, #tpu.memory_space<vmem>>, %arg4: memref<64x8xbf16, #tpu.memory_space<vmem>>) attributes {dimension_semantics = [#tpu.dimension_semantics<parallel>], iteration_bounds = array<i64: 2>, scalar_prefetch = 0 : i64, scratch_operands = 0 : i64, tpu.core_type = #tpu.core_type<tc>, window_params = [{transform_indices = @transform_0, window_bounds = array<i64: 64, 8>}, {pipeline_mode = #tpu.pipeline_mode<synchronous>, transform_indices = @transform_1, window_bounds = array<i64: 8, 8>}, {pipeline_mode = #tpu.pipeline_mode<synchronous>, transform_indices = @transform_2, window_bounds = array<i64: 1, 8>}, {transform_indices = @transform_3, window_bounds = array<i64: 64, 8>}]} {
    %c0 = arith.constant 0 : index
    %c0_0 = arith.constant 0 : index
    %0 = vector.load %arg1[%c0, %c0_0] : memref<64x8xbf16, #tpu.memory_space<vmem>>, vector<64x8xbf16>
    %c0_1 = arith.constant 0 : index
    %c0_2 = arith.constant 0 : index
    %1 = vector.load %arg2[%c0_1, %c0_2] : memref<8x8xbf16, #tpu.memory_space<vmem>>, vector<8x8xbf16>
    %cst = arith.constant dense<0.000000e+00> : vector<64x8xf32>
    %2 = tpu.matmul %0, %1, %cst {dimension_numbers = #tpu.dot_dimension_numbers<[1], [0], [0], [1], [0, 0, 1, 1], [], []>} : vector<64x8xbf16>, vector<8x8xbf16>, vector<64x8xf32> -> vector<64x8xf32>
    %c0_3 = arith.constant 0 : index
    %c0_4 = arith.constant 0 : index
    %3 = vector.load %arg3[%c0_3, %c0_4] : memref<1x8xf32, #tpu.memory_space<vmem>>, vector<1x8xf32>
    %4 = vector.broadcast %3 : vector<1x8xf32> to vector<64x8xf32>
    %5 = arith.addf %2, %4 : vector<64x8xf32>
    %cst_5 = arith.constant 2.000000e+01 : f32
    %6 = vector.broadcast %cst_5 : f32 to vector<64x8xf32>
    %7 = arith.minimumf %5, %6 : vector<64x8xf32>
    %8 = math.exp %7 : vector<64x8xf32>
    %cst_6 = arith.constant 2.000000e+00 : f32
    %9 = vector.broadcast %cst_6 : f32 to vector<64x8xf32>
    %10 = arith.addf %8, %9 : vector<64x8xf32>
    %11 = arith.mulf %8, %10 : vector<64x8xf32>
    %cst_7 = arith.constant 2.000000e+00 : f32
    %12 = vector.broadcast %cst_7 : f32 to vector<64x8xf32>
    %13 = arith.addf %11, %12 : vector<64x8xf32>
    %14 = tpu.reciprocal %13 {approx = true} : vector<64x8xf32> -> vector<64x8xf32>
    %15 = arith.mulf %11, %14 : vector<64x8xf32>
    %16 = arith.mulf %5, %15 : vector<64x8xf32>
    %17 = arith.truncf %16 : vector<64x8xf32> to vector<64x8xbf16>
    %c0_8 = arith.constant 0 : index
    %c0_9 = arith.constant 0 : index
    %18 = vector.load %arg4[%c0_8, %c0_9] : memref<64x8xbf16, #tpu.memory_space<vmem>>, vector<64x8xbf16>
    tpu.vector_store %arg4[%c0_8, %c0_9], %17 {strides = array<i32>} : memref<64x8xbf16, #tpu.memory_space<vmem>>, vector<64x8xbf16>,
    return
  }
  func.func @transform_0(%arg0: i32) -> (i32, i32) {
    %c0_i32 = arith.constant 0 : i32
    %c0_i32_0 = arith.constant 0 : i32
    return %arg0, %c0_i32 : i32, i32
  }
  func.func @transform_1(%arg0: i32) -> (i32, i32) {
    %c0_i32 = arith.constant 0 : i32
    %c0_i32_0 = arith.constant 0 : i32
    %c0_i32_1 = arith.constant 0 : i32
    return %c0_i32, %c0_i32_0 : i32, i32
  }
  func.func @transform_2(%arg0: i32) -> (i32, i32) {
    %c0_i32 = arith.constant 0 : i32
    %c0_i32_0 = arith.constant 0 : i32
    %c0_i32_1 = arith.constant 0 : i32
    return %c0_i32, %c0_i32_0 : i32, i32
  }
  func.func @transform_3(%arg0: i32) -> (i32, i32) {
    %c0_i32 = arith.constant 0 : i32
    %c0_i32_0 = arith.constant 0 : i32
    return %arg0, %c0_i32 : i32, i32
  }
}

module attributes {stable_mosaic.version = 11 : i64} {
  func.func @_gemm1_bias_mish_kernel(%arg0: i32, %arg1: memref<64x8xbf16, #tpu.memory_space<vmem>>, %arg2: memref<8x4xbf16, #tpu.memory_space<vmem>>, %arg3: memref<1x4xf32, #tpu.memory_space<vmem>>, %arg4: memref<64x4xbf16, #tpu.memory_space<vmem>>) attributes {dimension_semantics = [#tpu.dimension_semantics<parallel>], iteration_bounds = array<i64: 2>, scalar_prefetch = 0 : i64, scratch_operands = 0 : i64, tpu.core_type = #tpu.core_type<tc>, window_params = [{transform_indices = @transform_0, window_bounds = array<i64: 64, 8>}, {pipeline_mode = #tpu.pipeline_mode<synchronous>, transform_indices = @transform_1, window_bounds = array<i64: 8, 4>}, {pipeline_mode = #tpu.pipeline_mode<synchronous>, transform_indices = @transform_2, window_bounds = array<i64: 1, 4>}, {transform_indices = @transform_3, window_bounds = array<i64: 64, 4>}]} {
    %c0 = arith.constant 0 : index
    %c0_0 = arith.constant 0 : index
    %0 = vector.load %arg1[%c0, %c0_0] : memref<64x8xbf16, #tpu.memory_space<vmem>>, vector<64x8xbf16>
    %c0_1 = arith.constant 0 : index
    %c0_2 = arith.constant 0 : index
    %1 = vector.load %arg2[%c0_1, %c0_2] : memref<8x4xbf16, #tpu.memory_space<vmem>>, vector<8x4xbf16>
    %cst = arith.constant dense<0.000000e+00> : vector<64x4xf32>
    %2 = tpu.matmul %0, %1, %cst {dimension_numbers = #tpu.dot_dimension_numbers<[1], [0], [0], [1], [0, 0, 1, 1], [], []>} : vector<64x8xbf16>, vector<8x4xbf16>, vector<64x4xf32> -> vector<64x4xf32>
    %c0_3 = arith.constant 0 : index
    %c0_4 = arith.constant 0 : index
    %3 = vector.load %arg3[%c0_3, %c0_4] : memref<1x4xf32, #tpu.memory_space<vmem>>, vector<1x4xf32>
    %4 = vector.broadcast %3 : vector<1x4xf32> to vector<64x4xf32>
    %5 = arith.addf %2, %4 : vector<64x4xf32>
    %cst_5 = arith.constant 2.000000e+01 : f32
    %6 = vector.broadcast %cst_5 : f32 to vector<64x4xf32>
    %7 = arith.minimumf %5, %6 : vector<64x4xf32>
    %8 = math.exp %7 : vector<64x4xf32>
    %cst_6 = arith.constant 2.000000e+00 : f32
    %9 = vector.broadcast %cst_6 : f32 to vector<64x4xf32>
    %10 = arith.addf %8, %9 : vector<64x4xf32>
    %11 = arith.mulf %8, %10 : vector<64x4xf32>
    %cst_7 = arith.constant 2.000000e+00 : f32
    %12 = vector.broadcast %cst_7 : f32 to vector<64x4xf32>
    %13 = arith.addf %11, %12 : vector<64x4xf32>
    %14 = tpu.reciprocal %13 {approx = true} : vector<64x4xf32> -> vector<64x4xf32>
    %15 = arith.mulf %11, %14 : vector<64x4xf32>
    %16 = arith.mulf %5, %15 : vector<64x4xf32>
    %17 = arith.truncf %16 : vector<64x4xf32> to vector<64x4xbf16>
    %c0_8 = arith.constant 0 : index
    %c0_9 = arith.constant 0 : index
    %18 = vector.load %arg4[%c0_8, %c0_9] : memref<64x4xbf16, #tpu.memory_space<vmem>>, vector<64x4xbf16>
    tpu.vector_store %arg4[%c0_8, %c0_9], %17 {strides = array<i32>} : memref<64x4xbf16, #tpu.memory_space<vmem>>, vector<64x4xbf16>,
    return
  }
  func.func @transform_0(%arg0: i32) -> (i32, i32) {
    %c0_i32 = arith.constant 0 : i32
    %c0_i32_0 = arith.constant 0 : i32
    return %arg0, %c0_i32 : i32, i32
  }
  func.func @transform_1(%arg0: i32) -> (i32, i32) {
    %c0_i32 = arith.constant 0 : i32
    %c0_i32_0 = arith.constant 0 : i32
    %c0_i32_1 = arith.constant 0 : i32
    return %c0_i32, %c0_i32_0 : i32, i32
  }
  func.func @transform_2(%arg0: i32) -> (i32, i32) {
    %c0_i32 = arith.constant 0 : i32
    %c0_i32_0 = arith.constant 0 : i32
    %c0_i32_1 = arith.constant 0 : i32
    return %c0_i32, %c0_i32_0 : i32, i32
  }
  func.func @transform_3(%arg0: i32) -> (i32, i32) {
    %c0_i32 = arith.constant 0 : i32
    %c0_i32_0 = arith.constant 0 : i32
    return %arg0, %c0_i32 : i32, i32
  }
}

module attributes {stable_mosaic.version = 11 : i64} {
  func.func @_conv3x3_bias_mish_kernel(%arg0: i32, %arg1: memref<1x1x110x4xbf16, #tpu.memory_space<vmem>>, %arg2: memref<9x4x8xbf16, #tpu.memory_space<vmem>>, %arg3: memref<1x8xf32, #tpu.memory_space<vmem>>, %arg4: memref<1x80x8xbf16, #tpu.memory_space<vmem>>) attributes {dimension_semantics = [#tpu.dimension_semantics<parallel>], iteration_bounds = array<i64: 2>, scalar_prefetch = 0 : i64, scratch_operands = 0 : i64, tpu.core_type = #tpu.core_type<tc>, window_params = [{transform_indices = @transform_0, window_bounds = array<i64: 1, 1, 110, 4>}, {pipeline_mode = #tpu.pipeline_mode<synchronous>, transform_indices = @transform_1, window_bounds = array<i64: 9, 4, 8>}, {pipeline_mode = #tpu.pipeline_mode<synchronous>, transform_indices = @transform_2, window_bounds = array<i64: 1, 8>}, {transform_indices = @transform_3, window_bounds = array<i64: 1, 80, 8>}]} {
    %c0 = arith.constant 0 : index
    %c0_0 = arith.constant 0 : index
    %c0_1 = arith.constant 0 : index
    %c0_2 = arith.constant 0 : index
    %0 = vector.load %arg1[%c0, %c0_0, %c0_1, %c0_2] : memref<1x1x110x4xbf16, #tpu.memory_space<vmem>>, vector<1x1x110x4xbf16>
    %1 = vector.shape_cast %0 : vector<1x1x110x4xbf16> to vector<110x4xbf16>
    %cst = arith.constant 0.000000e+00 : f32
    %2 = vector.broadcast %cst : f32 to vector<80x8xf32>
    %3 = vector.extract_strided_slice %1 {offsets = [0, 0], sizes = [80, 4], strides = [1, 1]} : vector<110x4xbf16> to vector<80x4xbf16>
    %c0_3 = arith.constant 0 : index
    %c0_4 = arith.constant 0 : index
    %c0_5 = arith.constant 0 : index
    %4 = vector.load %arg2[%c0_3, %c0_4, %c0_5] : memref<9x4x8xbf16, #tpu.memory_space<vmem>>, vector<1x4x8xbf16>
    %5 = vector.shape_cast %4 : vector<1x4x8xbf16> to vector<4x8xbf16>
    %cst_6 = arith.constant dense<0.000000e+00> : vector<80x8xf32>
    %6 = tpu.matmul %3, %5, %cst_6 {dimension_numbers = #tpu.dot_dimension_numbers<[1], [0], [0], [1], [0, 0, 1, 1], [], []>} : vector<80x4xbf16>, vector<4x8xbf16>, vector<80x8xf32> -> vector<80x8xf32>
    %7 = arith.addf %2, %6 : vector<80x8xf32>
    %8 = vector.extract_strided_slice %1 {offsets = [1, 0], sizes = [80, 4], strides = [1, 1]} : vector<110x4xbf16> to vector<80x4xbf16>
    %c1 = arith.constant 1 : index
    %c0_7 = arith.constant 0 : index
    %c0_8 = arith.constant 0 : index
    %9 = vector.load %arg2[%c1, %c0_7, %c0_8] : memref<9x4x8xbf16, #tpu.memory_space<vmem>>, vector<1x4x8xbf16>
    %10 = vector.shape_cast %9 : vector<1x4x8xbf16> to vector<4x8xbf16>
    %cst_9 = arith.constant dense<0.000000e+00> : vector<80x8xf32>
    %11 = tpu.matmul %8, %10, %cst_9 {dimension_numbers = #tpu.dot_dimension_numbers<[1], [0], [0], [1], [0, 0, 1, 1], [], []>} : vector<80x4xbf16>, vector<4x8xbf16>, vector<80x8xf32> -> vector<80x8xf32>
    %12 = arith.addf %7, %11 : vector<80x8xf32>
    %13 = vector.extract_strided_slice %1 {offsets = [2, 0], sizes = [80, 4], strides = [1, 1]} : vector<110x4xbf16> to vector<80x4xbf16>
    %c2 = arith.constant 2 : index
    %c0_10 = arith.constant 0 : index
    %c0_11 = arith.constant 0 : index
    %14 = vector.load %arg2[%c2, %c0_10, %c0_11] : memref<9x4x8xbf16, #tpu.memory_space<vmem>>, vector<1x4x8xbf16>
    %15 = vector.shape_cast %14 : vector<1x4x8xbf16> to vector<4x8xbf16>
    %cst_12 = arith.constant dense<0.000000e+00> : vector<80x8xf32>
    %16 = tpu.matmul %13, %15, %cst_12 {dimension_numbers = #tpu.dot_dimension_numbers<[1], [0], [0], [1], [0, 0, 1, 1], [], []>} : vector<80x4xbf16>, vector<4x8xbf16>, vector<80x8xf32> -> vector<80x8xf32>
    %17 = arith.addf %12, %16 : vector<80x8xf32>
    %18 = vector.extract_strided_slice %1 {offsets = [10, 0], sizes = [80, 4], strides = [1, 1]} : vector<110x4xbf16> to vector<80x4xbf16>
    %c3 = arith.constant 3 : index
    %c0_13 = arith.constant 0 : index
    %c0_14 = arith.constant 0 : index
    %19 = vector.load %arg2[%c3, %c0_13, %c0_14] : memref<9x4x8xbf16, #tpu.memory_space<vmem>>, vector<1x4x8xbf16>
    %20 = vector.shape_cast %19 : vector<1x4x8xbf16> to vector<4x8xbf16>
    %cst_15 = arith.constant dense<0.000000e+00> : vector<80x8xf32>
    %21 = tpu.matmul %18, %20, %cst_15 {dimension_numbers = #tpu.dot_dimension_numbers<[1], [0], [0], [1], [0, 0, 1, 1], [], []>} : vector<80x4xbf16>, vector<4x8xbf16>, vector<80x8xf32> -> vector<80x8xf32>
    %22 = arith.addf %17, %21 : vector<80x8xf32>
    %23 = vector.extract_strided_slice %1 {offsets = [11, 0], sizes = [80, 4], strides = [1, 1]} : vector<110x4xbf16> to vector<80x4xbf16>
    %c4 = arith.constant 4 : index
    %c0_16 = arith.constant 0 : index
    %c0_17 = arith.constant 0 : index
    %24 = vector.load %arg2[%c4, %c0_16, %c0_17] : memref<9x4x8xbf16, #tpu.memory_space<vmem>>, vector<1x4x8xbf16>
    %25 = vector.shape_cast %24 : vector<1x4x8xbf16> to vector<4x8xbf16>
    %cst_18 = arith.constant dense<0.000000e+00> : vector<80x8xf32>
    %26 = tpu.matmul %23, %25, %cst_18 {dimension_numbers = #tpu.dot_dimension_numbers<[1], [0], [0], [1], [0, 0, 1, 1], [], []>} : vector<80x4xbf16>, vector<4x8xbf16>, vector<80x8xf32> -> vector<80x8xf32>
    %27 = arith.addf %22, %26 : vector<80x8xf32>
    %28 = vector.extract_strided_slice %1 {offsets = [12, 0], sizes = [80, 4], strides = [1, 1]} : vector<110x4xbf16> to vector<80x4xbf16>
    %c5 = arith.constant 5 : index
    %c0_19 = arith.constant 0 : index
    %c0_20 = arith.constant 0 : index
    %29 = vector.load %arg2[%c5, %c0_19, %c0_20] : memref<9x4x8xbf16, #tpu.memory_space<vmem>>, vector<1x4x8xbf16>
    %30 = vector.shape_cast %29 : vector<1x4x8xbf16> to vector<4x8xbf16>
    %cst_21 = arith.constant dense<0.000000e+00> : vector<80x8xf32>
    %31 = tpu.matmul %28, %30, %cst_21 {dimension_numbers = #tpu.dot_dimension_numbers<[1], [0], [0], [1], [0, 0, 1, 1], [], []>} : vector<80x4xbf16>, vector<4x8xbf16>, vector<80x8xf32> -> vector<80x8xf32>
    %32 = arith.addf %27, %31 : vector<80x8xf32>
    %33 = vector.extract_strided_slice %1 {offsets = [20, 0], sizes = [80, 4], strides = [1, 1]} : vector<110x4xbf16> to vector<80x4xbf16>
    %c6 = arith.constant 6 : index
    %c0_22 = arith.constant 0 : index
    %c0_23 = arith.constant 0 : index
    %34 = vector.load %arg2[%c6, %c0_22, %c0_23] : memref<9x4x8xbf16, #tpu.memory_space<vmem>>, vector<1x4x8xbf16>
    %35 = vector.shape_cast %34 : vector<1x4x8xbf16> to vector<4x8xbf16>
    %cst_24 = arith.constant dense<0.000000e+00> : vector<80x8xf32>
    %36 = tpu.matmul %33, %35, %cst_24 {dimension_numbers = #tpu.dot_dimension_numbers<[1], [0], [0], [1], [0, 0, 1, 1], [], []>} : vector<80x4xbf16>, vector<4x8xbf16>, vector<80x8xf32> -> vector<80x8xf32>
    %37 = arith.addf %32, %36 : vector<80x8xf32>
    %38 = vector.extract_strided_slice %1 {offsets = [21, 0], sizes = [80, 4], strides = [1, 1]} : vector<110x4xbf16> to vector<80x4xbf16>
    %c7 = arith.constant 7 : index
    %c0_25 = arith.constant 0 : index
    %c0_26 = arith.constant 0 : index
    %39 = vector.load %arg2[%c7, %c0_25, %c0_26] : memref<9x4x8xbf16, #tpu.memory_space<vmem>>, vector<1x4x8xbf16>
    %40 = vector.shape_cast %39 : vector<1x4x8xbf16> to vector<4x8xbf16>
    %cst_27 = arith.constant dense<0.000000e+00> : vector<80x8xf32>
    %41 = tpu.matmul %38, %40, %cst_27 {dimension_numbers = #tpu.dot_dimension_numbers<[1], [0], [0], [1], [0, 0, 1, 1], [], []>} : vector<80x4xbf16>, vector<4x8xbf16>, vector<80x8xf32> -> vector<80x8xf32>
    %42 = arith.addf %37, %41 : vector<80x8xf32>
    %43 = vector.extract_strided_slice %1 {offsets = [22, 0], sizes = [80, 4], strides = [1, 1]} : vector<110x4xbf16> to vector<80x4xbf16>
    %c8 = arith.constant 8 : index
    %c0_28 = arith.constant 0 : index
    %c0_29 = arith.constant 0 : index
    %44 = vector.load %arg2[%c8, %c0_28, %c0_29] : memref<9x4x8xbf16, #tpu.memory_space<vmem>>, vector<1x4x8xbf16>
    %45 = vector.shape_cast %44 : vector<1x4x8xbf16> to vector<4x8xbf16>
    %cst_30 = arith.constant dense<0.000000e+00> : vector<80x8xf32>
    %46 = tpu.matmul %43, %45, %cst_30 {dimension_numbers = #tpu.dot_dimension_numbers<[1], [0], [0], [1], [0, 0, 1, 1], [], []>} : vector<80x4xbf16>, vector<4x8xbf16>, vector<80x8xf32> -> vector<80x8xf32>
    %47 = arith.addf %42, %46 : vector<80x8xf32>
    %c0_31 = arith.constant 0 : index
    %c0_32 = arith.constant 0 : index
    %48 = vector.load %arg3[%c0_31, %c0_32] : memref<1x8xf32, #tpu.memory_space<vmem>>, vector<1x8xf32>
    %49 = vector.broadcast %48 : vector<1x8xf32> to vector<80x8xf32>
    %50 = arith.addf %47, %49 : vector<80x8xf32>
    %cst_33 = arith.constant 2.000000e+01 : f32
    %51 = vector.broadcast %cst_33 : f32 to vector<80x8xf32>
    %52 = arith.minimumf %50, %51 : vector<80x8xf32>
    %53 = math.exp %52 : vector<80x8xf32>
    %cst_34 = arith.constant 2.000000e+00 : f32
    %54 = vector.broadcast %cst_34 : f32 to vector<80x8xf32>
    %55 = arith.addf %53, %54 : vector<80x8xf32>
    %56 = arith.mulf %53, %55 : vector<80x8xf32>
    %cst_35 = arith.constant 2.000000e+00 : f32
    %57 = vector.broadcast %cst_35 : f32 to vector<80x8xf32>
    %58 = arith.addf %56, %57 : vector<80x8xf32>
    %59 = tpu.reciprocal %58 {approx = true} : vector<80x8xf32> -> vector<80x8xf32>
    %60 = arith.mulf %56, %59 : vector<80x8xf32>
    %61 = arith.mulf %50, %60 : vector<80x8xf32>
    %62 = arith.truncf %61 : vector<80x8xf32> to vector<80x8xbf16>
    %c0_36 = arith.constant 0 : index
    %c0_37 = arith.constant 0 : index
    %c0_38 = arith.constant 0 : index
    %63 = vector.load %arg4[%c0_36, %c0_37, %c0_38] : memref<1x80x8xbf16, #tpu.memory_space<vmem>>, vector<1x80x8xbf16>
    %64 = vector.shape_cast %63 : vector<1x80x8xbf16> to vector<80x8xbf16>
    %65 = vector.shape_cast %62 : vector<80x8xbf16> to vector<1x80x8xbf16>
    tpu.vector_store %arg4[%c0_36, %c0_37, %c0_38], %65 {strides = array<i32>} : memref<1x80x8xbf16, #tpu.memory_space<vmem>>, vector<1x80x8xbf16>,
    return
  }
  func.func @transform_0(%arg0: i32) -> (i32, i32, i32, i32) {
    %c0_i32 = arith.constant 0 : i32
    %c0_i32_0 = arith.constant 0 : i32
    %c0_i32_1 = arith.constant 0 : i32
    %c0_i32_2 = arith.constant 0 : i32
    return %arg0, %c0_i32, %c0_i32_0, %c0_i32_1 : i32, i32, i32, i32
  }
  func.func @transform_1(%arg0: i32) -> (i32, i32, i32) {
    %c0_i32 = arith.constant 0 : i32
    %c0_i32_0 = arith.constant 0 : i32
    %c0_i32_1 = arith.constant 0 : i32
    %c0_i32_2 = arith.constant 0 : i32
    return %c0_i32, %c0_i32_0, %c0_i32_1 : i32, i32, i32
  }
  func.func @transform_2(%arg0: i32) -> (i32, i32) {
    %c0_i32 = arith.constant 0 : i32
    %c0_i32_0 = arith.constant 0 : i32
    %c0_i32_1 = arith.constant 0 : i32
    return %c0_i32, %c0_i32_0 : i32, i32
  }
  func.func @transform_3(%arg0: i32) -> (i32, i32, i32) {
    %c0_i32 = arith.constant 0 : i32
    %c0_i32_0 = arith.constant 0 : i32
    %c0_i32_1 = arith.constant 0 : i32
    return %arg0, %c0_i32, %c0_i32_0 : i32, i32, i32
  }
}

module attributes {stable_mosaic.version = 11 : i64} {
  func.func @_gemm2_bias_mish_kernel(%arg0: i32, %arg1: memref<64x8xbf16, #tpu.memory_space<vmem>>, %arg2: memref<8x8xbf16, #tpu.memory_space<vmem>>, %arg3: memref<64x8xbf16, #tpu.memory_space<vmem>>, %arg4: memref<8x8xbf16, #tpu.memory_space<vmem>>, %arg5: memref<1x8xf32, #tpu.memory_space<vmem>>, %arg6: memref<64x8xf32, #tpu.memory_space<vmem>>) attributes {dimension_semantics = [#tpu.dimension_semantics<parallel>], iteration_bounds = array<i64: 2>, scalar_prefetch = 0 : i64, scratch_operands = 0 : i64, tpu.core_type = #tpu.core_type<tc>, window_params = [{transform_indices = @transform_0, window_bounds = array<i64: 64, 8>}, {pipeline_mode = #tpu.pipeline_mode<synchronous>, transform_indices = @transform_1, window_bounds = array<i64: 8, 8>}, {transform_indices = @transform_2, window_bounds = array<i64: 64, 8>}, {pipeline_mode = #tpu.pipeline_mode<synchronous>, transform_indices = @transform_3, window_bounds = array<i64: 8, 8>}, {pipeline_mode = #tpu.pipeline_mode<synchronous>, transform_indices = @transform_4, window_bounds = array<i64: 1, 8>}, {transform_indices = @transform_5, window_bounds = array<i64: 64, 8>}]} {
    %c0 = arith.constant 0 : index
    %c0_0 = arith.constant 0 : index
    %0 = vector.load %arg1[%c0, %c0_0] : memref<64x8xbf16, #tpu.memory_space<vmem>>, vector<64x8xbf16>
    %c0_1 = arith.constant 0 : index
    %c0_2 = arith.constant 0 : index
    %1 = vector.load %arg2[%c0_1, %c0_2] : memref<8x8xbf16, #tpu.memory_space<vmem>>, vector<8x8xbf16>
    %cst = arith.constant dense<0.000000e+00> : vector<64x8xf32>
    %2 = tpu.matmul %0, %1, %cst {dimension_numbers = #tpu.dot_dimension_numbers<[1], [0], [0], [1], [0, 0, 1, 1], [], []>} : vector<64x8xbf16>, vector<8x8xbf16>, vector<64x8xf32> -> vector<64x8xf32>
    %c0_3 = arith.constant 0 : index
    %c0_4 = arith.constant 0 : index
    %3 = vector.load %arg3[%c0_3, %c0_4] : memref<64x8xbf16, #tpu.memory_space<vmem>>, vector<64x8xbf16>
    %c0_5 = arith.constant 0 : index
    %c0_6 = arith.constant 0 : index
    %4 = vector.load %arg4[%c0_5, %c0_6] : memref<8x8xbf16, #tpu.memory_space<vmem>>, vector<8x8xbf16>
    %cst_7 = arith.constant dense<0.000000e+00> : vector<64x8xf32>
    %5 = tpu.matmul %3, %4, %cst_7 {dimension_numbers = #tpu.dot_dimension_numbers<[1], [0], [0], [1], [0, 0, 1, 1], [], []>} : vector<64x8xbf16>, vector<8x8xbf16>, vector<64x8xf32> -> vector<64x8xf32>
    %6 = arith.addf %2, %5 : vector<64x8xf32>
    %c0_8 = arith.constant 0 : index
    %c0_9 = arith.constant 0 : index
    %7 = vector.load %arg5[%c0_8, %c0_9] : memref<1x8xf32, #tpu.memory_space<vmem>>, vector<1x8xf32>
    %8 = vector.broadcast %7 : vector<1x8xf32> to vector<64x8xf32>
    %9 = arith.addf %6, %8 : vector<64x8xf32>
    %cst_10 = arith.constant 2.000000e+01 : f32
    %10 = vector.broadcast %cst_10 : f32 to vector<64x8xf32>
    %11 = arith.minimumf %9, %10 : vector<64x8xf32>
    %12 = math.exp %11 : vector<64x8xf32>
    %cst_11 = arith.constant 2.000000e+00 : f32
    %13 = vector.broadcast %cst_11 : f32 to vector<64x8xf32>
    %14 = arith.addf %12, %13 : vector<64x8xf32>
    %15 = arith.mulf %12, %14 : vector<64x8xf32>
    %cst_12 = arith.constant 2.000000e+00 : f32
    %16 = vector.broadcast %cst_12 : f32 to vector<64x8xf32>
    %17 = arith.addf %15, %16 : vector<64x8xf32>
    %18 = tpu.reciprocal %17 {approx = true} : vector<64x8xf32> -> vector<64x8xf32>
    %19 = arith.mulf %15, %18 : vector<64x8xf32>
    %20 = arith.mulf %9, %19 : vector<64x8xf32>
    %c0_13 = arith.constant 0 : index
    %c0_14 = arith.constant 0 : index
    %21 = vector.load %arg6[%c0_13, %c0_14] : memref<64x8xf32, #tpu.memory_space<vmem>>, vector<64x8xf32>
    tpu.vector_store %arg6[%c0_13, %c0_14], %20 {strides = array<i32>} : memref<64x8xf32, #tpu.memory_space<vmem>>, vector<64x8xf32>,
    return
  }
  func.func @transform_0(%arg0: i32) -> (i32, i32) {
    %c0_i32 = arith.constant 0 : i32
    %c0_i32_0 = arith.constant 0 : i32
    return %arg0, %c0_i32 : i32, i32
  }
  func.func @transform_1(%arg0: i32) -> (i32, i32) {
    %c0_i32 = arith.constant 0 : i32
    %c0_i32_0 = arith.constant 0 : i32
    %c0_i32_1 = arith.constant 0 : i32
    return %c0_i32, %c0_i32_0 : i32, i32
  }
  func.func @transform_2(%arg0: i32) -> (i32, i32) {
    %c0_i32 = arith.constant 0 : i32
    %c0_i32_0 = arith.constant 0 : i32
    return %arg0, %c0_i32 : i32, i32
  }
  func.func @transform_3(%arg0: i32) -> (i32, i32) {
    %c0_i32 = arith.constant 0 : i32
    %c0_i32_0 = arith.constant 0 : i32
    %c0_i32_1 = arith.constant 0 : i32
    return %c0_i32, %c0_i32_0 : i32, i32
  }
  func.func @transform_4(%arg0: i32) -> (i32, i32) {
    %c0_i32 = arith.constant 0 : i32
    %c0_i32_0 = arith.constant 0 : i32
    %c0_i32_1 = arith.constant 0 : i32
    return %c0_i32, %c0_i32_0 : i32, i32
  }
  func.func @transform_5(%arg0: i32) -> (i32, i32) {
    %c0_i32 = arith.constant 0 : i32
    %c0_i32_0 = arith.constant 0 : i32
    return %arg0, %c0_i32 : i32, i32
  }
}

module attributes {stable_mosaic.version = 11 : i64} {
  func.func @_gemm2_bias_mish_kernel(%arg0: i32, %arg1: memref<64x8xbf16, #tpu.memory_space<vmem>>, %arg2: memref<8x8xbf16, #tpu.memory_space<vmem>>, %arg3: memref<64x8xbf16, #tpu.memory_space<vmem>>, %arg4: memref<8x8xbf16, #tpu.memory_space<vmem>>, %arg5: memref<1x8xf32, #tpu.memory_space<vmem>>, %arg6: memref<64x8xbf16, #tpu.memory_space<vmem>>) attributes {dimension_semantics = [#tpu.dimension_semantics<parallel>], iteration_bounds = array<i64: 2>, scalar_prefetch = 0 : i64, scratch_operands = 0 : i64, tpu.core_type = #tpu.core_type<tc>, window_params = [{transform_indices = @transform_0, window_bounds = array<i64: 64, 8>}, {pipeline_mode = #tpu.pipeline_mode<synchronous>, transform_indices = @transform_1, window_bounds = array<i64: 8, 8>}, {transform_indices = @transform_2, window_bounds = array<i64: 64, 8>}, {pipeline_mode = #tpu.pipeline_mode<synchronous>, transform_indices = @transform_3, window_bounds = array<i64: 8, 8>}, {pipeline_mode = #tpu.pipeline_mode<synchronous>, transform_indices = @transform_4, window_bounds = array<i64: 1, 8>}, {transform_indices = @transform_5, window_bounds = array<i64: 64, 8>}]} {
    %c0 = arith.constant 0 : index
    %c0_0 = arith.constant 0 : index
    %0 = vector.load %arg1[%c0, %c0_0] : memref<64x8xbf16, #tpu.memory_space<vmem>>, vector<64x8xbf16>
    %c0_1 = arith.constant 0 : index
    %c0_2 = arith.constant 0 : index
    %1 = vector.load %arg2[%c0_1, %c0_2] : memref<8x8xbf16, #tpu.memory_space<vmem>>, vector<8x8xbf16>
    %cst = arith.constant dense<0.000000e+00> : vector<64x8xf32>
    %2 = tpu.matmul %0, %1, %cst {dimension_numbers = #tpu.dot_dimension_numbers<[1], [0], [0], [1], [0, 0, 1, 1], [], []>} : vector<64x8xbf16>, vector<8x8xbf16>, vector<64x8xf32> -> vector<64x8xf32>
    %c0_3 = arith.constant 0 : index
    %c0_4 = arith.constant 0 : index
    %3 = vector.load %arg3[%c0_3, %c0_4] : memref<64x8xbf16, #tpu.memory_space<vmem>>, vector<64x8xbf16>
    %c0_5 = arith.constant 0 : index
    %c0_6 = arith.constant 0 : index
    %4 = vector.load %arg4[%c0_5, %c0_6] : memref<8x8xbf16, #tpu.memory_space<vmem>>, vector<8x8xbf16>
    %cst_7 = arith.constant dense<0.000000e+00> : vector<64x8xf32>
    %5 = tpu.matmul %3, %4, %cst_7 {dimension_numbers = #tpu.dot_dimension_numbers<[1], [0], [0], [1], [0, 0, 1, 1], [], []>} : vector<64x8xbf16>, vector<8x8xbf16>, vector<64x8xf32> -> vector<64x8xf32>
    %6 = arith.addf %2, %5 : vector<64x8xf32>
    %c0_8 = arith.constant 0 : index
    %c0_9 = arith.constant 0 : index
    %7 = vector.load %arg5[%c0_8, %c0_9] : memref<1x8xf32, #tpu.memory_space<vmem>>, vector<1x8xf32>
    %8 = vector.broadcast %7 : vector<1x8xf32> to vector<64x8xf32>
    %9 = arith.addf %6, %8 : vector<64x8xf32>
    %cst_10 = arith.constant 2.000000e+01 : f32
    %10 = vector.broadcast %cst_10 : f32 to vector<64x8xf32>
    %11 = arith.minimumf %9, %10 : vector<64x8xf32>
    %12 = math.exp %11 : vector<64x8xf32>
    %cst_11 = arith.constant 2.000000e+00 : f32
    %13 = vector.broadcast %cst_11 : f32 to vector<64x8xf32>
    %14 = arith.addf %12, %13 : vector<64x8xf32>
    %15 = arith.mulf %12, %14 : vector<64x8xf32>
    %cst_12 = arith.constant 2.000000e+00 : f32
    %16 = vector.broadcast %cst_12 : f32 to vector<64x8xf32>
    %17 = arith.addf %15, %16 : vector<64x8xf32>
    %18 = tpu.reciprocal %17 {approx = true} : vector<64x8xf32> -> vector<64x8xf32>
    %19 = arith.mulf %15, %18 : vector<64x8xf32>
    %20 = arith.mulf %9, %19 : vector<64x8xf32>
    %21 = arith.truncf %20 : vector<64x8xf32> to vector<64x8xbf16>
    %c0_13 = arith.constant 0 : index
    %c0_14 = arith.constant 0 : index
    %22 = vector.load %arg6[%c0_13, %c0_14] : memref<64x8xbf16, #tpu.memory_space<vmem>>, vector<64x8xbf16>
    tpu.vector_store %arg6[%c0_13, %c0_14], %21 {strides = array<i32>} : memref<64x8xbf16, #tpu.memory_space<vmem>>, vector<64x8xbf16>,
    return
  }
  func.func @transform_0(%arg0: i32) -> (i32, i32) {
    %c0_i32 = arith.constant 0 : i32
    %c0_i32_0 = arith.constant 0 : i32
    return %arg0, %c0_i32 : i32, i32
  }
  func.func @transform_1(%arg0: i32) -> (i32, i32) {
    %c0_i32 = arith.constant 0 : i32
    %c0_i32_0 = arith.constant 0 : i32
    %c0_i32_1 = arith.constant 0 : i32
    return %c0_i32, %c0_i32_0 : i32, i32
  }
  func.func @transform_2(%arg0: i32) -> (i32, i32) {
    %c0_i32 = arith.constant 0 : i32
    %c0_i32_0 = arith.constant 0 : i32
    return %arg0, %c0_i32 : i32, i32
  }
  func.func @transform_3(%arg0: i32) -> (i32, i32) {
    %c0_i32 = arith.constant 0 : i32
    %c0_i32_0 = arith.constant 0 : i32
    %c0_i32_1 = arith.constant 0 : i32
    return %c0_i32, %c0_i32_0 : i32, i32
  }
  func.func @transform_4(%arg0: i32) -> (i32, i32) {
    %c0_i32 = arith.constant 0 : i32
    %c0_i32_0 = arith.constant 0 : i32
    %c0_i32_1 = arith.constant 0 : i32
    return %c0_i32, %c0_i32_0 : i32, i32
  }
  func.func @transform_5(%arg0: i32) -> (i32, i32) {
    %c0_i32 = arith.constant 0 : i32
    %c0_i32_0 = arith.constant 0 : i32
    return %arg0, %c0_i32 : i32, i32
  }
}

</mosaic_0001>

<llo_original>
// kernel: resblock_body_forward.10
$region0: #{resblock_body_forward.10}
  #allocation0 [shape = 'u32[]', space=smem, size = 0x4, offset = 0x4, fixed_abs, tag = 'smem constant byte address 0x4 - core index']
  #allocation1 [shape = 'u32[72,128]{1,0:T(1,128)}', space=vmem, size = 0x9000, scoped, tag = 'internal scratch']
  %s0 = inlined_call_operand.vmem [shape: bf16[128,8], index: 0, kind: input, shape index: {}]
  %s1 = inlined_call_operand.vmem [shape: bf16[8,4], index: 1, kind: input, shape index: {}]
  %s2 = inlined_call_operand.vmem [shape: f32[1,4], index: 2, kind: input, shape index: {}]
  %s3 = inlined_call_operand.vmem [shape: bf16[128,4], index: 3, kind: output, shape index: {}]
  %s4 = sld [smem:[#allocation0]]
  $region45: #{resblock_body_forward.10} parent=0
    _
  %s6 = ssub.s32 1, %s4
  %s7 = scalar_select 0, %s6, %s4
  loop: start=0, step=1, limit=4
  $region2: #{resblock_body_forward.10} parent=0 // loop_pre_header
    _
  $region3: #{resblock_body_forward.10} parent=0 // loop_header
    %s9 = sphi 0, %s13
    %p10 = scmp.ge.s32.totalorder %s9, 4
    %s19 = sphi 0, %s21
    %s22 = sphi 0, %s19
    %s23 = sphi 0, %s22
    %s39 = sphi 0, %s23
    %s43 = sphi 0, %s43
    %s45 = sphi 0, %s43
    %s46 = sphi 0, %s45
    %s60 = sphi 0, %s46
    %s64 = sphi 0, %s64
    %s66 = sphi 0, %s64
    %s67 = sphi 0, %s66
    %s81 = sphi 0, %s67
    %s87 = sphi 0, %s89
    %s90 = sphi 0, %s87
    %s91 = sphi 0, %s90
    %s107 = sphi 0, %s91
  $region4: #{resblock_body_forward.10} parent=0 // loop_header_branch
    %12 = sbr.rel (%p10) target = $region8
  $region5: #{resblock_body_forward.10} parent=0 // loop_body
    %s14 = ssub.s32 %s9, 1
    %s15 = ssub.s32 %s9, 2
    %s16 = sadd.s32 %s9, 1
    %s17 = ssub.s32 %s9, %s16
    %p18 = scmp.eq.s32.totalorder %s17, 0
    %s20 = sadd.s32 %s19, 1
    %s21 = scalar_select %p18, %s19, %s20
    %p24 = pneg %p18
    %p25 = scmp.eq.s32.totalorder %s9, 1
    %p26 = por %p24, %p25
    %p27 = scmp.ne.s32.totalorder %s19, %s22
    %p28 = scmp.eq.s32.totalorder %s9, 0
    %p29 = por %p27, %p28
    %p30 = scmp.ne.s32.totalorder %s19, %s22
    %p31 = scmp.eq.s32.totalorder %s14, 1
    %p32 = por %p30, %p31
    %p33 = scmp.ne.s32.totalorder %s22, %s23
    %p34 = scmp.eq.s32.totalorder %s14, 0
    %p35 = por %p33, %p34
    %p36 = scmp.ne.s32.totalorder %s22, %s23
    %p37 = scmp.eq.s32.totalorder %s15, 1
    %p38 = por %p36, %p37
    %p40 = scmp.ne.s32.totalorder %s23, %s39
    %p41 = scmp.eq.s32.totalorder %s15, 0
    %p42 = por %p40, %p41
    %s44 = sadd.s32 %s43, 1
    %p47 = scmp.eq.s32.totalorder %s9, 1
    %p48 = scmp.ne.s32.totalorder %s43, %s45
    %p49 = scmp.eq.s32.totalorder %s9, 0
    %p50 = por %p48, %p49
    %p51 = scmp.ne.s32.totalorder %s43, %s45
    %p52 = scmp.eq.s32.totalorder %s14, 1
    %p53 = por %p51, %p52
    %p54 = scmp.ne.s32.totalorder %s45, %s46
    %p55 = scmp.eq.s32.totalorder %s14, 0
    %p56 = por %p54, %p55
    %p57 = scmp.ne.s32.totalorder %s45, %s46
    %p58 = scmp.eq.s32.totalorder %s15, 1
    %p59 = por %p57, %p58
    %p61 = scmp.ne.s32.totalorder %s46, %s60
    %p62 = scmp.eq.s32.totalorder %s15, 0
    %p63 = por %p61, %p62
    %s65 = sadd.s32 %s64, 1
    %p68 = scmp.eq.s32.totalorder %s9, 1
    %p69 = scmp.ne.s32.totalorder %s64, %s66
    %p70 = scmp.eq.s32.totalorder %s9, 0
    %p71 = por %p69, %p70
    %p72 = scmp.ne.s32.totalorder %s64, %s66
    %p73 = scmp.eq.s32.totalorder %s14, 1
    %p74 = por %p72, %p73
    %p75 = scmp.ne.s32.totalorder %s66, %s67
    %p76 = scmp.eq.s32.totalorder %s14, 0
    %p77 = por %p75, %p76
    %p78 = scmp.ne.s32.totalorder %s66, %s67
    %p79 = scmp.eq.s32.totalorder %s15, 1
    %p80 = por %p78, %p79
    %p82 = scmp.ne.s32.totalorder %s67, %s81
    %p83 = scmp.eq.s32.totalorder %s15, 0
    %p84 = por %p82, %p83
    %s85 = ssub.s32 %s9, %s16
    %p86 = scmp.eq.s32.totalorder %s85, 0
    %s88 = sadd.s32 %s87, 1
    %s89 = scalar_select %p86, %s87, %s88
    %p92 = pneg %p86
    %p93 = scmp.eq.s32.totalorder %s9, 1
    %p94 = por %p92, %p93
    %p95 = scmp.ne.s32.totalorder %s87, %s90
    %p96 = scmp.eq.s32.totalorder %s9, 0
    %p97 = por %p95, %p96
    %p98 = scmp.ne.s32.totalorder %s87, %s90
    %p99 = scmp.eq.s32.totalorder %s14, 1
    %p100 = por %p98, %p99
    %p101 = scmp.ne.s32.totalorder %s90, %s91
    %p102 = scmp.eq.s32.totalorder %s14, 0
    %p103 = por %p101, %p102
    %p104 = scmp.ne.s32.totalorder %s90, %s91
    %p105 = scmp.eq.s32.totalorder %s15, 1
    %p106 = por %p104, %p105
    %p108 = scmp.ne.s32.totalorder %s91, %s107
    %p109 = scmp.eq.s32.totalorder %s15, 0
    %p110 = por %p108, %p109
    %p111 = scmp.le.s32.totalorder 1, %s9
    %p112 = scmp.lt.s32.totalorder %s9, 3
    %p113 = pnand %p111, %p112
    %p114 = pneg %p113
    // Predicated region
    $region9: #{resblock_body_forward.10} parent=5 // pred_check
      _
    $region10: #{resblock_body_forward.10} parent=5 // pred_check_branch
      %116 = sbr.rel (%p113) target = $region12
    $region11: #{resblock_body_forward.10} parent=5 // pred_region
      %s117 = ssub.s32 %s9, 1
      // Predicated region
      $region13: #{resblock_body_forward.10} parent=11 // pred_check
        %p118 = pneg %p56
      $region14: #{resblock_body_forward.10} parent=11 // pred_check_branch
        %120 = sbr.rel (%p118) target = $region16
      $region15: #{resblock_body_forward.10} parent=11 // pred_region
        _
      $region16: #{resblock_body_forward.10} parent=11 // pred_fallthru
        _
      // Predicated region
      $region17: #{resblock_body_forward.10} parent=11 // pred_check
        %p121 = pneg %p77
      $region18: #{resblock_body_forward.10} parent=11 // pred_check_branch
        %123 = sbr.rel (%p121) target = $region20
      $region19: #{resblock_body_forward.10} parent=11 // pred_region
        _
      $region20: #{resblock_body_forward.10} parent=11 // pred_fallthru
        _
    $region12: #{resblock_body_forward.10} parent=5 // pred_fallthru
      _
    %p124 = scmp.lt.s32.totalorder %s9, 2
    // Predicated region
    $region21: #{resblock_body_forward.10} parent=5 // pred_check
      %p125 = pneg %p124
    $region22: #{resblock_body_forward.10} parent=5 // pred_check_branch
      %127 = sbr.rel (%p125) target = $region24
    $region23: #{resblock_body_forward.10} parent=5 // pred_region
      // Predicated region
      $region25: #{resblock_body_forward.10} parent=23 // pred_check
        %p128 = pneg %p29
      $region26: #{resblock_body_forward.10} parent=23 // pred_check_branch
        %130 = sbr.rel (%p128) target = $region28
      $region27: #{resblock_body_forward.10} parent=23 // pred_region
        %s131 = smul.u32 8, %s9
        %p132 = scmp.lt.s32.totalorder %s131, 15
        %s133 = scalar_select %p132, %s131, 15
        %s134 = smul.addr %s133, 4
        %s135 = scalar_lea.vmem %s0, %s134
        %s136 = smul.u32 8, %s9
      $region28: #{resblock_body_forward.10} parent=23 // pred_fallthru
        _
    $region24: #{resblock_body_forward.10} parent=5 // pred_fallthru
      _
    %p137 = scmp.le.s32.totalorder 1, %s9
    %p138 = scmp.lt.s32.totalorder %s9, 3
    %p139 = pnand %p137, %p138
    %p140 = pneg %p139
    // Predicated region
    $region29: #{resblock_body_forward.10} parent=5 // pred_check
      _
    $region30: #{resblock_body_forward.10} parent=5 // pred_check_branch
      %142 = sbr.rel (%p139) target = $region32
    $region31: #{resblock_body_forward.10} parent=5 // pred_region
      %s143 = ssub.s32 %s9, 1
      %s144 = smul.u32 8, %s14
      %p145 = scmp.lt.s32.totalorder %s144, 15
      %s146 = scalar_select %p145, %s144, 15
      %s147 = smul.addr %s146, 4
      %s148 = scalar_lea.vmem %s0, %s147
      %p149 = pneg %p35
      %p150 = pneg %p32
      %p151 = pneg %p56
      %p152 = pneg %p53
      %p153 = pneg %p77
      %p154 = pneg %p74
      %p155 = pneg %p103
      %p156 = pneg %p100
      %s157 = smul.u32 8, %s14
      %p158 = scmp.lt.s32.totalorder %s157, 15
      %s159 = scalar_select %p158, %s157, 15
      %s160 = smul.addr %s159, 4
      %s161 = scalar_lea.vmem %s3, %s160
      %s162 = smul.u32 8, %s14
      %p163 = scmp.lt.s32.totalorder %s162, 15
      %s164 = scalar_select %p163, %s162, 15
      %s165 = smul.addr %s164, 4
      %s166 = scalar_lea.vmem %s0, %s165
      %s167 = smul.u32 8, %s14
      %s168 = smul.u32 8, %s14
      %p169 = scmp.lt.s32.totalorder %s168, 15
      %s170 = scalar_select %p169, %s168, 15
      %s171 = smul.addr %s170, 4
      %s172 = scalar_lea.vmem %s3, %s171
      %s173 = smul.u32 8, %s14
      %v175 = vld [vmem:[%s166] sm:$0xf]
      %v176 = vld [vmem:[%s166 + $0x4] sm:$0xf]
      %v177 = vld [vmem:[%s166 + $0x8] sm:$0xf]
      %v178 = vld [vmem:[%s166 + $0xc] sm:$0xf]
      %v179 = vld [vmem:[%s166 + $0x10] sm:$0xf]
      %v180 = vld [vmem:[%s166 + $0x14] sm:$0xf]
      %v181 = vld [vmem:[%s166 + $0x18] sm:$0xf]
      %v182 = vld [vmem:[%s166 + $0x1c] sm:$0xf]
      %v183 = vld [vmem:[%s1] sm:$0xf]
      %v184 = vld [vmem:[%s2] sm:$0x1]
      %v186 = vperm.slane %v184, 0
      %v196 = vunpack.c.l.b16 %v175
      %v197 = vunpack.c.l.b16 %v176
      %v198 = vunpack.c.l.b16 %v177
      %v199 = vunpack.c.l.b16 %v178
      %v200 = vunpack.c.l.b16 %v179
      %v201 = vunpack.c.l.b16 %v180
      %v202 = vunpack.c.l.b16 %v181
      %v203 = vunpack.c.l.b16 %v182
      %v204 = vpack.c.b16 %v197, %v196
      %v205 = vpack.c.b16 %v199, %v198
      %v206 = vpack.c.b16 %v201, %v200
      %v207 = vpack.c.b16 %v203, %v202
      %vm208 = vcmask 64512
      %v210 = vsel %vm208, %v204, 0
      %v213 = vsel %vm208, %v205, 0
      %v216 = vsel %vm208, %v206, 0
      %v219 = vsel %vm208, %v207, 0
      %vm221 = vcmask 1043456
      %v223 = vsel %vm221, %v183, 0
      %225 = vmatpush.bf16.msra.mxu0 0
      %226 = vmatpush.bf16.msra.mxu0 0
      %227 = vmatpush.bf16.msra.mxu0 0
      %228 = vmatpush.bf16.msra.mxu0 0
      %229 = vmatpush.bf16.msra.mxu0 0
      %230 = vmatpush.bf16.msra.mxu0 0
      %231 = vmatpush.bf16.msra.mxu0 0
      %232 = vmatpush.bf16.msra.mxu0 %v223
      %233 = vmatmul.bf16.gmra.mxu0 %v210
      %v234 = vpop.f32.mrf.mxu0
      %v235 = vadd.f32 %v186, %v234
      %v236 = vpop.f32.mrf.mxu0
      %v237 = vadd.f32 %v186, %v236
      %238 = vmatmul.bf16.gmra.mxu0 %v213
      %v239 = vpop.f32.mrf.mxu0
      %v240 = vadd.f32 %v186, %v239
      %v241 = vpop.f32.mrf.mxu0
      %v242 = vadd.f32 %v186, %v241
      %243 = vmatmul.bf16.gmra.mxu0 %v216
      %v244 = vpop.f32.mrf.mxu0
      %v245 = vadd.f32 %v186, %v244
      %v246 = vpop.f32.mrf.mxu0
      %v247 = vadd.f32 %v186, %v246
      %248 = vmatmul.bf16.gmra.mxu0 %v219
      %v249 = vpop.f32.mrf.mxu0
      %v250 = vadd.f32 %v186, %v249
      %v251 = vpop.f32.mrf.mxu0
      %v252 = vadd.f32 %v186, %v251
      %253 = vdwg.mxu0
      %v254 = vmin.f32 %v235, 20.0
      %v255 = vmin.f32 %v237, 20.0
      %v256 = vmin.f32 %v240, 20.0
      %v257 = vmin.f32 %v242, 20.0
      %v258 = vmin.f32 %v245, 20.0
      %v259 = vmin.f32 %v247, 20.0
      %v260 = vmin.f32 %v250, 20.0
      %v261 = vmin.f32 %v252, 20.0
      %v262 = vmul.f32 %v254, 1.442695
      %v263 = vpow.pop %v262
      %v264 = vmul.f32 %v255, 1.442695
      %v265 = vpow.pop %v264
      %v266 = vmul.f32 %v256, 1.442695
      %v267 = vpow.pop %v266
      %v268 = vmul.f32 %v257, 1.442695
      %v269 = vpow.pop %v268
      %v270 = vmul.f32 %v258, 1.442695
      %v271 = vpow.pop %v270
      %v272 = vmul.f32 %v259, 1.442695
      %v273 = vpow.pop %v272
      %v274 = vmul.f32 %v260, 1.442695
      %v275 = vpow.pop %v274
      %v276 = vmul.f32 %v261, 1.442695
      %v277 = vpow.pop %v276
      %v278 = vadd.f32 %v263, 2.0
      %v279 = vadd.f32 %v265, 2.0
      %v280 = vadd.f32 %v267, 2.0
      %v281 = vadd.f32 %v269, 2.0
      %v282 = vadd.f32 %v271, 2.0
      %v283 = vadd.f32 %v273, 2.0
      %v284 = vadd.f32 %v275, 2.0
      %v285 = vadd.f32 %v277, 2.0
      %v286 = vmul.f32 %v263, %v278
      %v287 = vmul.f32 %v265, %v279
      %v288 = vmul.f32 %v267, %v280
      %v289 = vmul.f32 %v269, %v281
      %v290 = vmul.f32 %v271, %v282
      %v291 = vmul.f32 %v273, %v283
      %v292 = vmul.f32 %v275, %v284
      %v293 = vmul.f32 %v277, %v285
      %v294 = vadd.f32 %v286, 2.0
      %v295 = vadd.f32 %v287, 2.0
      %v296 = vadd.f32 %v288, 2.0
      %v297 = vadd.f32 %v289, 2.0
      %v298 = vadd.f32 %v290, 2.0
      %v299 = vadd.f32 %v291, 2.0
      %v300 = vadd.f32 %v292, 2.0
      %v301 = vadd.f32 %v293, 2.0
      %v302 = vrcp.pop %v294
      %v303 = vrcp.pop %v295
      %v304 = vrcp.pop %v296
      %v305 = vrcp.pop %v297
      %v306 = vrcp.pop %v298
      %v307 = vrcp.pop %v299
      %v308 = vrcp.pop %v300
      %v309 = vrcp.pop %v301
      %v310 = vmul.f32 %v286, %v302
      %v311 = vmul.f32 %v287, %v303
      %v312 = vmul.f32 %v288, %v304
      %v313 = vmul.f32 %v289, %v305
      %v314 = vmul.f32 %v290, %v306
      %v315 = vmul.f32 %v291, %v307
      %v316 = vmul.f32 %v292, %v308
      %v317 = vmul.f32 %v293, %v309
      %v318 = vmul.f32 %v235, %v310
      %v319 = vmul.f32 %v237, %v311
      %v320 = vmul.f32 %v240, %v312
      %v321 = vmul.f32 %v242, %v313
      %v322 = vmul.f32 %v245, %v314
      %v323 = vmul.f32 %v247, %v315
      %v324 = vmul.f32 %v250, %v316
      %v325 = vmul.f32 %v252, %v317
      %v326 = vpack.c.bf16 %v318, %v318
      %v327 = vpack.c.bf16 %v319, %v319
      %v328 = vpack.c.bf16 %v320, %v320
      %v329 = vpack.c.bf16 %v321, %v321
      %v330 = vpack.c.bf16 %v322, %v322
      %v331 = vpack.c.bf16 %v323, %v323
      %v332 = vpack.c.bf16 %v324, %v324
      %v333 = vpack.c.bf16 %v325, %v325
      %vm334 = vcmask 27648
      %335 = vst.msk [vmem:[%s172] sm:$0xf] %vm334, %v326
      %336 = vst.msk [vmem:[%s172 + $0x4] sm:$0xf] %vm334, %v327
      %337 = vst.msk [vmem:[%s172 + $0x8] sm:$0xf] %vm334, %v328
      %338 = vst.msk [vmem:[%s172 + $0xc] sm:$0xf] %vm334, %v329
      %339 = vst.msk [vmem:[%s172 + $0x10] sm:$0xf] %vm334, %v330
      %340 = vst.msk [vmem:[%s172 + $0x14] sm:$0xf] %vm334, %v331
      %341 = vst.msk [vmem:[%s172 + $0x18] sm:$0xf] %vm334, %v332
      %342 = vst.msk [vmem:[%s172 + $0x1c] sm:$0xf] %vm334, %v333
      %s343 = smul.u32 8, %s14
      %p344 = scmp.lt.s32.totalorder %s343, 15
      %s345 = scalar_select %p344, %s343, 15
      %s346 = smul.addr %s345, 4
      %s347 = scalar_lea.vmem %s3, %s346
      // Predicated region
      $region33: #{resblock_body_forward.10} parent=31 // pred_check
        %p348 = pneg %p100
      $region34: #{resblock_body_forward.10} parent=31 // pred_check_branch
        %350 = sbr.rel (%p348) target = $region36
      $region35: #{resblock_body_forward.10} parent=31 // pred_region
        %s351 = smul.u32 8, %s14
      $region36: #{resblock_body_forward.10} parent=31 // pred_fallthru
        _
    $region32: #{resblock_body_forward.10} parent=5 // pred_fallthru
      _
    %p352 = scmp.le.s32.totalorder 2, %s9
    // Predicated region
    $region37: #{resblock_body_forward.10} parent=5 // pred_check
      %p353 = pneg %p352
    $region38: #{resblock_body_forward.10} parent=5 // pred_check_branch
      %355 = sbr.rel (%p353) target = $region40
    $region39: #{resblock_body_forward.10} parent=5 // pred_region
      %s356 = ssub.s32 %s9, 2
      // Predicated region
      $region41: #{resblock_body_forward.10} parent=39 // pred_check
        %p357 = pneg %p106
      $region42: #{resblock_body_forward.10} parent=39 // pred_check_branch
        %359 = sbr.rel (%p357) target = $region44
      $region43: #{resblock_body_forward.10} parent=39 // pred_region
        %s360 = smul.u32 8, %s15
        %p361 = scmp.lt.s32.totalorder %s360, 15
        %s362 = scalar_select %p361, %s360, 15
        %s363 = smul.addr %s362, 4
        %s364 = scalar_lea.vmem %s3, %s363
      $region44: #{resblock_body_forward.10} parent=39 // pred_fallthru
        _
    $region40: #{resblock_body_forward.10} parent=5 // pred_fallthru
      _
  $region6: #{resblock_body_forward.10} parent=0 // loop_footer
    %s13 = sadd.s32 1, %s9
  $region7: #{resblock_body_forward.10} parent=0 // loop_footer_branch
    %8 = sbr.rel target = $region3
  $region8: #{resblock_body_forward.10} parent=0 // loop_exit
    _

// kernel: resblock_body_forward.9
$region0: #{resblock_body_forward.9}
  #allocation0 [shape = 'u32[]', space=smem, size = 0x4, offset = 0x4, fixed_abs, tag = 'smem constant byte address 0x4 - core index']
  #allocation1 [shape = 'u32[72,128]{1,0:T(1,128)}', space=vmem, size = 0x9000, scoped, tag = 'internal scratch']
  %s0 = inlined_call_operand.vmem [shape: bf16[128,8], index: 0, kind: input, shape index: {}]
  %s1 = inlined_call_operand.vmem [shape: bf16[8,8], index: 1, kind: input, shape index: {}]
  %s2 = inlined_call_operand.vmem [shape: f32[1,8], index: 2, kind: input, shape index: {}]
  %s3 = inlined_call_operand.vmem [shape: bf16[128,8], index: 3, kind: output, shape index: {}]
  %s4 = sld [smem:[#allocation0]]
  $region45: #{resblock_body_forward.9} parent=0
    _
  %s6 = ssub.s32 1, %s4
  %s7 = scalar_select 0, %s6, %s4
  loop: start=0, step=1, limit=4
  $region2: #{resblock_body_forward.9} parent=0 // loop_pre_header
    _
  $region3: #{resblock_body_forward.9} parent=0 // loop_header
    %s9 = sphi 0, %s13
    %p10 = scmp.ge.s32.totalorder %s9, 4
    %s19 = sphi 0, %s21
    %s22 = sphi 0, %s19
    %s23 = sphi 0, %s22
    %s39 = sphi 0, %s23
    %s43 = sphi 0, %s43
    %s45 = sphi 0, %s43
    %s46 = sphi 0, %s45
    %s60 = sphi 0, %s46
    %s64 = sphi 0, %s64
    %s66 = sphi 0, %s64
    %s67 = sphi 0, %s66
    %s81 = sphi 0, %s67
    %s87 = sphi 0, %s89
    %s90 = sphi 0, %s87
    %s91 = sphi 0, %s90
    %s107 = sphi 0, %s91
  $region4: #{resblock_body_forward.9} parent=0 // loop_header_branch
    %12 = sbr.rel (%p10) target = $region8
  $region5: #{resblock_body_forward.9} parent=0 // loop_body
    %s14 = ssub.s32 %s9, 1
    %s15 = ssub.s32 %s9, 2
    %s16 = sadd.s32 %s9, 1
    %s17 = ssub.s32 %s9, %s16
    %p18 = scmp.eq.s32.totalorder %s17, 0
    %s20 = sadd.s32 %s19, 1
    %s21 = scalar_select %p18, %s19, %s20
    %p24 = pneg %p18
    %p25 = scmp.eq.s32.totalorder %s9, 1
    %p26 = por %p24, %p25
    %p27 = scmp.ne.s32.totalorder %s19, %s22
    %p28 = scmp.eq.s32.totalorder %s9, 0
    %p29 = por %p27, %p28
    %p30 = scmp.ne.s32.totalorder %s19, %s22
    %p31 = scmp.eq.s32.totalorder %s14, 1
    %p32 = por %p30, %p31
    %p33 = scmp.ne.s32.totalorder %s22, %s23
    %p34 = scmp.eq.s32.totalorder %s14, 0
    %p35 = por %p33, %p34
    %p36 = scmp.ne.s32.totalorder %s22, %s23
    %p37 = scmp.eq.s32.totalorder %s15, 1
    %p38 = por %p36, %p37
    %p40 = scmp.ne.s32.totalorder %s23, %s39
    %p41 = scmp.eq.s32.totalorder %s15, 0
    %p42 = por %p40, %p41
    %s44 = sadd.s32 %s43, 1
    %p47 = scmp.eq.s32.totalorder %s9, 1
    %p48 = scmp.ne.s32.totalorder %s43, %s45
    %p49 = scmp.eq.s32.totalorder %s9, 0
    %p50 = por %p48, %p49
    %p51 = scmp.ne.s32.totalorder %s43, %s45
    %p52 = scmp.eq.s32.totalorder %s14, 1
    %p53 = por %p51, %p52
    %p54 = scmp.ne.s32.totalorder %s45, %s46
    %p55 = scmp.eq.s32.totalorder %s14, 0
    %p56 = por %p54, %p55
    %p57 = scmp.ne.s32.totalorder %s45, %s46
    %p58 = scmp.eq.s32.totalorder %s15, 1
    %p59 = por %p57, %p58
    %p61 = scmp.ne.s32.totalorder %s46, %s60
    %p62 = scmp.eq.s32.totalorder %s15, 0
    %p63 = por %p61, %p62
    %s65 = sadd.s32 %s64, 1
    %p68 = scmp.eq.s32.totalorder %s9, 1
    %p69 = scmp.ne.s32.totalorder %s64, %s66
    %p70 = scmp.eq.s32.totalorder %s9, 0
    %p71 = por %p69, %p70
    %p72 = scmp.ne.s32.totalorder %s64, %s66
    %p73 = scmp.eq.s32.totalorder %s14, 1
    %p74 = por %p72, %p73
    %p75 = scmp.ne.s32.totalorder %s66, %s67
    %p76 = scmp.eq.s32.totalorder %s14, 0
    %p77 = por %p75, %p76
    %p78 = scmp.ne.s32.totalorder %s66, %s67
    %p79 = scmp.eq.s32.totalorder %s15, 1
    %p80 = por %p78, %p79
    %p82 = scmp.ne.s32.totalorder %s67, %s81
    %p83 = scmp.eq.s32.totalorder %s15, 0
    %p84 = por %p82, %p83
    %s85 = ssub.s32 %s9, %s16
    %p86 = scmp.eq.s32.totalorder %s85, 0
    %s88 = sadd.s32 %s87, 1
    %s89 = scalar_select %p86, %s87, %s88
    %p92 = pneg %p86
    %p93 = scmp.eq.s32.totalorder %s9, 1
    %p94 = por %p92, %p93
    %p95 = scmp.ne.s32.totalorder %s87, %s90
    %p96 = scmp.eq.s32.totalorder %s9, 0
    %p97 = por %p95, %p96
    %p98 = scmp.ne.s32.totalorder %s87, %s90
    %p99 = scmp.eq.s32.totalorder %s14, 1
    %p100 = por %p98, %p99
    %p101 = scmp.ne.s32.totalorder %s90, %s91
    %p102 = scmp.eq.s32.totalorder %s14, 0
    %p103 = por %p101, %p102
    %p104 = scmp.ne.s32.totalorder %s90, %s91
    %p105 = scmp.eq.s32.totalorder %s15, 1
    %p106 = por %p104, %p105
    %p108 = scmp.ne.s32.totalorder %s91, %s107
    %p109 = scmp.eq.s32.totalorder %s15, 0
    %p110 = por %p108, %p109
    %p111 = scmp.le.s32.totalorder 1, %s9
    %p112 = scmp.lt.s32.totalorder %s9, 3
    %p113 = pnand %p111, %p112
    %p114 = pneg %p113
    // Predicated region
    $region9: #{resblock_body_forward.9} parent=5 // pred_check
      _
    $region10: #{resblock_body_forward.9} parent=5 // pred_check_branch
      %116 = sbr.rel (%p113) target = $region12
    $region11: #{resblock_body_forward.9} parent=5 // pred_region
      %s117 = ssub.s32 %s9, 1
      // Predicated region
      $region13: #{resblock_body_forward.9} parent=11 // pred_check
        %p118 = pneg %p56
      $region14: #{resblock_body_forward.9} parent=11 // pred_check_branch
        %120 = sbr.rel (%p118) target = $region16
      $region15: #{resblock_body_forward.9} parent=11 // pred_region
        _
      $region16: #{resblock_body_forward.9} parent=11 // pred_fallthru
        _
      // Predicated region
      $region17: #{resblock_body_forward.9} parent=11 // pred_check
        %p121 = pneg %p77
      $region18: #{resblock_body_forward.9} parent=11 // pred_check_branch
        %123 = sbr.rel (%p121) target = $region20
      $region19: #{resblock_body_forward.9} parent=11 // pred_region
        _
      $region20: #{resblock_body_forward.9} parent=11 // pred_fallthru
        _
    $region12: #{resblock_body_forward.9} parent=5 // pred_fallthru
      _
    %p124 = scmp.lt.s32.totalorder %s9, 2
    // Predicated region
    $region21: #{resblock_body_forward.9} parent=5 // pred_check
      %p125 = pneg %p124
    $region22: #{resblock_body_forward.9} parent=5 // pred_check_branch
      %127 = sbr.rel (%p125) target = $region24
    $region23: #{resblock_body_forward.9} parent=5 // pred_region
      // Predicated region
      $region25: #{resblock_body_forward.9} parent=23 // pred_check
        %p128 = pneg %p29
      $region26: #{resblock_body_forward.9} parent=23 // pred_check_branch
        %130 = sbr.rel (%p128) target = $region28
      $region27: #{resblock_body_forward.9} parent=23 // pred_region
        %s131 = smul.u32 8, %s9
        %p132 = scmp.lt.s32.totalorder %s131, 15
        %s133 = scalar_select %p132, %s131, 15
        %s134 = smul.addr %s133, 4
        %s135 = scalar_lea.vmem %s0, %s134
        %s136 = smul.u32 8, %s9
      $region28: #{resblock_body_forward.9} parent=23 // pred_fallthru
        _
    $region24: #{resblock_body_forward.9} parent=5 // pred_fallthru
      _
    %p137 = scmp.le.s32.totalorder 1, %s9
    %p138 = scmp.lt.s32.totalorder %s9, 3
    %p139 = pnand %p137, %p138
    %p140 = pneg %p139
    // Predicated region
    $region29: #{resblock_body_forward.9} parent=5 // pred_check
      _
    $region30: #{resblock_body_forward.9} parent=5 // pred_check_branch
      %142 = sbr.rel (%p139) target = $region32
    $region31: #{resblock_body_forward.9} parent=5 // pred_region
      %s143 = ssub.s32 %s9, 1
      %s144 = smul.u32 8, %s14
      %p145 = scmp.lt.s32.totalorder %s144, 15
      %s146 = scalar_select %p145, %s144, 15
      %s147 = smul.addr %s146, 4
      %s148 = scalar_lea.vmem %s0, %s147
      %p149 = pneg %p35
      %p150 = pneg %p32
      %p151 = pneg %p56
      %p152 = pneg %p53
      %p153 = pneg %p77
      %p154 = pneg %p74
      %p155 = pneg %p103
      %p156 = pneg %p100
      %s157 = smul.u32 8, %s14
      %p158 = scmp.lt.s32.totalorder %s157, 15
      %s159 = scalar_select %p158, %s157, 15
      %s160 = smul.addr %s159, 4
      %s161 = scalar_lea.vmem %s3, %s160
      %s162 = smul.u32 8, %s14
      %p163 = scmp.lt.s32.totalorder %s162, 15
      %s164 = scalar_select %p163, %s162, 15
      %s165 = smul.addr %s164, 4
      %s166 = scalar_lea.vmem %s0, %s165
      %s167 = smul.u32 8, %s14
      %s168 = smul.u32 8, %s14
      %p169 = scmp.lt.s32.totalorder %s168, 15
      %s170 = scalar_select %p169, %s168, 15
      %s171 = smul.addr %s170, 4
      %s172 = scalar_lea.vmem %s3, %s171
      %s173 = smul.u32 8, %s14
      %v175 = vld [vmem:[%s166] sm:$0xf]
      %v176 = vld [vmem:[%s166 + $0x4] sm:$0xf]
      %v177 = vld [vmem:[%s166 + $0x8] sm:$0xf]
      %v178 = vld [vmem:[%s166 + $0xc] sm:$0xf]
      %v179 = vld [vmem:[%s166 + $0x10] sm:$0xf]
      %v180 = vld [vmem:[%s166 + $0x14] sm:$0xf]
      %v181 = vld [vmem:[%s166 + $0x18] sm:$0xf]
      %v182 = vld [vmem:[%s166 + $0x1c] sm:$0xf]
      %v183 = vld [vmem:[%s1] sm:$0xf]
      %v184 = vld [vmem:[%s2] sm:$0x1]
      %v186 = vperm.slane %v184, 0
      %v196 = vunpack.c.l.b16 %v175
      %v197 = vunpack.c.l.b16 %v176
      %v198 = vunpack.c.l.b16 %v177
      %v199 = vunpack.c.l.b16 %v178
      %v200 = vunpack.c.l.b16 %v179
      %v201 = vunpack.c.l.b16 %v180
      %v202 = vunpack.c.l.b16 %v181
      %v203 = vunpack.c.l.b16 %v182
      %v204 = vpack.c.b16 %v197, %v196
      %v205 = vpack.c.b16 %v199, %v198
      %v206 = vpack.c.b16 %v201, %v200
      %v207 = vpack.c.b16 %v203, %v202
      %vm208 = vcmask 64512
      %v210 = vsel %vm208, %v204, 0
      %v213 = vsel %vm208, %v205, 0
      %v216 = vsel %vm208, %v206, 0
      %v219 = vsel %vm208, %v207, 0
      %vm221 = vcmask 1043456
      %v223 = vsel %vm221, %v183, 0
      %225 = vmatpush.bf16.msra.mxu0 0
      %226 = vmatpush.bf16.msra.mxu0 0
      %227 = vmatpush.bf16.msra.mxu0 0
      %228 = vmatpush.bf16.msra.mxu0 0
      %229 = vmatpush.bf16.msra.mxu0 0
      %230 = vmatpush.bf16.msra.mxu0 0
      %231 = vmatpush.bf16.msra.mxu0 0
      %232 = vmatpush.bf16.msra.mxu0 %v223
      %233 = vmatmul.bf16.gmra.mxu0 %v210
      %v234 = vpop.f32.mrf.mxu0
      %v235 = vadd.f32 %v186, %v234
      %v236 = vpop.f32.mrf.mxu0
      %v237 = vadd.f32 %v186, %v236
      %238 = vmatmul.bf16.gmra.mxu0 %v213
      %v239 = vpop.f32.mrf.mxu0
      %v240 = vadd.f32 %v186, %v239
      %v241 = vpop.f32.mrf.mxu0
      %v242 = vadd.f32 %v186, %v241
      %243 = vmatmul.bf16.gmra.mxu0 %v216
      %v244 = vpop.f32.mrf.mxu0
      %v245 = vadd.f32 %v186, %v244
      %v246 = vpop.f32.mrf.mxu0
      %v247 = vadd.f32 %v186, %v246
      %248 = vmatmul.bf16.gmra.mxu0 %v219
      %v249 = vpop.f32.mrf.mxu0
      %v250 = vadd.f32 %v186, %v249
      %v251 = vpop.f32.mrf.mxu0
      %v252 = vadd.f32 %v186, %v251
      %253 = vdwg.mxu0
      %v254 = vmin.f32 %v235, 20.0
      %v255 = vmin.f32 %v237, 20.0
      %v256 = vmin.f32 %v240, 20.0
      %v257 = vmin.f32 %v242, 20.0
      %v258 = vmin.f32 %v245, 20.0
      %v259 = vmin.f32 %v247, 20.0
      %v260 = vmin.f32 %v250, 20.0
      %v261 = vmin.f32 %v252, 20.0
      %v262 = vmul.f32 %v254, 1.442695
      %v263 = vpow.pop %v262
      %v264 = vmul.f32 %v255, 1.442695
      %v265 = vpow.pop %v264
      %v266 = vmul.f32 %v256, 1.442695
      %v267 = vpow.pop %v266
      %v268 = vmul.f32 %v257, 1.442695
      %v269 = vpow.pop %v268
      %v270 = vmul.f32 %v258, 1.442695
      %v271 = vpow.pop %v270
      %v272 = vmul.f32 %v259, 1.442695
      %v273 = vpow.pop %v272
      %v274 = vmul.f32 %v260, 1.442695
      %v275 = vpow.pop %v274
      %v276 = vmul.f32 %v261, 1.442695
      %v277 = vpow.pop %v276
      %v278 = vadd.f32 %v263, 2.0
      %v279 = vadd.f32 %v265, 2.0
      %v280 = vadd.f32 %v267, 2.0
      %v281 = vadd.f32 %v269, 2.0
      %v282 = vadd.f32 %v271, 2.0
      %v283 = vadd.f32 %v273, 2.0
      %v284 = vadd.f32 %v275, 2.0
      %v285 = vadd.f32 %v277, 2.0
      %v286 = vmul.f32 %v263, %v278
      %v287 = vmul.f32 %v265, %v279
      %v288 = vmul.f32 %v267, %v280
      %v289 = vmul.f32 %v269, %v281
      %v290 = vmul.f32 %v271, %v282
      %v291 = vmul.f32 %v273, %v283
      %v292 = vmul.f32 %v275, %v284
      %v293 = vmul.f32 %v277, %v285
      %v294 = vadd.f32 %v286, 2.0
      %v295 = vadd.f32 %v287, 2.0
      %v296 = vadd.f32 %v288, 2.0
      %v297 = vadd.f32 %v289, 2.0
      %v298 = vadd.f32 %v290, 2.0
      %v299 = vadd.f32 %v291, 2.0
      %v300 = vadd.f32 %v292, 2.0
      %v301 = vadd.f32 %v293, 2.0
      %v302 = vrcp.pop %v294
      %v303 = vrcp.pop %v295
      %v304 = vrcp.pop %v296
      %v305 = vrcp.pop %v297
      %v306 = vrcp.pop %v298
      %v307 = vrcp.pop %v299
      %v308 = vrcp.pop %v300
      %v309 = vrcp.pop %v301
      %v310 = vmul.f32 %v286, %v302
      %v311 = vmul.f32 %v287, %v303
      %v312 = vmul.f32 %v288, %v304
      %v313 = vmul.f32 %v289, %v305
      %v314 = vmul.f32 %v290, %v306
      %v315 = vmul.f32 %v291, %v307
      %v316 = vmul.f32 %v292, %v308
      %v317 = vmul.f32 %v293, %v309
      %v318 = vmul.f32 %v235, %v310
      %v319 = vmul.f32 %v237, %v311
      %v320 = vmul.f32 %v240, %v312
      %v321 = vmul.f32 %v242, %v313
      %v322 = vmul.f32 %v245, %v314
      %v323 = vmul.f32 %v247, %v315
      %v324 = vmul.f32 %v250, %v316
      %v325 = vmul.f32 %v252, %v317
      %v326 = vpack.c.bf16 %v318, %v318
      %v327 = vpack.c.bf16 %v319, %v319
      %v328 = vpack.c.bf16 %v320, %v320
      %v329 = vpack.c.bf16 %v321, %v321
      %v330 = vpack.c.bf16 %v322, %v322
      %v331 = vpack.c.bf16 %v323, %v323
      %v332 = vpack.c.bf16 %v324, %v324
      %v333 = vpack.c.bf16 %v325, %v325
      %vm334 = vcmask 60416
      %335 = vst.msk [vmem:[%s172] sm:$0xf] %vm334, %v326
      %336 = vst.msk [vmem:[%s172 + $0x4] sm:$0xf] %vm334, %v327
      %337 = vst.msk [vmem:[%s172 + $0x8] sm:$0xf] %vm334, %v328
      %338 = vst.msk [vmem:[%s172 + $0xc] sm:$0xf] %vm334, %v329
      %339 = vst.msk [vmem:[%s172 + $0x10] sm:$0xf] %vm334, %v330
      %340 = vst.msk [vmem:[%s172 + $0x14] sm:$0xf] %vm334, %v331
      %341 = vst.msk [vmem:[%s172 + $0x18] sm:$0xf] %vm334, %v332
      %342 = vst.msk [vmem:[%s172 + $0x1c] sm:$0xf] %vm334, %v333
      %s343 = smul.u32 8, %s14
      %p344 = scmp.lt.s32.totalorder %s343, 15
      %s345 = scalar_select %p344, %s343, 15
      %s346 = smul.addr %s345, 4
      %s347 = scalar_lea.vmem %s3, %s346
      // Predicated region
      $region33: #{resblock_body_forward.9} parent=31 // pred_check
        %p348 = pneg %p100
      $region34: #{resblock_body_forward.9} parent=31 // pred_check_branch
        %350 = sbr.rel (%p348) target = $region36
      $region35: #{resblock_body_forward.9} parent=31 // pred_region
        %s351 = smul.u32 8, %s14
      $region36: #{resblock_body_forward.9} parent=31 // pred_fallthru
        _
    $region32: #{resblock_body_forward.9} parent=5 // pred_fallthru
      _
    %p352 = scmp.le.s32.totalorder 2, %s9
    // Predicated region
    $region37: #{resblock_body_forward.9} parent=5 // pred_check
      %p353 = pneg %p352
    $region38: #{resblock_body_forward.9} parent=5 // pred_check_branch
      %355 = sbr.rel (%p353) target = $region40
    $region39: #{resblock_body_forward.9} parent=5 // pred_region
      %s356 = ssub.s32 %s9, 2
      // Predicated region
      $region41: #{resblock_body_forward.9} parent=39 // pred_check
        %p357 = pneg %p106
      $region42: #{resblock_body_forward.9} parent=39 // pred_check_branch
        %359 = sbr.rel (%p357) target = $region44
      $region43: #{resblock_body_forward.9} parent=39 // pred_region
        %s360 = smul.u32 8, %s15
        %p361 = scmp.lt.s32.totalorder %s360, 15
        %s362 = scalar_select %p361, %s360, 15
        %s363 = smul.addr %s362, 4
        %s364 = scalar_lea.vmem %s3, %s363
      $region44: #{resblock_body_forward.9} parent=39 // pred_fallthru
        _
    $region40: #{resblock_body_forward.9} parent=5 // pred_fallthru
      _
  $region6: #{resblock_body_forward.9} parent=0 // loop_footer
    %s13 = sadd.s32 1, %s9
  $region7: #{resblock_body_forward.9} parent=0 // loop_footer_branch
    %8 = sbr.rel target = $region3
  $region8: #{resblock_body_forward.9} parent=0 // loop_exit
    _

// kernel: resblock_body_forward.7
$region0: #{resblock_body_forward.7}
  #allocation0 [shape = 'u32[]', space=smem, size = 0x4, offset = 0x4, fixed_abs, tag = 'smem constant byte address 0x4 - core index']
  #allocation1 [shape = 'u32[72,128]{1,0:T(1,128)}', space=vmem, size = 0x9000, scoped, tag = 'internal scratch']
  %s0 = inlined_call_operand.vmem [shape: bf16[2,4,90,4], index: 0, kind: input, shape index: {}]
  %s1 = inlined_call_operand.vmem [shape: bf16[9,4,8], index: 1, kind: input, shape index: {}]
  %s2 = inlined_call_operand.vmem [shape: f32[1,8], index: 2, kind: input, shape index: {}]
  %s3 = inlined_call_operand.vmem [shape: bf16[2,72,8], index: 3, kind: output, shape index: {}]
  %s4 = sld [smem:[#allocation0]]
  $region45: #{resblock_body_forward.7} parent=0
    _
  %s6 = ssub.s32 1, %s4
  %s7 = scalar_select 0, %s6, %s4
  loop: start=0, step=1, limit=4
  $region2: #{resblock_body_forward.7} parent=0 // loop_pre_header
    _
  $region3: #{resblock_body_forward.7} parent=0 // loop_header
    %s9 = sphi 0, %s13
    %p10 = scmp.ge.s32.totalorder %s9, 4
    %s19 = sphi 0, %s21
    %s22 = sphi 0, %s19
    %s23 = sphi 0, %s22
    %s39 = sphi 0, %s23
    %s43 = sphi 0, %s43
    %s45 = sphi 0, %s43
    %s46 = sphi 0, %s45
    %s60 = sphi 0, %s46
    %s64 = sphi 0, %s64
    %s66 = sphi 0, %s64
    %s67 = sphi 0, %s66
    %s81 = sphi 0, %s67
    %s87 = sphi 0, %s89
    %s90 = sphi 0, %s87
    %s91 = sphi 0, %s90
    %s107 = sphi 0, %s91
  $region4: #{resblock_body_forward.7} parent=0 // loop_header_branch
    %12 = sbr.rel (%p10) target = $region8
  $region5: #{resblock_body_forward.7} parent=0 // loop_body
    %s14 = ssub.s32 %s9, 1
    %s15 = ssub.s32 %s9, 2
    %s16 = sadd.s32 %s9, 1
    %s17 = ssub.s32 %s9, %s16
    %p18 = scmp.eq.s32.totalorder %s17, 0
    %s20 = sadd.s32 %s19, 1
    %s21 = scalar_select %p18, %s19, %s20
    %p24 = pneg %p18
    %p25 = scmp.eq.s32.totalorder %s9, 1
    %p26 = por %p24, %p25
    %p27 = scmp.ne.s32.totalorder %s19, %s22
    %p28 = scmp.eq.s32.totalorder %s9, 0
    %p29 = por %p27, %p28
    %p30 = scmp.ne.s32.totalorder %s19, %s22
    %p31 = scmp.eq.s32.totalorder %s14, 1
    %p32 = por %p30, %p31
    %p33 = scmp.ne.s32.totalorder %s22, %s23
    %p34 = scmp.eq.s32.totalorder %s14, 0
    %p35 = por %p33, %p34
    %p36 = scmp.ne.s32.totalorder %s22, %s23
    %p37 = scmp.eq.s32.totalorder %s15, 1
    %p38 = por %p36, %p37
    %p40 = scmp.ne.s32.totalorder %s23, %s39
    %p41 = scmp.eq.s32.totalorder %s15, 0
    %p42 = por %p40, %p41
    %s44 = sadd.s32 %s43, 1
    %p47 = scmp.eq.s32.totalorder %s9, 1
    %p48 = scmp.ne.s32.totalorder %s43, %s45
    %p49 = scmp.eq.s32.totalorder %s9, 0
    %p50 = por %p48, %p49
    %p51 = scmp.ne.s32.totalorder %s43, %s45
    %p52 = scmp.eq.s32.totalorder %s14, 1
    %p53 = por %p51, %p52
    %p54 = scmp.ne.s32.totalorder %s45, %s46
    %p55 = scmp.eq.s32.totalorder %s14, 0
    %p56 = por %p54, %p55
    %p57 = scmp.ne.s32.totalorder %s45, %s46
    %p58 = scmp.eq.s32.totalorder %s15, 1
    %p59 = por %p57, %p58
    %p61 = scmp.ne.s32.totalorder %s46, %s60
    %p62 = scmp.eq.s32.totalorder %s15, 0
    %p63 = por %p61, %p62
    %s65 = sadd.s32 %s64, 1
    %p68 = scmp.eq.s32.totalorder %s9, 1
    %p69 = scmp.ne.s32.totalorder %s64, %s66
    %p70 = scmp.eq.s32.totalorder %s9, 0
    %p71 = por %p69, %p70
    %p72 = scmp.ne.s32.totalorder %s64, %s66
    %p73 = scmp.eq.s32.totalorder %s14, 1
    %p74 = por %p72, %p73
    %p75 = scmp.ne.s32.totalorder %s66, %s67
    %p76 = scmp.eq.s32.totalorder %s14, 0
    %p77 = por %p75, %p76
    %p78 = scmp.ne.s32.totalorder %s66, %s67
    %p79 = scmp.eq.s32.totalorder %s15, 1
    %p80 = por %p78, %p79
    %p82 = scmp.ne.s32.totalorder %s67, %s81
    %p83 = scmp.eq.s32.totalorder %s15, 0
    %p84 = por %p82, %p83
    %s85 = ssub.s32 %s9, %s16
    %p86 = scmp.eq.s32.totalorder %s85, 0
    %s88 = sadd.s32 %s87, 1
    %s89 = scalar_select %p86, %s87, %s88
    %p92 = pneg %p86
    %p93 = scmp.eq.s32.totalorder %s9, 1
    %p94 = por %p92, %p93
    %p95 = scmp.ne.s32.totalorder %s87, %s90
    %p96 = scmp.eq.s32.totalorder %s9, 0
    %p97 = por %p95, %p96
    %p98 = scmp.ne.s32.totalorder %s87, %s90
    %p99 = scmp.eq.s32.totalorder %s14, 1
    %p100 = por %p98, %p99
    %p101 = scmp.ne.s32.totalorder %s90, %s91
    %p102 = scmp.eq.s32.totalorder %s14, 0
    %p103 = por %p101, %p102
    %p104 = scmp.ne.s32.totalorder %s90, %s91
    %p105 = scmp.eq.s32.totalorder %s15, 1
    %p106 = por %p104, %p105
    %p108 = scmp.ne.s32.totalorder %s91, %s107
    %p109 = scmp.eq.s32.totalorder %s15, 0
    %p110 = por %p108, %p109
    %p111 = scmp.le.s32.totalorder 1, %s9
    %p112 = scmp.lt.s32.totalorder %s9, 3
    %p113 = pnand %p111, %p112
    %p114 = pneg %p113
    // Predicated region
    $region9: #{resblock_body_forward.7} parent=5 // pred_check
      _
    $region10: #{resblock_body_forward.7} parent=5 // pred_check_branch
      %116 = sbr.rel (%p113) target = $region12
    $region11: #{resblock_body_forward.7} parent=5 // pred_region
      %s117 = ssub.s32 %s9, 1
      // Predicated region
      $region13: #{resblock_body_forward.7} parent=11 // pred_check
        %p118 = pneg %p56
      $region14: #{resblock_body_forward.7} parent=11 // pred_check_branch
        %120 = sbr.rel (%p118) target = $region16
      $region15: #{resblock_body_forward.7} parent=11 // pred_region
        _
      $region16: #{resblock_body_forward.7} parent=11 // pred_fallthru
        _
      // Predicated region
      $region17: #{resblock_body_forward.7} parent=11 // pred_check
        %p121 = pneg %p77
      $region18: #{resblock_body_forward.7} parent=11 // pred_check_branch
        %123 = sbr.rel (%p121) target = $region20
      $region19: #{resblock_body_forward.7} parent=11 // pred_region
        _
      $region20: #{resblock_body_forward.7} parent=11 // pred_fallthru
        _
    $region12: #{resblock_body_forward.7} parent=5 // pred_fallthru
      _
    %p124 = scmp.lt.s32.totalorder %s9, 2
    // Predicated region
    $region21: #{resblock_body_forward.7} parent=5 // pred_check
      %p125 = pneg %p124
    $region22: #{resblock_body_forward.7} parent=5 // pred_check_branch
      %127 = sbr.rel (%p125) target = $region24
    $region23: #{resblock_body_forward.7} parent=5 // pred_region
      // Predicated region
      $region25: #{resblock_body_forward.7} parent=23 // pred_check
        %p128 = pneg %p29
      $region26: #{resblock_body_forward.7} parent=23 // pred_check_branch
        %130 = sbr.rel (%p128) target = $region28
      $region27: #{resblock_body_forward.7} parent=23 // pred_region
        %p131 = scmp.lt.s32.totalorder %s9, 1
        %s132 = scalar_select %p131, %s9, 1
        %s133 = smul.addr %s132, 48
        %s134 = smul.addr %s133, 4
        %s135 = scalar_lea.vmem %s0, %s134
      $region28: #{resblock_body_forward.7} parent=23 // pred_fallthru
        _
    $region24: #{resblock_body_forward.7} parent=5 // pred_fallthru
      _
    %p136 = scmp.le.s32.totalorder 1, %s9
    %p137 = scmp.lt.s32.totalorder %s9, 3
    %p138 = pnand %p136, %p137
    %p139 = pneg %p138
    // Predicated region
    $region29: #{resblock_body_forward.7} parent=5 // pred_check
      _
    $region30: #{resblock_body_forward.7} parent=5 // pred_check_branch
      %141 = sbr.rel (%p138) target = $region32
    $region31: #{resblock_body_forward.7} parent=5 // pred_region
      %s142 = ssub.s32 %s9, 1
      %p143 = scmp.lt.s32.totalorder %s14, 1
      %s144 = scalar_select %p143, %s14, 1
      %s145 = smul.addr %s144, 48
      %s146 = smul.addr %s145, 4
      %s147 = scalar_lea.vmem %s0, %s146
      %p148 = pneg %p35
      %p149 = pneg %p32
      %p150 = pneg %p56
      %p151 = pneg %p53
      %p152 = pneg %p77
      %p153 = pneg %p74
      %p154 = pneg %p103
      %p155 = pneg %p100
      %p156 = scmp.lt.s32.totalorder %s14, 1
      %s157 = scalar_select %p156, %s14, 1
      %s158 = smul.addr %s157, 9
      %s159 = smul.addr %s158, 4
      %s160 = scalar_lea.vmem %s3, %s159
      %p161 = scmp.lt.s32.totalorder %s14, 1
      %s162 = scalar_select %p161, %s14, 1
      %s163 = smul.addr %s162, 48
      %s164 = smul.addr %s163, 4
      %s165 = scalar_lea.vmem %s0, %s164
      %p166 = scmp.lt.s32.totalorder %s14, 1
      %s167 = scalar_select %p166, %s14, 1
      %s168 = smul.addr %s167, 9
      %s169 = smul.addr %s168, 4
      %s170 = scalar_lea.vmem %s3, %s169
      %v172 = vld [vmem:[%s165] sm:$0xf]
      %v173 = vld [vmem:[%s165 + $0x4] sm:$0xf]
      %v174 = vld [vmem:[%s165 + $0x8] sm:$0xf]
      %v175 = vld [vmem:[%s165 + $0xc] sm:$0xf]
      %v176 = vld [vmem:[%s165 + $0x10] sm:$0xf]
      %v177 = vld [vmem:[%s165 + $0x14] sm:$0xf]
      %v178 = vld [vmem:[%s165 + $0x18] sm:$0xf]
      %v179 = vld [vmem:[%s165 + $0x1c] sm:$0xf]
      %v180 = vld [vmem:[%s165 + $0x20] sm:$0xf]
      %v181 = vld [vmem:[%s165 + $0x24] sm:$0xf]
      %v182 = vld [vmem:[%s165 + $0x28] sm:$0xf]
      %s183 = scalar_lea.vmem %s165, 48
      %v184 = vld [vmem:[%s183] sm:$0xf]
      %v185 = vld [vmem:[%s183 + $0x4] sm:$0xf]
      %v186 = vld [vmem:[%s183 + $0x8] sm:$0xf]
      %v187 = vld [vmem:[%s183 + $0xc] sm:$0xf]
      %v188 = vld [vmem:[%s183 + $0x10] sm:$0xf]
      %v189 = vld [vmem:[%s183 + $0x14] sm:$0xf]
      %v190 = vld [vmem:[%s183 + $0x18] sm:$0xf]
      %v191 = vld [vmem:[%s183 + $0x1c] sm:$0xf]
      %v192 = vld [vmem:[%s183 + $0x20] sm:$0xf]
      %v193 = vld [vmem:[%s183 + $0x24] sm:$0xf]
      %v194 = vld [vmem:[%s183 + $0x28] sm:$0xf]
      %s195 = scalar_lea.vmem %s165, 96
      %v196 = vld [vmem:[%s195] sm:$0xf]
      %v197 = vld [vmem:[%s195 + $0x4] sm:$0xf]
      %v198 = vld [vmem:[%s195 + $0x8] sm:$0xf]
      %v199 = vld [vmem:[%s195 + $0xc] sm:$0xf]
      %v200 = vld [vmem:[%s195 + $0x10] sm:$0xf]
      %v201 = vld [vmem:[%s195 + $0x14] sm:$0xf]
      %v202 = vld [vmem:[%s195 + $0x18] sm:$0xf]
      %v203 = vld [vmem:[%s195 + $0x1c] sm:$0xf]
      %v204 = vld [vmem:[%s195 + $0x20] sm:$0xf]
      %v205 = vld [vmem:[%s195 + $0x24] sm:$0xf]
      %s206 = scalar_lea.vmem %s165, 144
      %v207 = vld [vmem:[%s206] sm:$0xf]
      %v208 = vld [vmem:[%s206 + $0x4] sm:$0xf]
      %v209 = vld [vmem:[%s206 + $0x8] sm:$0xf]
      %v210 = vld [vmem:[%s206 + $0xc] sm:$0xf]
      %v211 = vld [vmem:[%s206 + $0x10] sm:$0xf]
      %v212 = vld [vmem:[%s206 + $0x14] sm:$0xf]
      %v213 = vld [vmem:[%s206 + $0x18] sm:$0xf]
      %v214 = vld [vmem:[%s206 + $0x1c] sm:$0xf]
      %v215 = vld [vmem:[%s206 + $0x20] sm:$0xf]
      %v216 = vld [vmem:[%s1] sm:$0x3]
      %s217 = scalar_lea.vmem %s1, 2
      %v218 = vld [vmem:[%s217] sm:$0x3]
      %v228 = vunpack.c.l.b16 %v184
      %v229 = vunpack.c.l.b16 %v185
      %v230 = vunpack.c.l.b16 %v186
      %v231 = vunpack.c.l.b16 %v187
      %v232 = vunpack.c.l.b16 %v188
      %v233 = vunpack.c.l.b16 %v189
      %v234 = vunpack.c.l.b16 %v190
      %v235 = vunpack.c.l.b16 %v191
      %v236 = vunpack.c.l.b16 %v192
      %v237 = vpack.c.b16 %v229, %v228
      %v238 = vpack.c.b16 %v231, %v230
      %v239 = vpack.c.b16 %v233, %v232
      %v240 = vpack.c.b16 %v235, %v234
      %v241 = vpack.c.b16 %v236, %v236
      %vm242 = vcmask 31744
      %v244 = vsel %vm242, %v237, 0
      %v247 = vsel %vm242, %v238, 0
      %v250 = vsel %vm242, %v239, 0
      %v253 = vsel %vm242, %v240, 0
      %v256 = vsel %vm242, %v241, 0
      %vm258 = vcmask 1041408
      %v260 = vsel %vm258, %v218, 0
      %262 = vmatpush.bf16.msra.mxu0 0
      %263 = vmatpush.bf16.msra.mxu0 0
      %264 = vmatpush.bf16.msra.mxu0 0
      %265 = vmatpush.bf16.msra.mxu0 0
      %266 = vmatpush.bf16.msra.mxu0 0
      %267 = vmatpush.bf16.msra.mxu0 0
      %268 = vmatpush.bf16.msra.mxu0 0
      %269 = vmatpush.bf16.msra.mxu0 %v260
      %270 = vmatmul.bf16.gmra.mxu0 %v244
      %v271 = vpop.f32.mrf.mxu0
      %v272 = vadd.f32 0.0, %v271
      %v273 = vpop.f32.mrf.mxu0
      %v274 = vadd.f32 0.0, %v273
      %275 = vmatmul.bf16.gmra.mxu0 %v247
      %v276 = vpop.f32.mrf.mxu0
      %v277 = vadd.f32 0.0, %v276
      %v278 = vpop.f32.mrf.mxu0
      %v279 = vadd.f32 0.0, %v278
      %280 = vmatmul.bf16.gmra.mxu0 %v250
      %v281 = vpop.f32.mrf.mxu0
      %v282 = vadd.f32 0.0, %v281
      %v283 = vpop.f32.mrf.mxu0
      %v284 = vadd.f32 0.0, %v283
      %285 = vmatmul.bf16.gmra.mxu0 %v253
      %v286 = vpop.f32.mrf.mxu0
      %v287 = vadd.f32 0.0, %v286
      %v288 = vpop.f32.mrf.mxu0
      %v289 = vadd.f32 0.0, %v288
      %290 = vmatmul.bf16.gmra.mxu0 %v256
      %v291 = vpop.f32.mrf.mxu0
      %v292 = vadd.f32 0.0, %v291
      %v293 = vpop.f32.mrf.mxu0
      %294 = vdwg.mxu0
      %v304 = vunpack.c.l.b16 %v172
      %v305 = vunpack.c.l.b16 %v173
      %v306 = vunpack.c.l.b16 %v174
      %v307 = vunpack.c.l.b16 %v175
      %v308 = vunpack.c.l.b16 %v176
      %v309 = vunpack.c.l.b16 %v177
      %v310 = vunpack.c.l.b16 %v178
      %v311 = vunpack.c.l.b16 %v179
      %v312 = vunpack.c.l.b16 %v180
      %v313 = vpack.c.b16 %v305, %v304
      %v314 = vpack.c.b16 %v307, %v306
      %v315 = vpack.c.b16 %v309, %v308
      %v316 = vpack.c.b16 %v311, %v310
      %v317 = vpack.c.b16 %v312, %v312
      %v319 = vsel %vm242, %v313, 0
      %v322 = vsel %vm242, %v314, 0
      %v325 = vsel %vm242, %v315, 0
      %v328 = vsel %vm242, %v316, 0
      %v331 = vsel %vm242, %v317, 0
      %v334 = vsel %vm258, %v216, 0
      %336 = vmatpush.bf16.msra.mxu0 0
      %337 = vmatpush.bf16.msra.mxu0 0
      %338 = vmatpush.bf16.msra.mxu0 0
      %339 = vmatpush.bf16.msra.mxu0 0
      %340 = vmatpush.bf16.msra.mxu0 0
      %341 = vmatpush.bf16.msra.mxu0 0
      %342 = vmatpush.bf16.msra.mxu0 0
      %343 = vmatpush.bf16.msra.mxu0 %v334
      %344 = vmatmul.bf16.gmra.mxu0 %v319
      %v345 = vpop.f32.mrf.mxu0
      %v346 = vadd.f32 %v272, %v345
      %v347 = vpop.f32.mrf.mxu0
      %v348 = vadd.f32 %v274, %v347
      %349 = vmatmul.bf16.gmra.mxu0 %v322
      %v350 = vpop.f32.mrf.mxu0
      %v351 = vadd.f32 %v277, %v350
      %v352 = vpop.f32.mrf.mxu0
      %v353 = vadd.f32 %v279, %v352
      %354 = vmatmul.bf16.gmra.mxu0 %v325
      %v355 = vpop.f32.mrf.mxu0
      %v356 = vadd.f32 %v282, %v355
      %v357 = vpop.f32.mrf.mxu0
      %v358 = vadd.f32 %v284, %v357
      %359 = vmatmul.bf16.gmra.mxu0 %v328
      %v360 = vpop.f32.mrf.mxu0
      %v361 = vadd.f32 %v287, %v360
      %v362 = vpop.f32.mrf.mxu0
      %v363 = vadd.f32 %v289, %v362
      %364 = vmatmul.bf16.gmra.mxu0 %v331
      %v365 = vpop.f32.mrf.mxu0
      %v366 = vadd.f32 %v292, %v365
      %v367 = vpop.f32.mrf.mxu0
      %368 = vdwg.mxu0
      %s369 = scalar_lea.vmem %s1, 4
      %v370 = vld [vmem:[%s369] sm:$0x3]
      %v372 = vunpack.c.l.b16 %v181
      %v373 = vpack.c.b16 %v372, %v312
      %vm374 = vsmask.f32 7424
      %v375 = vshrl.u32 %v313, 16
      %v377 = vshll.u32 %v313, 16
      %v379 = vrot.slane %v377, 1
      %v380 = vor.u32 %v375, %v379
      %v381 = vshll.u32 %v314, 16
      %v383 = vrot.slane %v381, 1
      %v384 = vsel %vm374, %v380, %v383
      %v385 = vshrl.u32 %v314, 16
      %v387 = vor.u32 %v385, %v383
      %v388 = vshll.u32 %v315, 16
      %v390 = vrot.slane %v388, 1
      %v391 = vsel %vm374, %v387, %v390
      %v392 = vshrl.u32 %v315, 16
      %v394 = vor.u32 %v392, %v390
      %v395 = vshll.u32 %v316, 16
      %v397 = vrot.slane %v395, 1
      %v398 = vsel %vm374, %v394, %v397
      %v399 = vshrl.u32 %v316, 16
      %v401 = vor.u32 %v399, %v397
      %v403 = vshll.u32 %v373, 16
      %v405 = vrot.slane %v403, 1
      %v406 = vsel %vm374, %v401, %v405
      %v407 = vshrl.u32 %v373, 16
      %v409 = vor.u32 %v407, %v405
      %v411 = vsel %vm242, %v384, 0
      %v414 = vsel %vm242, %v391, 0
      %v417 = vsel %vm242, %v398, 0
      %v420 = vsel %vm242, %v406, 0
      %v423 = vsel %vm242, %v409, 0
      %v426 = vsel %vm258, %v370, 0
      %428 = vmatpush.bf16.msra.mxu0 0
      %429 = vmatpush.bf16.msra.mxu0 0
      %430 = vmatpush.bf16.msra.mxu0 0
      %431 = vmatpush.bf16.msra.mxu0 0
      %432 = vmatpush.bf16.msra.mxu0 0
      %433 = vmatpush.bf16.msra.mxu0 0
      %434 = vmatpush.bf16.msra.mxu0 0
      %435 = vmatpush.bf16.msra.mxu0 %v426
      %436 = vmatmul.bf16.gmra.mxu0 %v411
      %v437 = vpop.f32.mrf.mxu0
      %v438 = vadd.f32 0.0, %v437
      %v439 = vpop.f32.mrf.mxu0
      %v440 = vadd.f32 0.0, %v439
      %441 = vmatmul.bf16.gmra.mxu0 %v414
      %v442 = vpop.f32.mrf.mxu0
      %v443 = vadd.f32 0.0, %v442
      %v444 = vpop.f32.mrf.mxu0
      %v445 = vadd.f32 0.0, %v444
      %446 = vmatmul.bf16.gmra.mxu0 %v417
      %v447 = vpop.f32.mrf.mxu0
      %v448 = vadd.f32 0.0, %v447
      %v449 = vpop.f32.mrf.mxu0
      %v450 = vadd.f32 0.0, %v449
      %451 = vmatmul.bf16.gmra.mxu0 %v420
      %v452 = vpop.f32.mrf.mxu0
      %v453 = vadd.f32 0.0, %v452
      %v454 = vpop.f32.mrf.mxu0
      %v455 = vadd.f32 0.0, %v454
      %456 = vmatmul.bf16.gmra.mxu0 %v423
      %v457 = vpop.f32.mrf.mxu0
      %v458 = vadd.f32 0.0, %v457
      %v459 = vpop.f32.mrf.mxu0
      %460 = vdwg.mxu0
      %v461 = vadd.f32 %v346, %v438
      %v462 = vadd.f32 %v348, %v440
      %v463 = vadd.f32 %v351, %v443
      %v464 = vadd.f32 %v353, %v445
      %v465 = vadd.f32 %v356, %v448
      %v466 = vadd.f32 %v358, %v450
      %v467 = vadd.f32 %v361, %v453
      %v468 = vadd.f32 %v363, %v455
      %v469 = vadd.f32 %v366, %v458
      %s470 = scalar_lea.vmem %s1, 6
      %v471 = vld [vmem:[%s470] sm:$0x3]
      %v481 = vunpack.c.l.b16 %v196
      %v482 = vunpack.c.l.b16 %v197
      %v483 = vunpack.c.l.b16 %v198
      %v484 = vunpack.c.l.b16 %v199
      %v485 = vunpack.c.l.b16 %v200
      %v486 = vunpack.c.l.b16 %v201
      %v487 = vunpack.c.l.b16 %v202
      %v488 = vunpack.c.l.b16 %v203
      %v489 = vunpack.c.l.b16 %v204
      %v490 = vpack.c.b16 %v482, %v481
      %v491 = vpack.c.b16 %v484, %v483
      %v492 = vpack.c.b16 %v486, %v485
      %v493 = vpack.c.b16 %v488, %v487
      %v494 = vpack.c.b16 %v489, %v489
      %v496 = vsel %vm242, %v490, 0
      %v499 = vsel %vm242, %v491, 0
      %v502 = vsel %vm242, %v492, 0
      %v505 = vsel %vm242, %v493, 0
      %v508 = vsel %vm242, %v494, 0
      %v511 = vsel %vm258, %v471, 0
      %513 = vmatpush.bf16.msra.mxu0 0
      %514 = vmatpush.bf16.msra.mxu0 0
      %515 = vmatpush.bf16.msra.mxu0 0
      %516 = vmatpush.bf16.msra.mxu0 0
      %517 = vmatpush.bf16.msra.mxu0 0
      %518 = vmatpush.bf16.msra.mxu0 0
      %519 = vmatpush.bf16.msra.mxu0 0
      %520 = vmatpush.bf16.msra.mxu0 %v511
      %521 = vmatmul.bf16.gmra.mxu0 %v496
      %v522 = vpop.f32.mrf.mxu0
      %v523 = vadd.f32 0.0, %v522
      %v524 = vpop.f32.mrf.mxu0
      %v525 = vadd.f32 0.0, %v524
      %526 = vmatmul.bf16.gmra.mxu0 %v499
      %v527 = vpop.f32.mrf.mxu0
      %v528 = vadd.f32 0.0, %v527
      %v529 = vpop.f32.mrf.mxu0
      %v530 = vadd.f32 0.0, %v529
      %531 = vmatmul.bf16.gmra.mxu0 %v502
      %v532 = vpop.f32.mrf.mxu0
      %v533 = vadd.f32 0.0, %v532
      %v534 = vpop.f32.mrf.mxu0
      %v535 = vadd.f32 0.0, %v534
      %536 = vmatmul.bf16.gmra.mxu0 %v505
      %v537 = vpop.f32.mrf.mxu0
      %v538 = vadd.f32 0.0, %v537
      %v539 = vpop.f32.mrf.mxu0
      %v540 = vadd.f32 0.0, %v539
      %541 = vmatmul.bf16.gmra.mxu0 %v508
      %v542 = vpop.f32.mrf.mxu0
      %v543 = vadd.f32 0.0, %v542
      %v544 = vpop.f32.mrf.mxu0
      %545 = vdwg.mxu0
      %v546 = vadd.f32 %v461, %v523
      %v547 = vadd.f32 %v462, %v525
      %v548 = vadd.f32 %v463, %v528
      %v549 = vadd.f32 %v464, %v530
      %v550 = vadd.f32 %v465, %v533
      %v551 = vadd.f32 %v466, %v535
      %v552 = vadd.f32 %v467, %v538
      %v553 = vadd.f32 %v468, %v540
      %v554 = vadd.f32 %v469, %v543
      %s555 = scalar_lea.vmem %s1, 8
      %v556 = vld [vmem:[%s555] sm:$0x3]
      %v566 = vunpack.c.l.b16 %v207
      %v567 = vunpack.c.l.b16 %v208
      %v568 = vunpack.c.l.b16 %v209
      %v569 = vunpack.c.l.b16 %v210
      %v570 = vunpack.c.l.b16 %v211
      %v571 = vunpack.c.l.b16 %v212
      %v572 = vunpack.c.l.b16 %v213
      %v573 = vunpack.c.l.b16 %v214
      %v574 = vunpack.c.l.b16 %v215
      %v575 = vpack.c.b16 %v567, %v566
      %v576 = vpack.c.b16 %v569, %v568
      %v577 = vpack.c.b16 %v571, %v570
      %v578 = vpack.c.b16 %v573, %v572
      %v579 = vpack.c.b16 %v574, %v574
      %v581 = vsel %vm242, %v575, 0
      %v584 = vsel %vm242, %v576, 0
      %v587 = vsel %vm242, %v577, 0
      %v590 = vsel %vm242, %v578, 0
      %v593 = vsel %vm242, %v579, 0
      %v596 = vsel %vm258, %v556, 0
      %598 = vmatpush.bf16.msra.mxu0 0
      %599 = vmatpush.bf16.msra.mxu0 0
      %600 = vmatpush.bf16.msra.mxu0 0
      %601 = vmatpush.bf16.msra.mxu0 0
      %602 = vmatpush.bf16.msra.mxu0 0
      %603 = vmatpush.bf16.msra.mxu0 0
      %604 = vmatpush.bf16.msra.mxu0 0
      %605 = vmatpush.bf16.msra.mxu0 %v596
      %606 = vmatmul.bf16.gmra.mxu0 %v581
      %v607 = vpop.f32.mrf.mxu0
      %v608 = vadd.f32 0.0, %v607
      %v609 = vpop.f32.mrf.mxu0
      %v610 = vadd.f32 0.0, %v609
      %611 = vmatmul.bf16.gmra.mxu0 %v584
      %v612 = vpop.f32.mrf.mxu0
      %v613 = vadd.f32 0.0, %v612
      %v614 = vpop.f32.mrf.mxu0
      %v615 = vadd.f32 0.0, %v614
      %616 = vmatmul.bf16.gmra.mxu0 %v587
      %v617 = vpop.f32.mrf.mxu0
      %v618 = vadd.f32 0.0, %v617
      %v619 = vpop.f32.mrf.mxu0
      %v620 = vadd.f32 0.0, %v619
      %621 = vmatmul.bf16.gmra.mxu0 %v590
      %v622 = vpop.f32.mrf.mxu0
      %v623 = vadd.f32 0.0, %v622
      %v624 = vpop.f32.mrf.mxu0
      %v625 = vadd.f32 0.0, %v624
      %626 = vmatmul.bf16.gmra.mxu0 %v593
      %v627 = vpop.f32.mrf.mxu0
      %v628 = vadd.f32 0.0, %v627
      %v629 = vpop.f32.mrf.mxu0
      %630 = vdwg.mxu0
      %v631 = vadd.f32 %v546, %v608
      %v632 = vadd.f32 %v547, %v610
      %v633 = vadd.f32 %v548, %v613
      %v634 = vadd.f32 %v549, %v615
      %v635 = vadd.f32 %v550, %v618
      %v636 = vadd.f32 %v551, %v620
      %v637 = vadd.f32 %v552, %v623
      %v638 = vadd.f32 %v553, %v625
      %v639 = vadd.f32 %v554, %v628
      %s640 = scalar_lea.vmem %s1, 10
      %v641 = vld [vmem:[%s640] sm:$0x3]
      %v643 = vunpack.c.l.b16 %v205
      %v644 = vpack.c.b16 %v643, %v489
      %v645 = vshrl.u32 %v490, 16
      %v647 = vshll.u32 %v490, 16
      %v649 = vrot.slane %v647, 1
      %v650 = vor.u32 %v645, %v649
      %v651 = vshll.u32 %v491, 16
      %v653 = vrot.slane %v651, 1
      %v654 = vsel %vm374, %v650, %v653
      %v655 = vshrl.u32 %v491, 16
      %v657 = vor.u32 %v655, %v653
      %v658 = vshll.u32 %v492, 16
      %v660 = vrot.slane %v658, 1
      %v661 = vsel %vm374, %v657, %v660
      %v662 = vshrl.u32 %v492, 16
      %v664 = vor.u32 %v662, %v660
      %v665 = vshll.u32 %v493, 16
      %v667 = vrot.slane %v665, 1
      %v668 = vsel %vm374, %v664, %v667
      %v669 = vshrl.u32 %v493, 16
      %v671 = vor.u32 %v669, %v667
      %v673 = vshll.u32 %v644, 16
      %v675 = vrot.slane %v673, 1
      %v676 = vsel %vm374, %v671, %v675
      %v677 = vshrl.u32 %v644, 16
      %v679 = vor.u32 %v677, %v675
      %v681 = vsel %vm242, %v654, 0
      %v684 = vsel %vm242, %v661, 0
      %v687 = vsel %vm242, %v668, 0
      %v690 = vsel %vm242, %v676, 0
      %v693 = vsel %vm242, %v679, 0
      %v696 = vsel %vm258, %v641, 0
      %698 = vmatpush.bf16.msra.mxu0 0
      %699 = vmatpush.bf16.msra.mxu0 0
      %700 = vmatpush.bf16.msra.mxu0 0
      %701 = vmatpush.bf16.msra.mxu0 0
      %702 = vmatpush.bf16.msra.mxu0 0
      %703 = vmatpush.bf16.msra.mxu0 0
      %704 = vmatpush.bf16.msra.mxu0 0
      %705 = vmatpush.bf16.msra.mxu0 %v696
      %706 = vmatmul.bf16.gmra.mxu0 %v681
      %v707 = vpop.f32.mrf.mxu0
      %v708 = vadd.f32 0.0, %v707
      %v709 = vpop.f32.mrf.mxu0
      %v710 = vadd.f32 0.0, %v709
      %711 = vmatmul.bf16.gmra.mxu0 %v684
      %v712 = vpop.f32.mrf.mxu0
      %v713 = vadd.f32 0.0, %v712
      %v714 = vpop.f32.mrf.mxu0
      %v715 = vadd.f32 0.0, %v714
      %716 = vmatmul.bf16.gmra.mxu0 %v687
      %v717 = vpop.f32.mrf.mxu0
      %v718 = vadd.f32 0.0, %v717
      %v719 = vpop.f32.mrf.mxu0
      %v720 = vadd.f32 0.0, %v719
      %721 = vmatmul.bf16.gmra.mxu0 %v690
      %v722 = vpop.f32.mrf.mxu0
      %v723 = vadd.f32 0.0, %v722
      %v724 = vpop.f32.mrf.mxu0
      %v725 = vadd.f32 0.0, %v724
      %726 = vmatmul.bf16.gmra.mxu0 %v693
      %v727 = vpop.f32.mrf.mxu0
      %v728 = vadd.f32 0.0, %v727
      %v729 = vpop.f32.mrf.mxu0
      %730 = vdwg.mxu0
      %v731 = vadd.f32 %v631, %v708
      %v732 = vadd.f32 %v632, %v710
      %v733 = vadd.f32 %v633, %v713
      %v734 = vadd.f32 %v634, %v715
      %v735 = vadd.f32 %v635, %v718
      %v736 = vadd.f32 %v636, %v720
      %v737 = vadd.f32 %v637, %v723
      %v738 = vadd.f32 %v638, %v725
      %v739 = vadd.f32 %v639, %v728
      %s740 = scalar_lea.vmem %s1, 12
      %v741 = vld [vmem:[%s740] sm:$0x3]
      %v743 = vunpack.c.l.b16 %v182
      %v744 = vpack.c.b16 %v306, %v305
      %v745 = vpack.c.b16 %v308, %v307
      %v746 = vpack.c.b16 %v310, %v309
      %v747 = vpack.c.b16 %v312, %v311
      %v748 = vpack.c.b16 %v743, %v372
      %v750 = vshrl.u32 %v744, 16
      %v752 = vshll.u32 %v744, 16
      %v754 = vrot.slane %v752, 1
      %v755 = vor.u32 %v750, %v754
      %v757 = vshll.u32 %v745, 16
      %v759 = vrot.slane %v757, 1
      %v760 = vsel %vm374, %v755, %v759
      %v761 = vshrl.u32 %v745, 16
      %v763 = vor.u32 %v761, %v759
      %v765 = vshll.u32 %v746, 16
      %v767 = vrot.slane %v765, 1
      %v768 = vsel %vm374, %v763, %v767
      %v769 = vshrl.u32 %v746, 16
      %v771 = vor.u32 %v769, %v767
      %v773 = vshll.u32 %v747, 16
      %v775 = vrot.slane %v773, 1
      %v776 = vsel %vm374, %v771, %v775
      %v777 = vshrl.u32 %v747, 16
      %v779 = vor.u32 %v777, %v775
      %v781 = vshll.u32 %v748, 16
      %v783 = vrot.slane %v781, 1
      %v784 = vsel %vm374, %v779, %v783
      %v785 = vshrl.u32 %v748, 16
      %v787 = vor.u32 %v785, %v783
      %v789 = vsel %vm242, %v760, 0
      %v792 = vsel %vm242, %v768, 0
      %v795 = vsel %vm242, %v776, 0
      %v798 = vsel %vm242, %v784, 0
      %v801 = vsel %vm242, %v787, 0
      %v804 = vsel %vm258, %v741, 0
      %806 = vmatpush.bf16.msra.mxu0 0
      %807 = vmatpush.bf16.msra.mxu0 0
      %808 = vmatpush.bf16.msra.mxu0 0
      %809 = vmatpush.bf16.msra.mxu0 0
      %810 = vmatpush.bf16.msra.mxu0 0
      %811 = vmatpush.bf16.msra.mxu0 0
      %812 = vmatpush.bf16.msra.mxu0 0
      %813 = vmatpush.bf16.msra.mxu0 %v804
      %814 = vmatmul.bf16.gmra.mxu0 %v789
      %v815 = vpop.f32.mrf.mxu0
      %v816 = vadd.f32 0.0, %v815
      %v817 = vpop.f32.mrf.mxu0
      %v818 = vadd.f32 0.0, %v817
      %819 = vmatmul.bf16.gmra.mxu0 %v792
      %v820 = vpop.f32.mrf.mxu0
      %v821 = vadd.f32 0.0, %v820
      %v822 = vpop.f32.mrf.mxu0
      %v823 = vadd.f32 0.0, %v822
      %824 = vmatmul.bf16.gmra.mxu0 %v795
      %v825 = vpop.f32.mrf.mxu0
      %v826 = vadd.f32 0.0, %v825
      %v827 = vpop.f32.mrf.mxu0
      %v828 = vadd.f32 0.0, %v827
      %829 = vmatmul.bf16.gmra.mxu0 %v798
      %v830 = vpop.f32.mrf.mxu0
      %v831 = vadd.f32 0.0, %v830
      %v832 = vpop.f32.mrf.mxu0
      %v833 = vadd.f32 0.0, %v832
      %834 = vmatmul.bf16.gmra.mxu0 %v801
      %v835 = vpop.f32.mrf.mxu0
      %v836 = vadd.f32 0.0, %v835
      %v837 = vpop.f32.mrf.mxu0
      %838 = vdwg.mxu0
      %v839 = vadd.f32 %v731, %v816
      %v840 = vadd.f32 %v732, %v818
      %v841 = vadd.f32 %v733, %v821
      %v842 = vadd.f32 %v734, %v823
      %v843 = vadd.f32 %v735, %v826
      %v844 = vadd.f32 %v736, %v828
      %v845 = vadd.f32 %v737, %v831
      %v846 = vadd.f32 %v738, %v833
      %v847 = vadd.f32 %v739, %v836
      %s848 = scalar_lea.vmem %s1, 14
      %v849 = vld [vmem:[%s848] sm:$0x3]
      %v852 = vunpack.c.l.b16 %v193
      %v853 = vunpack.c.l.b16 %v194
      %v854 = vpack.c.b16 %v230, %v229
      %v855 = vpack.c.b16 %v232, %v231
      %v856 = vpack.c.b16 %v234, %v233
      %v857 = vpack.c.b16 %v236, %v235
      %v858 = vpack.c.b16 %v853, %v852
      %v860 = vshrl.u32 %v854, 16
      %v862 = vshll.u32 %v854, 16
      %v864 = vrot.slane %v862, 1
      %v865 = vor.u32 %v860, %v864
      %v867 = vshll.u32 %v855, 16
      %v869 = vrot.slane %v867, 1
      %v870 = vsel %vm374, %v865, %v869
      %v871 = vshrl.u32 %v855, 16
      %v873 = vor.u32 %v871, %v869
      %v875 = vshll.u32 %v856, 16
      %v877 = vrot.slane %v875, 1
      %v878 = vsel %vm374, %v873, %v877
      %v879 = vshrl.u32 %v856, 16
      %v881 = vor.u32 %v879, %v877
      %v883 = vshll.u32 %v857, 16
      %v885 = vrot.slane %v883, 1
      %v886 = vsel %vm374, %v881, %v885
      %v887 = vshrl.u32 %v857, 16
      %v889 = vor.u32 %v887, %v885
      %v891 = vshll.u32 %v858, 16
      %v893 = vrot.slane %v891, 1
      %v894 = vsel %vm374, %v889, %v893
      %v895 = vshrl.u32 %v858, 16
      %v897 = vor.u32 %v895, %v893
      %v899 = vsel %vm242, %v870, 0
      %v902 = vsel %vm242, %v878, 0
      %v905 = vsel %vm242, %v886, 0
      %v908 = vsel %vm242, %v894, 0
      %v911 = vsel %vm242, %v897, 0
      %v914 = vsel %vm258, %v849, 0
      %916 = vmatpush.bf16.msra.mxu0 0
      %917 = vmatpush.bf16.msra.mxu0 0
      %918 = vmatpush.bf16.msra.mxu0 0
      %919 = vmatpush.bf16.msra.mxu0 0
      %920 = vmatpush.bf16.msra.mxu0 0
      %921 = vmatpush.bf16.msra.mxu0 0
      %922 = vmatpush.bf16.msra.mxu0 0
      %923 = vmatpush.bf16.msra.mxu0 %v914
      %924 = vmatmul.bf16.gmra.mxu0 %v899
      %v925 = vpop.f32.mrf.mxu0
      %v926 = vadd.f32 0.0, %v925
      %v927 = vpop.f32.mrf.mxu0
      %v928 = vadd.f32 0.0, %v927
      %929 = vmatmul.bf16.gmra.mxu0 %v902
      %v930 = vpop.f32.mrf.mxu0
      %v931 = vadd.f32 0.0, %v930
      %v932 = vpop.f32.mrf.mxu0
      %v933 = vadd.f32 0.0, %v932
      %934 = vmatmul.bf16.gmra.mxu0 %v905
      %v935 = vpop.f32.mrf.mxu0
      %v936 = vadd.f32 0.0, %v935
      %v937 = vpop.f32.mrf.mxu0
      %v938 = vadd.f32 0.0, %v937
      %939 = vmatmul.bf16.gmra.mxu0 %v908
      %v940 = vpop.f32.mrf.mxu0
      %v941 = vadd.f32 0.0, %v940
      %v942 = vpop.f32.mrf.mxu0
      %v943 = vadd.f32 0.0, %v942
      %944 = vmatmul.bf16.gmra.mxu0 %v911
      %v945 = vpop.f32.mrf.mxu0
      %v946 = vadd.f32 0.0, %v945
      %v947 = vpop.f32.mrf.mxu0
      %948 = vdwg.mxu0
      %v949 = vadd.f32 %v839, %v926
      %v950 = vadd.f32 %v840, %v928
      %v951 = vadd.f32 %v841, %v931
      %v952 = vadd.f32 %v842, %v933
      %v953 = vadd.f32 %v843, %v936
      %v954 = vadd.f32 %v844, %v938
      %v955 = vadd.f32 %v845, %v941
      %v956 = vadd.f32 %v846, %v943
      %v957 = vadd.f32 %v847, %v946
      %s958 = scalar_lea.vmem %s1, 16
      %v959 = vld [vmem:[%s958] sm:$0x3]
      %vm960 = vcmask 1046528
      %v961 = vrot.slane %v744, 1
      %v962 = vrot.slane %v745, 1
      %v963 = vsel %vm960, %v961, %v962
      %v964 = vrot.slane %v746, 1
      %v965 = vsel %vm960, %v962, %v964
      %v966 = vrot.slane %v747, 1
      %v967 = vsel %vm960, %v964, %v966
      %v968 = vrot.slane %v748, 1
      %v969 = vsel %vm960, %v966, %v968
      %v971 = vsel %vm242, %v963, 0
      %v974 = vsel %vm242, %v965, 0
      %v977 = vsel %vm242, %v967, 0
      %v980 = vsel %vm242, %v969, 0
      %v983 = vsel %vm242, %v968, 0
      %v986 = vsel %vm258, %v959, 0
      %988 = vmatpush.bf16.msra.mxu0 0
      %989 = vmatpush.bf16.msra.mxu0 0
      %990 = vmatpush.bf16.msra.mxu0 0
      %991 = vmatpush.bf16.msra.mxu0 0
      %992 = vmatpush.bf16.msra.mxu0 0
      %993 = vmatpush.bf16.msra.mxu0 0
      %994 = vmatpush.bf16.msra.mxu0 0
      %995 = vmatpush.bf16.msra.mxu0 %v986
      %996 = vmatmul.bf16.gmra.mxu0 %v971
      %v997 = vpop.f32.mrf.mxu0
      %v998 = vadd.f32 0.0, %v997
      %v999 = vpop.f32.mrf.mxu0
      %v1000 = vadd.f32 0.0, %v999
      %1001 = vmatmul.bf16.gmra.mxu0 %v974
      %v1002 = vpop.f32.mrf.mxu0
      %v1003 = vadd.f32 0.0, %v1002
      %v1004 = vpop.f32.mrf.mxu0
      %v1005 = vadd.f32 0.0, %v1004
      %1006 = vmatmul.bf16.gmra.mxu0 %v977
      %v1007 = vpop.f32.mrf.mxu0
      %v1008 = vadd.f32 0.0, %v1007
      %v1009 = vpop.f32.mrf.mxu0
      %v1010 = vadd.f32 0.0, %v1009
      %1011 = vmatmul.bf16.gmra.mxu0 %v980
      %v1012 = vpop.f32.mrf.mxu0
      %v1013 = vadd.f32 0.0, %v1012
      %v1014 = vpop.f32.mrf.mxu0
      %v1015 = vadd.f32 0.0, %v1014
      %1016 = vmatmul.bf16.gmra.mxu0 %v983
      %v1017 = vpop.f32.mrf.mxu0
      %v1018 = vadd.f32 0.0, %v1017
      %v1019 = vpop.f32.mrf.mxu0
      %1020 = vdwg.mxu0
      %v1021 = vadd.f32 %v949, %v998
      %v1022 = vadd.f32 %v950, %v1000
      %v1023 = vadd.f32 %v951, %v1003
      %v1024 = vadd.f32 %v952, %v1005
      %v1025 = vadd.f32 %v953, %v1008
      %v1026 = vadd.f32 %v954, %v1010
      %v1027 = vadd.f32 %v955, %v1013
      %v1028 = vadd.f32 %v956, %v1015
      %v1029 = vadd.f32 %v957, %v1018
      %v1030 = vld [vmem:[%s2] sm:$0x1]
      %v1032 = vperm.slane %v1030, 0
      %v1034 = vadd.f32 %v1021, %v1032
      %v1035 = vadd.f32 %v1022, %v1032
      %v1036 = vadd.f32 %v1023, %v1032
      %v1037 = vadd.f32 %v1024, %v1032
      %v1038 = vadd.f32 %v1025, %v1032
      %v1039 = vadd.f32 %v1026, %v1032
      %v1040 = vadd.f32 %v1027, %v1032
      %v1041 = vadd.f32 %v1028, %v1032
      %v1042 = vadd.f32 %v1029, %v1032
      %v1043 = vmin.f32 %v1034, 20.0
      %v1044 = vmin.f32 %v1035, 20.0
      %v1045 = vmin.f32 %v1036, 20.0
      %v1046 = vmin.f32 %v1037, 20.0
      %v1047 = vmin.f32 %v1038, 20.0
      %v1048 = vmin.f32 %v1039, 20.0
      %v1049 = vmin.f32 %v1040, 20.0
      %v1050 = vmin.f32 %v1041, 20.0
      %v1051 = vmin.f32 %v1042, 20.0
      %v1052 = vmul.f32 %v1043, 1.442695
      %v1053 = vpow.pop %v1052
      %v1054 = vmul.f32 %v1044, 1.442695
      %v1055 = vpow.pop %v1054
      %v1056 = vmul.f32 %v1045, 1.442695
      %v1057 = vpow.pop %v1056
      %v1058 = vmul.f32 %v1046, 1.442695
      %v1059 = vpow.pop %v1058
      %v1060 = vmul.f32 %v1047, 1.442695
      %v1061 = vpow.pop %v1060
      %v1062 = vmul.f32 %v1048, 1.442695
      %v1063 = vpow.pop %v1062
      %v1064 = vmul.f32 %v1049, 1.442695
      %v1065 = vpow.pop %v1064
      %v1066 = vmul.f32 %v1050, 1.442695
      %v1067 = vpow.pop %v1066
      %v1068 = vmul.f32 %v1051, 1.442695
      %v1069 = vpow.pop %v1068
      %v1070 = vadd.f32 %v1053, 2.0
      %v1071 = vadd.f32 %v1055, 2.0
      %v1072 = vadd.f32 %v1057, 2.0
      %v1073 = vadd.f32 %v1059, 2.0
      %v1074 = vadd.f32 %v1061, 2.0
      %v1075 = vadd.f32 %v1063, 2.0
      %v1076 = vadd.f32 %v1065, 2.0
      %v1077 = vadd.f32 %v1067, 2.0
      %v1078 = vadd.f32 %v1069, 2.0
      %v1079 = vmul.f32 %v1053, %v1070
      %v1080 = vmul.f32 %v1055, %v1071
      %v1081 = vmul.f32 %v1057, %v1072
      %v1082 = vmul.f32 %v1059, %v1073
      %v1083 = vmul.f32 %v1061, %v1074
      %v1084 = vmul.f32 %v1063, %v1075
      %v1085 = vmul.f32 %v1065, %v1076
      %v1086 = vmul.f32 %v1067, %v1077
      %v1087 = vmul.f32 %v1069, %v1078
      %v1088 = vadd.f32 %v1079, 2.0
      %v1089 = vadd.f32 %v1080, 2.0
      %v1090 = vadd.f32 %v1081, 2.0
      %v1091 = vadd.f32 %v1082, 2.0
      %v1092 = vadd.f32 %v1083, 2.0
      %v1093 = vadd.f32 %v1084, 2.0
      %v1094 = vadd.f32 %v1085, 2.0
      %v1095 = vadd.f32 %v1086, 2.0
      %v1096 = vadd.f32 %v1087, 2.0
      %v1097 = vrcp.pop %v1088
      %v1098 = vrcp.pop %v1089
      %v1099 = vrcp.pop %v1090
      %v1100 = vrcp.pop %v1091
      %v1101 = vrcp.pop %v1092
      %v1102 = vrcp.pop %v1093
      %v1103 = vrcp.pop %v1094
      %v1104 = vrcp.pop %v1095
      %v1105 = vrcp.pop %v1096
      %v1106 = vmul.f32 %v1079, %v1097
      %v1107 = vmul.f32 %v1080, %v1098
      %v1108 = vmul.f32 %v1081, %v1099
      %v1109 = vmul.f32 %v1082, %v1100
      %v1110 = vmul.f32 %v1083, %v1101
      %v1111 = vmul.f32 %v1084, %v1102
      %v1112 = vmul.f32 %v1085, %v1103
      %v1113 = vmul.f32 %v1086, %v1104
      %v1114 = vmul.f32 %v1087, %v1105
      %v1115 = vmul.f32 %v1034, %v1106
      %v1116 = vmul.f32 %v1035, %v1107
      %v1117 = vmul.f32 %v1036, %v1108
      %v1118 = vmul.f32 %v1037, %v1109
      %v1119 = vmul.f32 %v1038, %v1110
      %v1120 = vmul.f32 %v1039, %v1111
      %v1121 = vmul.f32 %v1040, %v1112
      %v1122 = vmul.f32 %v1041, %v1113
      %v1123 = vmul.f32 %v1042, %v1114
      %v1124 = vpack.c.bf16 %v1115, %v1115
      %v1125 = vpack.c.bf16 %v1116, %v1116
      %v1126 = vpack.c.bf16 %v1117, %v1117
      %v1127 = vpack.c.bf16 %v1118, %v1118
      %v1128 = vpack.c.bf16 %v1119, %v1119
      %v1129 = vpack.c.bf16 %v1120, %v1120
      %v1130 = vpack.c.bf16 %v1121, %v1121
      %v1131 = vpack.c.bf16 %v1122, %v1122
      %v1132 = vpack.c.bf16 %v1123, %v1123
      %vm1133 = vcmask 60416
      %1134 = vst.msk [vmem:[%s170] sm:$0xf] %vm1133, %v1124
      %1135 = vst.msk [vmem:[%s170 + $0x4] sm:$0xf] %vm1133, %v1125
      %1136 = vst.msk [vmem:[%s170 + $0x8] sm:$0xf] %vm1133, %v1126
      %1137 = vst.msk [vmem:[%s170 + $0xc] sm:$0xf] %vm1133, %v1127
      %1138 = vst.msk [vmem:[%s170 + $0x10] sm:$0xf] %vm1133, %v1128
      %1139 = vst.msk [vmem:[%s170 + $0x14] sm:$0xf] %vm1133, %v1129
      %1140 = vst.msk [vmem:[%s170 + $0x18] sm:$0xf] %vm1133, %v1130
      %1141 = vst.msk [vmem:[%s170 + $0x1c] sm:$0xf] %vm1133, %v1131
      %1142 = vst.msk [vmem:[%s170 + $0x20] sm:$0xf] %vm1133, %v1132
      %p1143 = scmp.lt.s32.totalorder %s14, 1
      %s1144 = scalar_select %p1143, %s14, 1
      %s1145 = smul.addr %s1144, 9
      %s1146 = smul.addr %s1145, 4
      %s1147 = scalar_lea.vmem %s3, %s1146
      // Predicated region
      $region33: #{resblock_body_forward.7} parent=31 // pred_check
        %p1148 = pneg %p100
      $region34: #{resblock_body_forward.7} parent=31 // pred_check_branch
        %1150 = sbr.rel (%p1148) target = $region36
      $region35: #{resblock_body_forward.7} parent=31 // pred_region
        _
      $region36: #{resblock_body_forward.7} parent=31 // pred_fallthru
        _
    $region32: #{resblock_body_forward.7} parent=5 // pred_fallthru
      _
    %p1151 = scmp.le.s32.totalorder 2, %s9
    // Predicated region
    $region37: #{resblock_body_forward.7} parent=5 // pred_check
      %p1152 = pneg %p1151
    $region38: #{resblock_body_forward.7} parent=5 // pred_check_branch
      %1154 = sbr.rel (%p1152) target = $region40
    $region39: #{resblock_body_forward.7} parent=5 // pred_region
      %s1155 = ssub.s32 %s9, 2
      // Predicated region
      $region41: #{resblock_body_forward.7} parent=39 // pred_check
        %p1156 = pneg %p106
      $region42: #{resblock_body_forward.7} parent=39 // pred_check_branch
        %1158 = sbr.rel (%p1156) target = $region44
      $region43: #{resblock_body_forward.7} parent=39 // pred_region
        %p1159 = scmp.lt.s32.totalorder %s15, 1
        %s1160 = scalar_select %p1159, %s15, 1
        %s1161 = smul.addr %s1160, 9
        %s1162 = smul.addr %s1161, 4
        %s1163 = scalar_lea.vmem %s3, %s1162
      $region44: #{resblock_body_forward.7} parent=39 // pred_fallthru
        _
    $region40: #{resblock_body_forward.7} parent=5 // pred_fallthru
      _
  $region6: #{resblock_body_forward.7} parent=0 // loop_footer
    %s13 = sadd.s32 1, %s9
  $region7: #{resblock_body_forward.7} parent=0 // loop_footer_branch
    %8 = sbr.rel target = $region3
  $region8: #{resblock_body_forward.7} parent=0 // loop_exit
    _

// kernel: resblock_body_forward.13
$region0: #{resblock_body_forward.13}
  #allocation0 [shape = 'u32[]', space=smem, size = 0x4, offset = 0x4, fixed_abs, tag = 'smem constant byte address 0x4 - core index']
  #allocation1 [shape = 'u32[72,128]{1,0:T(1,128)}', space=vmem, size = 0x9000, scoped, tag = 'internal scratch']
  %s0 = inlined_call_operand.vmem [shape: bf16[128,8], index: 0, kind: input, shape index: {}]
  %s1 = inlined_call_operand.vmem [shape: bf16[8,8], index: 1, kind: input, shape index: {}]
  %s2 = inlined_call_operand.vmem [shape: bf16[128,8], index: 2, kind: input, shape index: {}]
  %s3 = inlined_call_operand.vmem [shape: bf16[8,8], index: 3, kind: input, shape index: {}]
  %s4 = inlined_call_operand.vmem [shape: f32[1,8], index: 4, kind: input, shape index: {}]
  %s5 = inlined_call_operand.vmem [shape: f32[128,8], index: 5, kind: output, shape index: {}]
  %s6 = sld [smem:[#allocation0]]
  $region53: #{resblock_body_forward.13} parent=0
    _
  %s8 = ssub.s32 1, %s6
  %s9 = scalar_select 0, %s8, %s6
  loop: start=0, step=1, limit=4
  $region2: #{resblock_body_forward.13} parent=0 // loop_pre_header
    _
  $region3: #{resblock_body_forward.13} parent=0 // loop_header
    %s11 = sphi 0, %s15
    %p12 = scmp.ge.s32.totalorder %s11, 4
    %s21 = sphi 0, %s23
    %s24 = sphi 0, %s21
    %s25 = sphi 0, %s24
    %s41 = sphi 0, %s25
    %s45 = sphi 0, %s45
    %s47 = sphi 0, %s45
    %s48 = sphi 0, %s47
    %s62 = sphi 0, %s48
    %s68 = sphi 0, %s70
    %s71 = sphi 0, %s68
    %s72 = sphi 0, %s71
    %s88 = sphi 0, %s72
    %s92 = sphi 0, %s92
    %s94 = sphi 0, %s92
    %s95 = sphi 0, %s94
    %s109 = sphi 0, %s95
    %s113 = sphi 0, %s113
    %s115 = sphi 0, %s113
    %s116 = sphi 0, %s115
    %s130 = sphi 0, %s116
    %s136 = sphi 0, %s138
    %s139 = sphi 0, %s136
    %s140 = sphi 0, %s139
    %s156 = sphi 0, %s140
  $region4: #{resblock_body_forward.13} parent=0 // loop_header_branch
    %14 = sbr.rel (%p12) target = $region8
  $region5: #{resblock_body_forward.13} parent=0 // loop_body
    %s16 = ssub.s32 %s11, 1
    %s17 = ssub.s32 %s11, 2
    %s18 = sadd.s32 %s11, 1
    %s19 = ssub.s32 %s11, %s18
    %p20 = scmp.eq.s32.totalorder %s19, 0
    %s22 = sadd.s32 %s21, 1
    %s23 = scalar_select %p20, %s21, %s22
    %p26 = pneg %p20
    %p27 = scmp.eq.s32.totalorder %s11, 1
    %p28 = por %p26, %p27
    %p29 = scmp.ne.s32.totalorder %s21, %s24
    %p30 = scmp.eq.s32.totalorder %s11, 0
    %p31 = por %p29, %p30
    %p32 = scmp.ne.s32.totalorder %s21, %s24
    %p33 = scmp.eq.s32.totalorder %s16, 1
    %p34 = por %p32, %p33
    %p35 = scmp.ne.s32.totalorder %s24, %s25
    %p36 = scmp.eq.s32.totalorder %s16, 0
    %p37 = por %p35, %p36
    %p38 = scmp.ne.s32.totalorder %s24, %s25
    %p39 = scmp.eq.s32.totalorder %s17, 1
    %p40 = por %p38, %p39
    %p42 = scmp.ne.s32.totalorder %s25, %s41
    %p43 = scmp.eq.s32.totalorder %s17, 0
    %p44 = por %p42, %p43
    %s46 = sadd.s32 %s45, 1
    %p49 = scmp.eq.s32.totalorder %s11, 1
    %p50 = scmp.ne.s32.totalorder %s45, %s47
    %p51 = scmp.eq.s32.totalorder %s11, 0
    %p52 = por %p50, %p51
    %p53 = scmp.ne.s32.totalorder %s45, %s47
    %p54 = scmp.eq.s32.totalorder %s16, 1
    %p55 = por %p53, %p54
    %p56 = scmp.ne.s32.totalorder %s47, %s48
    %p57 = scmp.eq.s32.totalorder %s16, 0
    %p58 = por %p56, %p57
    %p59 = scmp.ne.s32.totalorder %s47, %s48
    %p60 = scmp.eq.s32.totalorder %s17, 1
    %p61 = por %p59, %p60
    %p63 = scmp.ne.s32.totalorder %s48, %s62
    %p64 = scmp.eq.s32.totalorder %s17, 0
    %p65 = por %p63, %p64
    %s66 = ssub.s32 %s11, %s18
    %p67 = scmp.eq.s32.totalorder %s66, 0
    %s69 = sadd.s32 %s68, 1
    %s70 = scalar_select %p67, %s68, %s69
    %p73 = pneg %p67
    %p74 = scmp.eq.s32.totalorder %s11, 1
    %p75 = por %p73, %p74
    %p76 = scmp.ne.s32.totalorder %s68, %s71
    %p77 = scmp.eq.s32.totalorder %s11, 0
    %p78 = por %p76, %p77
    %p79 = scmp.ne.s32.totalorder %s68, %s71
    %p80 = scmp.eq.s32.totalorder %s16, 1
    %p81 = por %p79, %p80
    %p82 = scmp.ne.s32.totalorder %s71, %s72
    %p83 = scmp.eq.s32.totalorder %s16, 0
    %p84 = por %p82, %p83
    %p85 = scmp.ne.s32.totalorder %s71, %s72
    %p86 = scmp.eq.s32.totalorder %s17, 1
    %p87 = por %p85, %p86
    %p89 = scmp.ne.s32.totalorder %s72, %s88
    %p90 = scmp.eq.s32.totalorder %s17, 0
    %p91 = por %p89, %p90
    %s93 = sadd.s32 %s92, 1
    %p96 = scmp.eq.s32.totalorder %s11, 1
    %p97 = scmp.ne.s32.totalorder %s92, %s94
    %p98 = scmp.eq.s32.totalorder %s11, 0
    %p99 = por %p97, %p98
    %p100 = scmp.ne.s32.totalorder %s92, %s94
    %p101 = scmp.eq.s32.totalorder %s16, 1
    %p102 = por %p100, %p101
    %p103 = scmp.ne.s32.totalorder %s94, %s95
    %p104 = scmp.eq.s32.totalorder %s16, 0
    %p105 = por %p103, %p104
    %p106 = scmp.ne.s32.totalorder %s94, %s95
    %p107 = scmp.eq.s32.totalorder %s17, 1
    %p108 = por %p106, %p107
    %p110 = scmp.ne.s32.totalorder %s95, %s109
    %p111 = scmp.eq.s32.totalorder %s17, 0
    %p112 = por %p110, %p111
    %s114 = sadd.s32 %s113, 1
    %p117 = scmp.eq.s32.totalorder %s11, 1
    %p118 = scmp.ne.s32.totalorder %s113, %s115
    %p119 = scmp.eq.s32.totalorder %s11, 0
    %p120 = por %p118, %p119
    %p121 = scmp.ne.s32.totalorder %s113, %s115
    %p122 = scmp.eq.s32.totalorder %s16, 1
    %p123 = por %p121, %p122
    %p124 = scmp.ne.s32.totalorder %s115, %s116
    %p125 = scmp.eq.s32.totalorder %s16, 0
    %p126 = por %p124, %p125
    %p127 = scmp.ne.s32.totalorder %s115, %s116
    %p128 = scmp.eq.s32.totalorder %s17, 1
    %p129 = por %p127, %p128
    %p131 = scmp.ne.s32.totalorder %s116, %s130
    %p132 = scmp.eq.s32.totalorder %s17, 0
    %p133 = por %p131, %p132
    %s134 = ssub.s32 %s11, %s18
    %p135 = scmp.eq.s32.totalorder %s134, 0
    %s137 = sadd.s32 %s136, 1
    %s138 = scalar_select %p135, %s136, %s137
    %p141 = pneg %p135
    %p142 = scmp.eq.s32.totalorder %s11, 1
    %p143 = por %p141, %p142
    %p144 = scmp.ne.s32.totalorder %s136, %s139
    %p145 = scmp.eq.s32.totalorder %s11, 0
    %p146 = por %p144, %p145
    %p147 = scmp.ne.s32.totalorder %s136, %s139
    %p148 = scmp.eq.s32.totalorder %s16, 1
    %p149 = por %p147, %p148
    %p150 = scmp.ne.s32.totalorder %s139, %s140
    %p151 = scmp.eq.s32.totalorder %s16, 0
    %p152 = por %p150, %p151
    %p153 = scmp.ne.s32.totalorder %s139, %s140
    %p154 = scmp.eq.s32.totalorder %s17, 1
    %p155 = por %p153, %p154
    %p157 = scmp.ne.s32.totalorder %s140, %s156
    %p158 = scmp.eq.s32.totalorder %s17, 0
    %p159 = por %p157, %p158
    %p160 = scmp.le.s32.totalorder 1, %s11
    %p161 = scmp.lt.s32.totalorder %s11, 3
    %p162 = pnand %p160, %p161
    %p163 = pneg %p162
    // Predicated region
    $region9: #{resblock_body_forward.13} parent=5 // pred_check
      _
    $region10: #{resblock_body_forward.13} parent=5 // pred_check_branch
      %165 = sbr.rel (%p162) target = $region12
    $region11: #{resblock_body_forward.13} parent=5 // pred_region
      %s166 = ssub.s32 %s11, 1
      // Predicated region
      $region13: #{resblock_body_forward.13} parent=11 // pred_check
        %p167 = pneg %p58
      $region14: #{resblock_body_forward.13} parent=11 // pred_check_branch
        %169 = sbr.rel (%p167) target = $region16
      $region15: #{resblock_body_forward.13} parent=11 // pred_region
        _
      $region16: #{resblock_body_forward.13} parent=11 // pred_fallthru
        _
      // Predicated region
      $region17: #{resblock_body_forward.13} parent=11 // pred_check
        %p170 = pneg %p105
      $region18: #{resblock_body_forward.13} parent=11 // pred_check_branch
        %172 = sbr.rel (%p170) target = $region20
      $region19: #{resblock_body_forward.13} parent=11 // pred_region
        _
      $region20: #{resblock_body_forward.13} parent=11 // pred_fallthru
        _
      // Predicated region
      $region21: #{resblock_body_forward.13} parent=11 // pred_check
        %p173 = pneg %p126
      $region22: #{resblock_body_forward.13} parent=11 // pred_check_branch
        %175 = sbr.rel (%p173) target = $region24
      $region23: #{resblock_body_forward.13} parent=11 // pred_region
        _
      $region24: #{resblock_body_forward.13} parent=11 // pred_fallthru
        _
    $region12: #{resblock_body_forward.13} parent=5 // pred_fallthru
      _
    %p176 = scmp.lt.s32.totalorder %s11, 2
    // Predicated region
    $region25: #{resblock_body_forward.13} parent=5 // pred_check
      %p177 = pneg %p176
    $region26: #{resblock_body_forward.13} parent=5 // pred_check_branch
      %179 = sbr.rel (%p177) target = $region28
    $region27: #{resblock_body_forward.13} parent=5 // pred_region
      // Predicated region
      $region29: #{resblock_body_forward.13} parent=27 // pred_check
        %p180 = pneg %p31
      $region30: #{resblock_body_forward.13} parent=27 // pred_check_branch
        %182 = sbr.rel (%p180) target = $region32
      $region31: #{resblock_body_forward.13} parent=27 // pred_region
        %s183 = smul.u32 8, %s11
        %p184 = scmp.lt.s32.totalorder %s183, 15
        %s185 = scalar_select %p184, %s183, 15
        %s186 = smul.addr %s185, 4
        %s187 = scalar_lea.vmem %s0, %s186
        %s188 = smul.u32 8, %s11
      $region32: #{resblock_body_forward.13} parent=27 // pred_fallthru
        _
      // Predicated region
      $region33: #{resblock_body_forward.13} parent=27 // pred_check
        %p189 = pneg %p78
      $region34: #{resblock_body_forward.13} parent=27 // pred_check_branch
        %191 = sbr.rel (%p189) target = $region36
      $region35: #{resblock_body_forward.13} parent=27 // pred_region
        %s192 = smul.u32 8, %s11
        %p193 = scmp.lt.s32.totalorder %s192, 15
        %s194 = scalar_select %p193, %s192, 15
        %s195 = smul.addr %s194, 4
        %s196 = scalar_lea.vmem %s2, %s195
        %s197 = smul.u32 8, %s11
      $region36: #{resblock_body_forward.13} parent=27 // pred_fallthru
        _
    $region28: #{resblock_body_forward.13} parent=5 // pred_fallthru
      _
    %p198 = scmp.le.s32.totalorder 1, %s11
    %p199 = scmp.lt.s32.totalorder %s11, 3
    %p200 = pnand %p198, %p199
    %p201 = pneg %p200
    // Predicated region
    $region37: #{resblock_body_forward.13} parent=5 // pred_check
      _
    $region38: #{resblock_body_forward.13} parent=5 // pred_check_branch
      %203 = sbr.rel (%p200) target = $region40
    $region39: #{resblock_body_forward.13} parent=5 // pred_region
      %s204 = ssub.s32 %s11, 1
      %s205 = smul.u32 8, %s16
      %p206 = scmp.lt.s32.totalorder %s205, 15
      %s207 = scalar_select %p206, %s205, 15
      %s208 = smul.addr %s207, 4
      %s209 = scalar_lea.vmem %s0, %s208
      %p210 = pneg %p37
      %p211 = pneg %p34
      %p212 = pneg %p58
      %p213 = pneg %p55
      %s214 = smul.u32 8, %s16
      %p215 = scmp.lt.s32.totalorder %s214, 15
      %s216 = scalar_select %p215, %s214, 15
      %s217 = smul.addr %s216, 4
      %s218 = scalar_lea.vmem %s2, %s217
      %p219 = pneg %p84
      %p220 = pneg %p81
      %p221 = pneg %p105
      %p222 = pneg %p102
      %p223 = pneg %p126
      %p224 = pneg %p123
      %p225 = pneg %p152
      %p226 = pneg %p149
      %s227 = smul.u32 8, %s16
      %p228 = scmp.lt.s32.totalorder %s227, 15
      %s229 = scalar_select %p228, %s227, 15
      %s230 = smul.addr %s229, 8
      %s231 = scalar_lea.vmem %s5, %s230
      %s232 = smul.u32 8, %s16
      %p233 = scmp.lt.s32.totalorder %s232, 15
      %s234 = scalar_select %p233, %s232, 15
      %s235 = smul.addr %s234, 4
      %s236 = scalar_lea.vmem %s0, %s235
      %s237 = smul.u32 8, %s16
      %s238 = smul.u32 8, %s16
      %p239 = scmp.lt.s32.totalorder %s238, 15
      %s240 = scalar_select %p239, %s238, 15
      %s241 = smul.addr %s240, 4
      %s242 = scalar_lea.vmem %s2, %s241
      %s243 = smul.u32 8, %s16
      %s244 = smul.u32 8, %s16
      %p245 = scmp.lt.s32.totalorder %s244, 15
      %s246 = scalar_select %p245, %s244, 15
      %s247 = smul.addr %s246, 8
      %s248 = scalar_lea.vmem %s5, %s247
      %s249 = smul.u32 8, %s16
      %v251 = vld [vmem:[%s236] sm:$0xf]
      %v252 = vld [vmem:[%s236 + $0x4] sm:$0xf]
      %v253 = vld [vmem:[%s236 + $0x8] sm:$0xf]
      %v254 = vld [vmem:[%s236 + $0xc] sm:$0xf]
      %v255 = vld [vmem:[%s236 + $0x10] sm:$0xf]
      %v256 = vld [vmem:[%s236 + $0x14] sm:$0xf]
      %v257 = vld [vmem:[%s236 + $0x18] sm:$0xf]
      %v258 = vld [vmem:[%s236 + $0x1c] sm:$0xf]
      %v259 = vld [vmem:[%s1] sm:$0xf]
      %v260 = vld [vmem:[%s242] sm:$0xf]
      %v261 = vld [vmem:[%s242 + $0x4] sm:$0xf]
      %v262 = vld [vmem:[%s242 + $0x8] sm:$0xf]
      %v263 = vld [vmem:[%s242 + $0xc] sm:$0xf]
      %v264 = vld [vmem:[%s242 + $0x10] sm:$0xf]
      %v265 = vld [vmem:[%s242 + $0x14] sm:$0xf]
      %v266 = vld [vmem:[%s242 + $0x18] sm:$0xf]
      %v267 = vld [vmem:[%s242 + $0x1c] sm:$0xf]
      %v268 = vld [vmem:[%s3] sm:$0xf]
      %v277 = vunpack.c.l.b16 %v260
      %v278 = vunpack.c.l.b16 %v261
      %v279 = vunpack.c.l.b16 %v262
      %v280 = vunpack.c.l.b16 %v263
      %v281 = vunpack.c.l.b16 %v264
      %v282 = vunpack.c.l.b16 %v265
      %v283 = vunpack.c.l.b16 %v266
      %v284 = vunpack.c.l.b16 %v267
      %v285 = vpack.c.b16 %v278, %v277
      %v286 = vpack.c.b16 %v280, %v279
      %v287 = vpack.c.b16 %v282, %v281
      %v288 = vpack.c.b16 %v284, %v283
      %vm289 = vcmask 64512
      %v291 = vsel %vm289, %v285, 0
      %v294 = vsel %vm289, %v286, 0
      %v297 = vsel %vm289, %v287, 0
      %v300 = vsel %vm289, %v288, 0
      %vm302 = vcmask 1043456
      %v304 = vsel %vm302, %v268, 0
      %306 = vmatpush.bf16.msra.mxu0 0
      %307 = vmatpush.bf16.msra.mxu0 0
      %308 = vmatpush.bf16.msra.mxu0 0
      %309 = vmatpush.bf16.msra.mxu0 0
      %310 = vmatpush.bf16.msra.mxu0 0
      %311 = vmatpush.bf16.msra.mxu0 0
      %312 = vmatpush.bf16.msra.mxu0 0
      %313 = vmatpush.bf16.msra.mxu0 %v304
      %314 = vmatmul.bf16.gmra.mxu0 %v291
      %v315 = vpop.f32.mrf.mxu0
      %v316 = vadd.f32 0.0, %v315
      %v317 = vpop.f32.mrf.mxu0
      %v318 = vadd.f32 0.0, %v317
      %319 = vmatmul.bf16.gmra.mxu0 %v294
      %v320 = vpop.f32.mrf.mxu0
      %v321 = vadd.f32 0.0, %v320
      %v322 = vpop.f32.mrf.mxu0
      %v323 = vadd.f32 0.0, %v322
      %324 = vmatmul.bf16.gmra.mxu0 %v297
      %v325 = vpop.f32.mrf.mxu0
      %v326 = vadd.f32 0.0, %v325
      %v327 = vpop.f32.mrf.mxu0
      %v328 = vadd.f32 0.0, %v327
      %329 = vmatmul.bf16.gmra.mxu0 %v300
      %v330 = vpop.f32.mrf.mxu0
      %v331 = vadd.f32 0.0, %v330
      %v332 = vpop.f32.mrf.mxu0
      %v333 = vadd.f32 0.0, %v332
      %334 = vdwg.mxu0
      %v343 = vunpack.c.l.b16 %v251
      %v344 = vunpack.c.l.b16 %v252
      %v345 = vunpack.c.l.b16 %v253
      %v346 = vunpack.c.l.b16 %v254
      %v347 = vunpack.c.l.b16 %v255
      %v348 = vunpack.c.l.b16 %v256
      %v349 = vunpack.c.l.b16 %v257
      %v350 = vunpack.c.l.b16 %v258
      %v351 = vpack.c.b16 %v344, %v343
      %v352 = vpack.c.b16 %v346, %v345
      %v353 = vpack.c.b16 %v348, %v347
      %v354 = vpack.c.b16 %v350, %v349
      %v356 = vsel %vm289, %v351, 0
      %v359 = vsel %vm289, %v352, 0
      %v362 = vsel %vm289, %v353, 0
      %v365 = vsel %vm289, %v354, 0
      %v368 = vsel %vm302, %v259, 0
      %370 = vmatpush.bf16.msra.mxu0 0
      %371 = vmatpush.bf16.msra.mxu0 0
      %372 = vmatpush.bf16.msra.mxu0 0
      %373 = vmatpush.bf16.msra.mxu0 0
      %374 = vmatpush.bf16.msra.mxu0 0
      %375 = vmatpush.bf16.msra.mxu0 0
      %376 = vmatpush.bf16.msra.mxu0 0
      %377 = vmatpush.bf16.msra.mxu0 %v368
      %378 = vmatmul.bf16.gmra.mxu0 %v356
      %v379 = vpop.f32.mrf.mxu0
      %v380 = vadd.f32 %v316, %v379
      %v381 = vpop.f32.mrf.mxu0
      %v382 = vadd.f32 %v318, %v381
      %383 = vmatmul.bf16.gmra.mxu0 %v359
      %v384 = vpop.f32.mrf.mxu0
      %v385 = vadd.f32 %v321, %v384
      %v386 = vpop.f32.mrf.mxu0
      %v387 = vadd.f32 %v323, %v386
      %388 = vmatmul.bf16.gmra.mxu0 %v362
      %v389 = vpop.f32.mrf.mxu0
      %v390 = vadd.f32 %v326, %v389
      %v391 = vpop.f32.mrf.mxu0
      %v392 = vadd.f32 %v328, %v391
      %393 = vmatmul.bf16.gmra.mxu0 %v365
      %v394 = vpop.f32.mrf.mxu0
      %v395 = vadd.f32 %v331, %v394
      %v396 = vpop.f32.mrf.mxu0
      %v397 = vadd.f32 %v333, %v396
      %398 = vdwg.mxu0
      %v399 = vld [vmem:[%s4] sm:$0x1]
      %v401 = vperm.slane %v399, 0
      %v403 = vadd.f32 %v380, %v401
      %v404 = vadd.f32 %v382, %v401
      %v405 = vadd.f32 %v385, %v401
      %v406 = vadd.f32 %v387, %v401
      %v407 = vadd.f32 %v390, %v401
      %v408 = vadd.f32 %v392, %v401
      %v409 = vadd.f32 %v395, %v401
      %v410 = vadd.f32 %v397, %v401
      %v411 = vmin.f32 %v403, 20.0
      %v412 = vmin.f32 %v404, 20.0
      %v413 = vmin.f32 %v405, 20.0
      %v414 = vmin.f32 %v406, 20.0
      %v415 = vmin.f32 %v407, 20.0
      %v416 = vmin.f32 %v408, 20.0
      %v417 = vmin.f32 %v409, 20.0
      %v418 = vmin.f32 %v410, 20.0
      %v419 = vmul.f32 %v411, 1.442695
      %v420 = vpow.pop %v419
      %v421 = vmul.f32 %v412, 1.442695
      %v422 = vpow.pop %v421
      %v423 = vmul.f32 %v413, 1.442695
      %v424 = vpow.pop %v423
      %v425 = vmul.f32 %v414, 1.442695
      %v426 = vpow.pop %v425
      %v427 = vmul.f32 %v415, 1.442695
      %v428 = vpow.pop %v427
      %v429 = vmul.f32 %v416, 1.442695
      %v430 = vpow.pop %v429
      %v431 = vmul.f32 %v417, 1.442695
      %v432 = vpow.pop %v431
      %v433 = vmul.f32 %v418, 1.442695
      %v434 = vpow.pop %v433
      %v435 = vadd.f32 %v420, 2.0
      %v436 = vadd.f32 %v422, 2.0
      %v437 = vadd.f32 %v424, 2.0
      %v438 = vadd.f32 %v426, 2.0
      %v439 = vadd.f32 %v428, 2.0
      %v440 = vadd.f32 %v430, 2.0
      %v441 = vadd.f32 %v432, 2.0
      %v442 = vadd.f32 %v434, 2.0
      %v443 = vmul.f32 %v420, %v435
      %v444 = vmul.f32 %v422, %v436
      %v445 = vmul.f32 %v424, %v437
      %v446 = vmul.f32 %v426, %v438
      %v447 = vmul.f32 %v428, %v439
      %v448 = vmul.f32 %v430, %v440
      %v449 = vmul.f32 %v432, %v441
      %v450 = vmul.f32 %v434, %v442
      %v451 = vadd.f32 %v443, 2.0
      %v452 = vadd.f32 %v444, 2.0
      %v453 = vadd.f32 %v445, 2.0
      %v454 = vadd.f32 %v446, 2.0
      %v455 = vadd.f32 %v447, 2.0
      %v456 = vadd.f32 %v448, 2.0
      %v457 = vadd.f32 %v449, 2.0
      %v458 = vadd.f32 %v450, 2.0
      %v459 = vrcp.pop %v451
      %v460 = vrcp.pop %v452
      %v461 = vrcp.pop %v453
      %v462 = vrcp.pop %v454
      %v463 = vrcp.pop %v455
      %v464 = vrcp.pop %v456
      %v465 = vrcp.pop %v457
      %v466 = vrcp.pop %v458
      %v467 = vmul.f32 %v443, %v459
      %v468 = vmul.f32 %v444, %v460
      %v469 = vmul.f32 %v445, %v461
      %v470 = vmul.f32 %v446, %v462
      %v471 = vmul.f32 %v447, %v463
      %v472 = vmul.f32 %v448, %v464
      %v473 = vmul.f32 %v449, %v465
      %v474 = vmul.f32 %v450, %v466
      %v475 = vmul.f32 %v403, %v467
      %v476 = vmul.f32 %v404, %v468
      %v477 = vmul.f32 %v405, %v469
      %v478 = vmul.f32 %v406, %v470
      %v479 = vmul.f32 %v407, %v471
      %v480 = vmul.f32 %v408, %v472
      %v481 = vmul.f32 %v409, %v473
      %v482 = vmul.f32 %v410, %v474
      %483 = vst.msk [vmem:[%s248] sm:$0xff] %vm289, %v475
      %484 = vst.msk [vmem:[%s248 + $0x8] sm:$0xff] %vm289, %v476
      %485 = vst.msk [vmem:[%s248 + $0x10] sm:$0xff] %vm289, %v477
      %486 = vst.msk [vmem:[%s248 + $0x18] sm:$0xff] %vm289, %v478
      %487 = vst.msk [vmem:[%s248 + $0x20] sm:$0xff] %vm289, %v479
      %488 = vst.msk [vmem:[%s248 + $0x28] sm:$0xff] %vm289, %v480
      %489 = vst.msk [vmem:[%s248 + $0x30] sm:$0xff] %vm289, %v481
      %490 = vst.msk [vmem:[%s248 + $0x38] sm:$0xff] %vm289, %v482
      %s491 = smul.u32 8, %s16
      %p492 = scmp.lt.s32.totalorder %s491, 15
      %s493 = scalar_select %p492, %s491, 15
      %s494 = smul.addr %s493, 8
      %s495 = scalar_lea.vmem %s5, %s494
      // Predicated region
      $region41: #{resblock_body_forward.13} parent=39 // pred_check
        %p496 = pneg %p149
      $region42: #{resblock_body_forward.13} parent=39 // pred_check_branch
        %498 = sbr.rel (%p496) target = $region44
      $region43: #{resblock_body_forward.13} parent=39 // pred_region
        %s499 = smul.u32 8, %s16
      $region44: #{resblock_body_forward.13} parent=39 // pred_fallthru
        _
    $region40: #{resblock_body_forward.13} parent=5 // pred_fallthru
      _
    %p500 = scmp.le.s32.totalorder 2, %s11
    // Predicated region
    $region45: #{resblock_body_forward.13} parent=5 // pred_check
      %p501 = pneg %p500
    $region46: #{resblock_body_forward.13} parent=5 // pred_check_branch
      %503 = sbr.rel (%p501) target = $region48
    $region47: #{resblock_body_forward.13} parent=5 // pred_region
      %s504 = ssub.s32 %s11, 2
      // Predicated region
      $region49: #{resblock_body_forward.13} parent=47 // pred_check
        %p505 = pneg %p155
      $region50: #{resblock_body_forward.13} parent=47 // pred_check_branch
        %507 = sbr.rel (%p505) target = $region52
      $region51: #{resblock_body_forward.13} parent=47 // pred_region
        %s508 = smul.u32 8, %s17
        %p509 = scmp.lt.s32.totalorder %s508, 15
        %s510 = scalar_select %p509, %s508, 15
        %s511 = smul.addr %s510, 8
        %s512 = scalar_lea.vmem %s5, %s511
      $region52: #{resblock_body_forward.13} parent=47 // pred_fallthru
        _
    $region48: #{resblock_body_forward.13} parent=5 // pred_fallthru
      _
  $region6: #{resblock_body_forward.13} parent=0 // loop_footer
    %s15 = sadd.s32 1, %s11
  $region7: #{resblock_body_forward.13} parent=0 // loop_footer_branch
    %10 = sbr.rel target = $region3
  $region8: #{resblock_body_forward.13} parent=0 // loop_exit
    _

// kernel: resblock_body_forward.12
$region0: #{resblock_body_forward.12}
  #allocation0 [shape = 'u32[]', space=smem, size = 0x4, offset = 0x4, fixed_abs, tag = 'smem constant byte address 0x4 - core index']
  #allocation1 [shape = 'u32[72,128]{1,0:T(1,128)}', space=vmem, size = 0x9000, scoped, tag = 'internal scratch']
  %s0 = inlined_call_operand.vmem [shape: bf16[128,8], index: 0, kind: input, shape index: {}]
  %s1 = inlined_call_operand.vmem [shape: bf16[8,8], index: 1, kind: input, shape index: {}, may-alias: {1,3}]
  %s2 = inlined_call_operand.vmem [shape: bf16[128,8], index: 2, kind: input, shape index: {}]
  %s3 = inlined_call_operand.vmem [shape: bf16[8,8], index: 3, kind: input, shape index: {}, may-alias: {1,3}]
  %s4 = inlined_call_operand.vmem [shape: f32[1,8], index: 4, kind: input, shape index: {}]
  %s5 = inlined_call_operand.vmem [shape: bf16[128,8], index: 5, kind: output, shape index: {}]
  %s6 = sld [smem:[#allocation0]]
  $region53: #{resblock_body_forward.12} parent=0
    _
  %s8 = ssub.s32 1, %s6
  %s9 = scalar_select 0, %s8, %s6
  loop: start=0, step=1, limit=4
  $region2: #{resblock_body_forward.12} parent=0 // loop_pre_header
    _
  $region3: #{resblock_body_forward.12} parent=0 // loop_header
    %s11 = sphi 0, %s15
    %p12 = scmp.ge.s32.totalorder %s11, 4
    %s21 = sphi 0, %s23
    %s24 = sphi 0, %s21
    %s25 = sphi 0, %s24
    %s41 = sphi 0, %s25
    %s45 = sphi 0, %s45
    %s47 = sphi 0, %s45
    %s48 = sphi 0, %s47
    %s62 = sphi 0, %s48
    %s68 = sphi 0, %s70
    %s71 = sphi 0, %s68
    %s72 = sphi 0, %s71
    %s88 = sphi 0, %s72
    %s92 = sphi 0, %s92
    %s94 = sphi 0, %s92
    %s95 = sphi 0, %s94
    %s109 = sphi 0, %s95
    %s113 = sphi 0, %s113
    %s115 = sphi 0, %s113
    %s116 = sphi 0, %s115
    %s130 = sphi 0, %s116
    %s136 = sphi 0, %s138
    %s139 = sphi 0, %s136
    %s140 = sphi 0, %s139
    %s156 = sphi 0, %s140
  $region4: #{resblock_body_forward.12} parent=0 // loop_header_branch
    %14 = sbr.rel (%p12) target = $region8
  $region5: #{resblock_body_forward.12} parent=0 // loop_body
    %s16 = ssub.s32 %s11, 1
    %s17 = ssub.s32 %s11, 2
    %s18 = sadd.s32 %s11, 1
    %s19 = ssub.s32 %s11, %s18
    %p20 = scmp.eq.s32.totalorder %s19, 0
    %s22 = sadd.s32 %s21, 1
    %s23 = scalar_select %p20, %s21, %s22
    %p26 = pneg %p20
    %p27 = scmp.eq.s32.totalorder %s11, 1
    %p28 = por %p26, %p27
    %p29 = scmp.ne.s32.totalorder %s21, %s24
    %p30 = scmp.eq.s32.totalorder %s11, 0
    %p31 = por %p29, %p30
    %p32 = scmp.ne.s32.totalorder %s21, %s24
    %p33 = scmp.eq.s32.totalorder %s16, 1
    %p34 = por %p32, %p33
    %p35 = scmp.ne.s32.totalorder %s24, %s25
    %p36 = scmp.eq.s32.totalorder %s16, 0
    %p37 = por %p35, %p36
    %p38 = scmp.ne.s32.totalorder %s24, %s25
    %p39 = scmp.eq.s32.totalorder %s17, 1
    %p40 = por %p38, %p39
    %p42 = scmp.ne.s32.totalorder %s25, %s41
    %p43 = scmp.eq.s32.totalorder %s17, 0
    %p44 = por %p42, %p43
    %s46 = sadd.s32 %s45, 1
    %p49 = scmp.eq.s32.totalorder %s11, 1
    %p50 = scmp.ne.s32.totalorder %s45, %s47
    %p51 = scmp.eq.s32.totalorder %s11, 0
    %p52 = por %p50, %p51
    %p53 = scmp.ne.s32.totalorder %s45, %s47
    %p54 = scmp.eq.s32.totalorder %s16, 1
    %p55 = por %p53, %p54
    %p56 = scmp.ne.s32.totalorder %s47, %s48
    %p57 = scmp.eq.s32.totalorder %s16, 0
    %p58 = por %p56, %p57
    %p59 = scmp.ne.s32.totalorder %s47, %s48
    %p60 = scmp.eq.s32.totalorder %s17, 1
    %p61 = por %p59, %p60
    %p63 = scmp.ne.s32.totalorder %s48, %s62
    %p64 = scmp.eq.s32.totalorder %s17, 0
    %p65 = por %p63, %p64
    %s66 = ssub.s32 %s11, %s18
    %p67 = scmp.eq.s32.totalorder %s66, 0
    %s69 = sadd.s32 %s68, 1
    %s70 = scalar_select %p67, %s68, %s69
    %p73 = pneg %p67
    %p74 = scmp.eq.s32.totalorder %s11, 1
    %p75 = por %p73, %p74
    %p76 = scmp.ne.s32.totalorder %s68, %s71
    %p77 = scmp.eq.s32.totalorder %s11, 0
    %p78 = por %p76, %p77
    %p79 = scmp.ne.s32.totalorder %s68, %s71
    %p80 = scmp.eq.s32.totalorder %s16, 1
    %p81 = por %p79, %p80
    %p82 = scmp.ne.s32.totalorder %s71, %s72
    %p83 = scmp.eq.s32.totalorder %s16, 0
    %p84 = por %p82, %p83
    %p85 = scmp.ne.s32.totalorder %s71, %s72
    %p86 = scmp.eq.s32.totalorder %s17, 1
    %p87 = por %p85, %p86
    %p89 = scmp.ne.s32.totalorder %s72, %s88
    %p90 = scmp.eq.s32.totalorder %s17, 0
    %p91 = por %p89, %p90
    %s93 = sadd.s32 %s92, 1
    %p96 = scmp.eq.s32.totalorder %s11, 1
    %p97 = scmp.ne.s32.totalorder %s92, %s94
    %p98 = scmp.eq.s32.totalorder %s11, 0
    %p99 = por %p97, %p98
    %p100 = scmp.ne.s32.totalorder %s92, %s94
    %p101 = scmp.eq.s32.totalorder %s16, 1
    %p102 = por %p100, %p101
    %p103 = scmp.ne.s32.totalorder %s94, %s95
    %p104 = scmp.eq.s32.totalorder %s16, 0
    %p105 = por %p103, %p104
    %p106 = scmp.ne.s32.totalorder %s94, %s95
    %p107 = scmp.eq.s32.totalorder %s17, 1
    %p108 = por %p106, %p107
    %p110 = scmp.ne.s32.totalorder %s95, %s109
    %p111 = scmp.eq.s32.totalorder %s17, 0
    %p112 = por %p110, %p111
    %s114 = sadd.s32 %s113, 1
    %p117 = scmp.eq.s32.totalorder %s11, 1
    %p118 = scmp.ne.s32.totalorder %s113, %s115
    %p119 = scmp.eq.s32.totalorder %s11, 0
    %p120 = por %p118, %p119
    %p121 = scmp.ne.s32.totalorder %s113, %s115
    %p122 = scmp.eq.s32.totalorder %s16, 1
    %p123 = por %p121, %p122
    %p124 = scmp.ne.s32.totalorder %s115, %s116
    %p125 = scmp.eq.s32.totalorder %s16, 0
    %p126 = por %p124, %p125
    %p127 = scmp.ne.s32.totalorder %s115, %s116
    %p128 = scmp.eq.s32.totalorder %s17, 1
    %p129 = por %p127, %p128
    %p131 = scmp.ne.s32.totalorder %s116, %s130
    %p132 = scmp.eq.s32.totalorder %s17, 0
    %p133 = por %p131, %p132
    %s134 = ssub.s32 %s11, %s18
    %p135 = scmp.eq.s32.totalorder %s134, 0
    %s137 = sadd.s32 %s136, 1
    %s138 = scalar_select %p135, %s136, %s137
    %p141 = pneg %p135
    %p142 = scmp.eq.s32.totalorder %s11, 1
    %p143 = por %p141, %p142
    %p144 = scmp.ne.s32.totalorder %s136, %s139
    %p145 = scmp.eq.s32.totalorder %s11, 0
    %p146 = por %p144, %p145
    %p147 = scmp.ne.s32.totalorder %s136, %s139
    %p148 = scmp.eq.s32.totalorder %s16, 1
    %p149 = por %p147, %p148
    %p150 = scmp.ne.s32.totalorder %s139, %s140
    %p151 = scmp.eq.s32.totalorder %s16, 0
    %p152 = por %p150, %p151
    %p153 = scmp.ne.s32.totalorder %s139, %s140
    %p154 = scmp.eq.s32.totalorder %s17, 1
    %p155 = por %p153, %p154
    %p157 = scmp.ne.s32.totalorder %s140, %s156
    %p158 = scmp.eq.s32.totalorder %s17, 0
    %p159 = por %p157, %p158
    %p160 = scmp.le.s32.totalorder 1, %s11
    %p161 = scmp.lt.s32.totalorder %s11, 3
    %p162 = pnand %p160, %p161
    %p163 = pneg %p162
    // Predicated region
    $region9: #{resblock_body_forward.12} parent=5 // pred_check
      _
    $region10: #{resblock_body_forward.12} parent=5 // pred_check_branch
      %165 = sbr.rel (%p162) target = $region12
    $region11: #{resblock_body_forward.12} parent=5 // pred_region
      %s166 = ssub.s32 %s11, 1
      // Predicated region
      $region13: #{resblock_body_forward.12} parent=11 // pred_check
        %p167 = pneg %p58
      $region14: #{resblock_body_forward.12} parent=11 // pred_check_branch
        %169 = sbr.rel (%p167) target = $region16
      $region15: #{resblock_body_forward.12} parent=11 // pred_region
        _
      $region16: #{resblock_body_forward.12} parent=11 // pred_fallthru
        _
      // Predicated region
      $region17: #{resblock_body_forward.12} parent=11 // pred_check
        %p170 = pneg %p105
      $region18: #{resblock_body_forward.12} parent=11 // pred_check_branch
        %172 = sbr.rel (%p170) target = $region20
      $region19: #{resblock_body_forward.12} parent=11 // pred_region
        _
      $region20: #{resblock_body_forward.12} parent=11 // pred_fallthru
        _
      // Predicated region
      $region21: #{resblock_body_forward.12} parent=11 // pred_check
        %p173 = pneg %p126
      $region22: #{resblock_body_forward.12} parent=11 // pred_check_branch
        %175 = sbr.rel (%p173) target = $region24
      $region23: #{resblock_body_forward.12} parent=11 // pred_region
        _
      $region24: #{resblock_body_forward.12} parent=11 // pred_fallthru
        _
    $region12: #{resblock_body_forward.12} parent=5 // pred_fallthru
      _
    %p176 = scmp.lt.s32.totalorder %s11, 2
    // Predicated region
    $region25: #{resblock_body_forward.12} parent=5 // pred_check
      %p177 = pneg %p176
    $region26: #{resblock_body_forward.12} parent=5 // pred_check_branch
      %179 = sbr.rel (%p177) target = $region28
    $region27: #{resblock_body_forward.12} parent=5 // pred_region
      // Predicated region
      $region29: #{resblock_body_forward.12} parent=27 // pred_check
        %p180 = pneg %p31
      $region30: #{resblock_body_forward.12} parent=27 // pred_check_branch
        %182 = sbr.rel (%p180) target = $region32
      $region31: #{resblock_body_forward.12} parent=27 // pred_region
        %s183 = smul.u32 8, %s11
        %p184 = scmp.lt.s32.totalorder %s183, 15
        %s185 = scalar_select %p184, %s183, 15
        %s186 = smul.addr %s185, 4
        %s187 = scalar_lea.vmem %s0, %s186
        %s188 = smul.u32 8, %s11
      $region32: #{resblock_body_forward.12} parent=27 // pred_fallthru
        _
      // Predicated region
      $region33: #{resblock_body_forward.12} parent=27 // pred_check
        %p189 = pneg %p78
      $region34: #{resblock_body_forward.12} parent=27 // pred_check_branch
        %191 = sbr.rel (%p189) target = $region36
      $region35: #{resblock_body_forward.12} parent=27 // pred_region
        %s192 = smul.u32 8, %s11
        %p193 = scmp.lt.s32.totalorder %s192, 15
        %s194 = scalar_select %p193, %s192, 15
        %s195 = smul.addr %s194, 4
        %s196 = scalar_lea.vmem %s2, %s195
        %s197 = smul.u32 8, %s11
      $region36: #{resblock_body_forward.12} parent=27 // pred_fallthru
        _
    $region28: #{resblock_body_forward.12} parent=5 // pred_fallthru
      _
    %p198 = scmp.le.s32.totalorder 1, %s11
    %p199 = scmp.lt.s32.totalorder %s11, 3
    %p200 = pnand %p198, %p199
    %p201 = pneg %p200
    // Predicated region
    $region37: #{resblock_body_forward.12} parent=5 // pred_check
      _
    $region38: #{resblock_body_forward.12} parent=5 // pred_check_branch
      %203 = sbr.rel (%p200) target = $region40
    $region39: #{resblock_body_forward.12} parent=5 // pred_region
      %s204 = ssub.s32 %s11, 1
      %s205 = smul.u32 8, %s16
      %p206 = scmp.lt.s32.totalorder %s205, 15
      %s207 = scalar_select %p206, %s205, 15
      %s208 = smul.addr %s207, 4
      %s209 = scalar_lea.vmem %s0, %s208
      %p210 = pneg %p37
      %p211 = pneg %p34
      %p212 = pneg %p58
      %p213 = pneg %p55
      %s214 = smul.u32 8, %s16
      %p215 = scmp.lt.s32.totalorder %s214, 15
      %s216 = scalar_select %p215, %s214, 15
      %s217 = smul.addr %s216, 4
      %s218 = scalar_lea.vmem %s2, %s217
      %p219 = pneg %p84
      %p220 = pneg %p81
      %p221 = pneg %p105
      %p222 = pneg %p102
      %p223 = pneg %p126
      %p224 = pneg %p123
      %p225 = pneg %p152
      %p226 = pneg %p149
      %s227 = smul.u32 8, %s16
      %p228 = scmp.lt.s32.totalorder %s227, 15
      %s229 = scalar_select %p228, %s227, 15
      %s230 = smul.addr %s229, 4
      %s231 = scalar_lea.vmem %s5, %s230
      %s232 = smul.u32 8, %s16
      %p233 = scmp.lt.s32.totalorder %s232, 15
      %s234 = scalar_select %p233, %s232, 15
      %s235 = smul.addr %s234, 4
      %s236 = scalar_lea.vmem %s0, %s235
      %s237 = smul.u32 8, %s16
      %s238 = smul.u32 8, %s16
      %p239 = scmp.lt.s32.totalorder %s238, 15
      %s240 = scalar_select %p239, %s238, 15
      %s241 = smul.addr %s240, 4
      %s242 = scalar_lea.vmem %s2, %s241
      %s243 = smul.u32 8, %s16
      %s244 = smul.u32 8, %s16
      %p245 = scmp.lt.s32.totalorder %s244, 15
      %s246 = scalar_select %p245, %s244, 15
      %s247 = smul.addr %s246, 4
      %s248 = scalar_lea.vmem %s5, %s247
      %s249 = smul.u32 8, %s16
      %v251 = vld [vmem:[%s236] sm:$0xf]
      %v252 = vld [vmem:[%s236 + $0x4] sm:$0xf]
      %v253 = vld [vmem:[%s236 + $0x8] sm:$0xf]
      %v254 = vld [vmem:[%s236 + $0xc] sm:$0xf]
      %v255 = vld [vmem:[%s236 + $0x10] sm:$0xf]
      %v256 = vld [vmem:[%s236 + $0x14] sm:$0xf]
      %v257 = vld [vmem:[%s236 + $0x18] sm:$0xf]
      %v258 = vld [vmem:[%s236 + $0x1c] sm:$0xf]
      %v259 = vld [vmem:[%s1] sm:$0xf]
      %v260 = vld [vmem:[%s242] sm:$0xf]
      %v261 = vld [vmem:[%s242 + $0x4] sm:$0xf]
      %v262 = vld [vmem:[%s242 + $0x8] sm:$0xf]
      %v263 = vld [vmem:[%s242 + $0xc] sm:$0xf]
      %v264 = vld [vmem:[%s242 + $0x10] sm:$0xf]
      %v265 = vld [vmem:[%s242 + $0x14] sm:$0xf]
      %v266 = vld [vmem:[%s242 + $0x18] sm:$0xf]
      %v267 = vld [vmem:[%s242 + $0x1c] sm:$0xf]
      %v268 = vld [vmem:[%s3] sm:$0xf]
      %v277 = vunpack.c.l.b16 %v260
      %v278 = vunpack.c.l.b16 %v261
      %v279 = vunpack.c.l.b16 %v262
      %v280 = vunpack.c.l.b16 %v263
      %v281 = vunpack.c.l.b16 %v264
      %v282 = vunpack.c.l.b16 %v265
      %v283 = vunpack.c.l.b16 %v266
      %v284 = vunpack.c.l.b16 %v267
      %v285 = vpack.c.b16 %v278, %v277
      %v286 = vpack.c.b16 %v280, %v279
      %v287 = vpack.c.b16 %v282, %v281
      %v288 = vpack.c.b16 %v284, %v283
      %vm289 = vcmask 64512
      %v291 = vsel %vm289, %v285, 0
      %v294 = vsel %vm289, %v286, 0
      %v297 = vsel %vm289, %v287, 0
      %v300 = vsel %vm289, %v288, 0
      %vm302 = vcmask 1043456
      %v304 = vsel %vm302, %v268, 0
      %306 = vmatpush.bf16.msra.mxu0 0
      %307 = vmatpush.bf16.msra.mxu0 0
      %308 = vmatpush.bf16.msra.mxu0 0
      %309 = vmatpush.bf16.msra.mxu0 0
      %310 = vmatpush.bf16.msra.mxu0 0
      %311 = vmatpush.bf16.msra.mxu0 0
      %312 = vmatpush.bf16.msra.mxu0 0
      %313 = vmatpush.bf16.msra.mxu0 %v304
      %314 = vmatmul.bf16.gmra.mxu0 %v291
      %v315 = vpop.f32.mrf.mxu0
      %v316 = vadd.f32 0.0, %v315
      %v317 = vpop.f32.mrf.mxu0
      %v318 = vadd.f32 0.0, %v317
      %319 = vmatmul.bf16.gmra.mxu0 %v294
      %v320 = vpop.f32.mrf.mxu0
      %v321 = vadd.f32 0.0, %v320
      %v322 = vpop.f32.mrf.mxu0
      %v323 = vadd.f32 0.0, %v322
      %324 = vmatmul.bf16.gmra.mxu0 %v297
      %v325 = vpop.f32.mrf.mxu0
      %v326 = vadd.f32 0.0, %v325
      %v327 = vpop.f32.mrf.mxu0
      %v328 = vadd.f32 0.0, %v327
      %329 = vmatmul.bf16.gmra.mxu0 %v300
      %v330 = vpop.f32.mrf.mxu0
      %v331 = vadd.f32 0.0, %v330
      %v332 = vpop.f32.mrf.mxu0
      %v333 = vadd.f32 0.0, %v332
      %334 = vdwg.mxu0
      %v343 = vunpack.c.l.b16 %v251
      %v344 = vunpack.c.l.b16 %v252
      %v345 = vunpack.c.l.b16 %v253
      %v346 = vunpack.c.l.b16 %v254
      %v347 = vunpack.c.l.b16 %v255
      %v348 = vunpack.c.l.b16 %v256
      %v349 = vunpack.c.l.b16 %v257
      %v350 = vunpack.c.l.b16 %v258
      %v351 = vpack.c.b16 %v344, %v343
      %v352 = vpack.c.b16 %v346, %v345
      %v353 = vpack.c.b16 %v348, %v347
      %v354 = vpack.c.b16 %v350, %v349
      %v356 = vsel %vm289, %v351, 0
      %v359 = vsel %vm289, %v352, 0
      %v362 = vsel %vm289, %v353, 0
      %v365 = vsel %vm289, %v354, 0
      %v368 = vsel %vm302, %v259, 0
      %370 = vmatpush.bf16.msra.mxu0 0
      %371 = vmatpush.bf16.msra.mxu0 0
      %372 = vmatpush.bf16.msra.mxu0 0
      %373 = vmatpush.bf16.msra.mxu0 0
      %374 = vmatpush.bf16.msra.mxu0 0
      %375 = vmatpush.bf16.msra.mxu0 0
      %376 = vmatpush.bf16.msra.mxu0 0
      %377 = vmatpush.bf16.msra.mxu0 %v368
      %378 = vmatmul.bf16.gmra.mxu0 %v356
      %v379 = vpop.f32.mrf.mxu0
      %v380 = vadd.f32 %v316, %v379
      %v381 = vpop.f32.mrf.mxu0
      %v382 = vadd.f32 %v318, %v381
      %383 = vmatmul.bf16.gmra.mxu0 %v359
      %v384 = vpop.f32.mrf.mxu0
      %v385 = vadd.f32 %v321, %v384
      %v386 = vpop.f32.mrf.mxu0
      %v387 = vadd.f32 %v323, %v386
      %388 = vmatmul.bf16.gmra.mxu0 %v362
      %v389 = vpop.f32.mrf.mxu0
      %v390 = vadd.f32 %v326, %v389
      %v391 = vpop.f32.mrf.mxu0
      %v392 = vadd.f32 %v328, %v391
      %393 = vmatmul.bf16.gmra.mxu0 %v365
      %v394 = vpop.f32.mrf.mxu0
      %v395 = vadd.f32 %v331, %v394
      %v396 = vpop.f32.mrf.mxu0
      %v397 = vadd.f32 %v333, %v396
      %398 = vdwg.mxu0
      %v399 = vld [vmem:[%s4] sm:$0x1]
      %v401 = vperm.slane %v399, 0
      %v403 = vadd.f32 %v380, %v401
      %v404 = vadd.f32 %v382, %v401
      %v405 = vadd.f32 %v385, %v401
      %v406 = vadd.f32 %v387, %v401
      %v407 = vadd.f32 %v390, %v401
      %v408 = vadd.f32 %v392, %v401
      %v409 = vadd.f32 %v395, %v401
      %v410 = vadd.f32 %v397, %v401
      %v411 = vmin.f32 %v403, 20.0
      %v412 = vmin.f32 %v404, 20.0
      %v413 = vmin.f32 %v405, 20.0
      %v414 = vmin.f32 %v406, 20.0
      %v415 = vmin.f32 %v407, 20.0
      %v416 = vmin.f32 %v408, 20.0
      %v417 = vmin.f32 %v409, 20.0
      %v418 = vmin.f32 %v410, 20.0
      %v419 = vmul.f32 %v411, 1.442695
      %v420 = vpow.pop %v419
      %v421 = vmul.f32 %v412, 1.442695
      %v422 = vpow.pop %v421
      %v423 = vmul.f32 %v413, 1.442695
      %v424 = vpow.pop %v423
      %v425 = vmul.f32 %v414, 1.442695
      %v426 = vpow.pop %v425
      %v427 = vmul.f32 %v415, 1.442695
      %v428 = vpow.pop %v427
      %v429 = vmul.f32 %v416, 1.442695
      %v430 = vpow.pop %v429
      %v431 = vmul.f32 %v417, 1.442695
      %v432 = vpow.pop %v431
      %v433 = vmul.f32 %v418, 1.442695
      %v434 = vpow.pop %v433
      %v435 = vadd.f32 %v420, 2.0
      %v436 = vadd.f32 %v422, 2.0
      %v437 = vadd.f32 %v424, 2.0
      %v438 = vadd.f32 %v426, 2.0
      %v439 = vadd.f32 %v428, 2.0
      %v440 = vadd.f32 %v430, 2.0
      %v441 = vadd.f32 %v432, 2.0
      %v442 = vadd.f32 %v434, 2.0
      %v443 = vmul.f32 %v420, %v435
      %v444 = vmul.f32 %v422, %v436
      %v445 = vmul.f32 %v424, %v437
      %v446 = vmul.f32 %v426, %v438
      %v447 = vmul.f32 %v428, %v439
      %v448 = vmul.f32 %v430, %v440
      %v449 = vmul.f32 %v432, %v441
      %v450 = vmul.f32 %v434, %v442
      %v451 = vadd.f32 %v443, 2.0
      %v452 = vadd.f32 %v444, 2.0
      %v453 = vadd.f32 %v445, 2.0
      %v454 = vadd.f32 %v446, 2.0
      %v455 = vadd.f32 %v447, 2.0
      %v456 = vadd.f32 %v448, 2.0
      %v457 = vadd.f32 %v449, 2.0
      %v458 = vadd.f32 %v450, 2.0
      %v459 = vrcp.pop %v451
      %v460 = vrcp.pop %v452
      %v461 = vrcp.pop %v453
      %v462 = vrcp.pop %v454
      %v463 = vrcp.pop %v455
      %v464 = vrcp.pop %v456
      %v465 = vrcp.pop %v457
      %v466 = vrcp.pop %v458
      %v467 = vmul.f32 %v443, %v459
      %v468 = vmul.f32 %v444, %v460
      %v469 = vmul.f32 %v445, %v461
      %v470 = vmul.f32 %v446, %v462
      %v471 = vmul.f32 %v447, %v463
      %v472 = vmul.f32 %v448, %v464
      %v473 = vmul.f32 %v449, %v465
      %v474 = vmul.f32 %v450, %v466
      %v475 = vmul.f32 %v403, %v467
      %v476 = vmul.f32 %v404, %v468
      %v477 = vmul.f32 %v405, %v469
      %v478 = vmul.f32 %v406, %v470
      %v479 = vmul.f32 %v407, %v471
      %v480 = vmul.f32 %v408, %v472
      %v481 = vmul.f32 %v409, %v473
      %v482 = vmul.f32 %v410, %v474
      %v483 = vpack.c.bf16 %v475, %v475
      %v484 = vpack.c.bf16 %v476, %v476
      %v485 = vpack.c.bf16 %v477, %v477
      %v486 = vpack.c.bf16 %v478, %v478
      %v487 = vpack.c.bf16 %v479, %v479
      %v488 = vpack.c.bf16 %v480, %v480
      %v489 = vpack.c.bf16 %v481, %v481
      %v490 = vpack.c.bf16 %v482, %v482
      %vm491 = vcmask 60416
      %492 = vst.msk [vmem:[%s248] sm:$0xf] %vm491, %v483
      %493 = vst.msk [vmem:[%s248 + $0x4] sm:$0xf] %vm491, %v484
      %494 = vst.msk [vmem:[%s248 + $0x8] sm:$0xf] %vm491, %v485
      %495 = vst.msk [vmem:[%s248 + $0xc] sm:$0xf] %vm491, %v486
      %496 = vst.msk [vmem:[%s248 + $0x10] sm:$0xf] %vm491, %v487
      %497 = vst.msk [vmem:[%s248 + $0x14] sm:$0xf] %vm491, %v488
      %498 = vst.msk [vmem:[%s248 + $0x18] sm:$0xf] %vm491, %v489
      %499 = vst.msk [vmem:[%s248 + $0x1c] sm:$0xf] %vm491, %v490
      %s500 = smul.u32 8, %s16
      %p501 = scmp.lt.s32.totalorder %s500, 15
      %s502 = scalar_select %p501, %s500, 15
      %s503 = smul.addr %s502, 4
      %s504 = scalar_lea.vmem %s5, %s503
      // Predicated region
      $region41: #{resblock_body_forward.12} parent=39 // pred_check
        %p505 = pneg %p149
      $region42: #{resblock_body_forward.12} parent=39 // pred_check_branch
        %507 = sbr.rel (%p505) target = $region44
      $region43: #{resblock_body_forward.12} parent=39 // pred_region
        %s508 = smul.u32 8, %s16
      $region44: #{resblock_body_forward.12} parent=39 // pred_fallthru
        _
    $region40: #{resblock_body_forward.12} parent=5 // pred_fallthru
      _
    %p509 = scmp.le.s32.totalorder 2, %s11
    // Predicated region
    $region45: #{resblock_body_forward.12} parent=5 // pred_check
      %p510 = pneg %p509
    $region46: #{resblock_body_forward.12} parent=5 // pred_check_branch
      %512 = sbr.rel (%p510) target = $region48
    $region47: #{resblock_body_forward.12} parent=5 // pred_region
      %s513 = ssub.s32 %s11, 2
      // Predicated region
      $region49: #{resblock_body_forward.12} parent=47 // pred_check
        %p514 = pneg %p155
      $region50: #{resblock_body_forward.12} parent=47 // pred_check_branch
        %516 = sbr.rel (%p514) target = $region52
      $region51: #{resblock_body_forward.12} parent=47 // pred_region
        %s517 = smul.u32 8, %s17
        %p518 = scmp.lt.s32.totalorder %s517, 15
        %s519 = scalar_select %p518, %s517, 15
        %s520 = smul.addr %s519, 4
        %s521 = scalar_lea.vmem %s5, %s520
      $region52: #{resblock_body_forward.12} parent=47 // pred_fallthru
        _
    $region48: #{resblock_body_forward.12} parent=5 // pred_fallthru
      _
  $region6: #{resblock_body_forward.12} parent=0 // loop_footer
    %s15 = sadd.s32 1, %s11
  $region7: #{resblock_body_forward.12} parent=0 // loop_footer_branch
    %10 = sbr.rel target = $region3
  $region8: #{resblock_body_forward.12} parent=0 // loop_exit
    _

// kernel: resblock_body_forward.11
$region0: #{resblock_body_forward.11}
  #allocation0 [shape = 'u32[]', space=smem, size = 0x4, offset = 0x4, fixed_abs, tag = 'smem constant byte address 0x4 - core index']
  #allocation1 [shape = 'u32[72,128]{1,0:T(1,128)}', space=vmem, size = 0x9000, scoped, tag = 'internal scratch']
  %s0 = inlined_call_operand.vmem [shape: bf16[2,1,110,4], index: 0, kind: input, shape index: {}]
  %s1 = inlined_call_operand.vmem [shape: bf16[9,4,8], index: 1, kind: input, shape index: {}]
  %s2 = inlined_call_operand.vmem [shape: f32[1,8], index: 2, kind: input, shape index: {}]
  %s3 = inlined_call_operand.vmem [shape: bf16[2,80,8], index: 3, kind: output, shape index: {}]
  %s4 = sld [smem:[#allocation0]]
  $region45: #{resblock_body_forward.11} parent=0
    _
  %s6 = ssub.s32 1, %s4
  %s7 = scalar_select 0, %s6, %s4
  loop: start=0, step=1, limit=4
  $region2: #{resblock_body_forward.11} parent=0 // loop_pre_header
    _
  $region3: #{resblock_body_forward.11} parent=0 // loop_header
    %s9 = sphi 0, %s13
    %p10 = scmp.ge.s32.totalorder %s9, 4
    %s19 = sphi 0, %s21
    %s22 = sphi 0, %s19
    %s23 = sphi 0, %s22
    %s39 = sphi 0, %s23
    %s43 = sphi 0, %s43
    %s45 = sphi 0, %s43
    %s46 = sphi 0, %s45
    %s60 = sphi 0, %s46
    %s64 = sphi 0, %s64
    %s66 = sphi 0, %s64
    %s67 = sphi 0, %s66
    %s81 = sphi 0, %s67
    %s87 = sphi 0, %s89
    %s90 = sphi 0, %s87
    %s91 = sphi 0, %s90
    %s107 = sphi 0, %s91
  $region4: #{resblock_body_forward.11} parent=0 // loop_header_branch
    %12 = sbr.rel (%p10) target = $region8
  $region5: #{resblock_body_forward.11} parent=0 // loop_body
    %s14 = ssub.s32 %s9, 1
    %s15 = ssub.s32 %s9, 2
    %s16 = sadd.s32 %s9, 1
    %s17 = ssub.s32 %s9, %s16
    %p18 = scmp.eq.s32.totalorder %s17, 0
    %s20 = sadd.s32 %s19, 1
    %s21 = scalar_select %p18, %s19, %s20
    %p24 = pneg %p18
    %p25 = scmp.eq.s32.totalorder %s9, 1
    %p26 = por %p24, %p25
    %p27 = scmp.ne.s32.totalorder %s19, %s22
    %p28 = scmp.eq.s32.totalorder %s9, 0
    %p29 = por %p27, %p28
    %p30 = scmp.ne.s32.totalorder %s19, %s22
    %p31 = scmp.eq.s32.totalorder %s14, 1
    %p32 = por %p30, %p31
    %p33 = scmp.ne.s32.totalorder %s22, %s23
    %p34 = scmp.eq.s32.totalorder %s14, 0
    %p35 = por %p33, %p34
    %p36 = scmp.ne.s32.totalorder %s22, %s23
    %p37 = scmp.eq.s32.totalorder %s15, 1
    %p38 = por %p36, %p37
    %p40 = scmp.ne.s32.totalorder %s23, %s39
    %p41 = scmp.eq.s32.totalorder %s15, 0
    %p42 = por %p40, %p41
    %s44 = sadd.s32 %s43, 1
    %p47 = scmp.eq.s32.totalorder %s9, 1
    %p48 = scmp.ne.s32.totalorder %s43, %s45
    %p49 = scmp.eq.s32.totalorder %s9, 0
    %p50 = por %p48, %p49
    %p51 = scmp.ne.s32.totalorder %s43, %s45
    %p52 = scmp.eq.s32.totalorder %s14, 1
    %p53 = por %p51, %p52
    %p54 = scmp.ne.s32.totalorder %s45, %s46
    %p55 = scmp.eq.s32.totalorder %s14, 0
    %p56 = por %p54, %p55
    %p57 = scmp.ne.s32.totalorder %s45, %s46
    %p58 = scmp.eq.s32.totalorder %s15, 1
    %p59 = por %p57, %p58
    %p61 = scmp.ne.s32.totalorder %s46, %s60
    %p62 = scmp.eq.s32.totalorder %s15, 0
    %p63 = por %p61, %p62
    %s65 = sadd.s32 %s64, 1
    %p68 = scmp.eq.s32.totalorder %s9, 1
    %p69 = scmp.ne.s32.totalorder %s64, %s66
    %p70 = scmp.eq.s32.totalorder %s9, 0
    %p71 = por %p69, %p70
    %p72 = scmp.ne.s32.totalorder %s64, %s66
    %p73 = scmp.eq.s32.totalorder %s14, 1
    %p74 = por %p72, %p73
    %p75 = scmp.ne.s32.totalorder %s66, %s67
    %p76 = scmp.eq.s32.totalorder %s14, 0
    %p77 = por %p75, %p76
    %p78 = scmp.ne.s32.totalorder %s66, %s67
    %p79 = scmp.eq.s32.totalorder %s15, 1
    %p80 = por %p78, %p79
    %p82 = scmp.ne.s32.totalorder %s67, %s81
    %p83 = scmp.eq.s32.totalorder %s15, 0
    %p84 = por %p82, %p83
    %s85 = ssub.s32 %s9, %s16
    %p86 = scmp.eq.s32.totalorder %s85, 0
    %s88 = sadd.s32 %s87, 1
    %s89 = scalar_select %p86, %s87, %s88
    %p92 = pneg %p86
    %p93 = scmp.eq.s32.totalorder %s9, 1
    %p94 = por %p92, %p93
    %p95 = scmp.ne.s32.totalorder %s87, %s90
    %p96 = scmp.eq.s32.totalorder %s9, 0
    %p97 = por %p95, %p96
    %p98 = scmp.ne.s32.totalorder %s87, %s90
    %p99 = scmp.eq.s32.totalorder %s14, 1
    %p100 = por %p98, %p99
    %p101 = scmp.ne.s32.totalorder %s90, %s91
    %p102 = scmp.eq.s32.totalorder %s14, 0
    %p103 = por %p101, %p102
    %p104 = scmp.ne.s32.totalorder %s90, %s91
    %p105 = scmp.eq.s32.totalorder %s15, 1
    %p106 = por %p104, %p105
    %p108 = scmp.ne.s32.totalorder %s91, %s107
    %p109 = scmp.eq.s32.totalorder %s15, 0
    %p110 = por %p108, %p109
    %p111 = scmp.le.s32.totalorder 1, %s9
    %p112 = scmp.lt.s32.totalorder %s9, 3
    %p113 = pnand %p111, %p112
    %p114 = pneg %p113
    // Predicated region
    $region9: #{resblock_body_forward.11} parent=5 // pred_check
      _
    $region10: #{resblock_body_forward.11} parent=5 // pred_check_branch
      %116 = sbr.rel (%p113) target = $region12
    $region11: #{resblock_body_forward.11} parent=5 // pred_region
      %s117 = ssub.s32 %s9, 1
      // Predicated region
      $region13: #{resblock_body_forward.11} parent=11 // pred_check
        %p118 = pneg %p56
      $region14: #{resblock_body_forward.11} parent=11 // pred_check_branch
        %120 = sbr.rel (%p118) target = $region16
      $region15: #{resblock_body_forward.11} parent=11 // pred_region
        _
      $region16: #{resblock_body_forward.11} parent=11 // pred_fallthru
        _
      // Predicated region
      $region17: #{resblock_body_forward.11} parent=11 // pred_check
        %p121 = pneg %p77
      $region18: #{resblock_body_forward.11} parent=11 // pred_check_branch
        %123 = sbr.rel (%p121) target = $region20
      $region19: #{resblock_body_forward.11} parent=11 // pred_region
        _
      $region20: #{resblock_body_forward.11} parent=11 // pred_fallthru
        _
    $region12: #{resblock_body_forward.11} parent=5 // pred_fallthru
      _
    %p124 = scmp.lt.s32.totalorder %s9, 2
    // Predicated region
    $region21: #{resblock_body_forward.11} parent=5 // pred_check
      %p125 = pneg %p124
    $region22: #{resblock_body_forward.11} parent=5 // pred_check_branch
      %127 = sbr.rel (%p125) target = $region24
    $region23: #{resblock_body_forward.11} parent=5 // pred_region
      // Predicated region
      $region25: #{resblock_body_forward.11} parent=23 // pred_check
        %p128 = pneg %p29
      $region26: #{resblock_body_forward.11} parent=23 // pred_check_branch
        %130 = sbr.rel (%p128) target = $region28
      $region27: #{resblock_body_forward.11} parent=23 // pred_region
        %p131 = scmp.lt.s32.totalorder %s9, 1
        %s132 = scalar_select %p131, %s9, 1
        %s133 = smul.addr %s132, 14
        %s134 = smul.addr %s133, 4
        %s135 = scalar_lea.vmem %s0, %s134
      $region28: #{resblock_body_forward.11} parent=23 // pred_fallthru
        _
    $region24: #{resblock_body_forward.11} parent=5 // pred_fallthru
      _
    %p136 = scmp.le.s32.totalorder 1, %s9
    %p137 = scmp.lt.s32.totalorder %s9, 3
    %p138 = pnand %p136, %p137
    %p139 = pneg %p138
    // Predicated region
    $region29: #{resblock_body_forward.11} parent=5 // pred_check
      _
    $region30: #{resblock_body_forward.11} parent=5 // pred_check_branch
      %141 = sbr.rel (%p138) target = $region32
    $region31: #{resblock_body_forward.11} parent=5 // pred_region
      %s142 = ssub.s32 %s9, 1
      %p143 = scmp.lt.s32.totalorder %s14, 1
      %s144 = scalar_select %p143, %s14, 1
      %s145 = smul.addr %s144, 14
      %s146 = smul.addr %s145, 4
      %s147 = scalar_lea.vmem %s0, %s146
      %p148 = pneg %p35
      %p149 = pneg %p32
      %p150 = pneg %p56
      %p151 = pneg %p53
      %p152 = pneg %p77
      %p153 = pneg %p74
      %p154 = pneg %p103
      %p155 = pneg %p100
      %p156 = scmp.lt.s32.totalorder %s14, 1
      %s157 = scalar_select %p156, %s14, 1
      %s158 = smul.addr %s157, 10
      %s159 = smul.addr %s158, 4
      %s160 = scalar_lea.vmem %s3, %s159
      %p161 = scmp.lt.s32.totalorder %s14, 1
      %s162 = scalar_select %p161, %s14, 1
      %s163 = smul.addr %s162, 14
      %s164 = smul.addr %s163, 4
      %s165 = scalar_lea.vmem %s0, %s164
      %p166 = scmp.lt.s32.totalorder %s14, 1
      %s167 = scalar_select %p166, %s14, 1
      %s168 = smul.addr %s167, 10
      %s169 = smul.addr %s168, 4
      %s170 = scalar_lea.vmem %s3, %s169
      %v172 = vld [vmem:[%s165] sm:$0xf]
      %v173 = vld [vmem:[%s165 + $0x4] sm:$0xf]
      %v174 = vld [vmem:[%s165 + $0x8] sm:$0xf]
      %v175 = vld [vmem:[%s165 + $0xc] sm:$0xf]
      %v176 = vld [vmem:[%s165 + $0x10] sm:$0xf]
      %v177 = vld [vmem:[%s165 + $0x14] sm:$0xf]
      %v178 = vld [vmem:[%s165 + $0x18] sm:$0xf]
      %v179 = vld [vmem:[%s165 + $0x1c] sm:$0xf]
      %v180 = vld [vmem:[%s165 + $0x20] sm:$0xf]
      %v181 = vld [vmem:[%s165 + $0x24] sm:$0xf]
      %v182 = vld [vmem:[%s165 + $0x28] sm:$0xf]
      %v183 = vld [vmem:[%s165 + $0x2c] sm:$0xf]
      %v184 = vld [vmem:[%s165 + $0x30] sm:$0xf]
      %v185 = vld [vmem:[%s1] sm:$0x3]
      %s186 = scalar_lea.vmem %s1, 2
      %v187 = vld [vmem:[%s186] sm:$0x3]
      %v199 = vunpack.c.l.b16 %v172
      %v200 = vunpack.c.l.b16 %v173
      %v201 = vunpack.c.l.b16 %v174
      %v202 = vunpack.c.l.b16 %v175
      %v203 = vunpack.c.l.b16 %v176
      %v204 = vunpack.c.l.b16 %v177
      %v205 = vunpack.c.l.b16 %v178
      %v206 = vunpack.c.l.b16 %v179
      %v207 = vunpack.c.l.b16 %v180
      %v208 = vunpack.c.l.b16 %v181
      %v209 = vunpack.c.l.b16 %v182
      %v210 = vpack.c.b16 %v200, %v199
      %v211 = vpack.c.b16 %v202, %v201
      %v212 = vpack.c.b16 %v204, %v203
      %v213 = vpack.c.b16 %v206, %v205
      %v214 = vpack.c.b16 %v208, %v207
      %v215 = vpack.c.b16 %v209, %v209
      %vm216 = vsmask.f32 7424
      %v218 = vshrl.u32 %v210, 16
      %v220 = vshll.u32 %v210, 16
      %v222 = vrot.slane %v220, 1
      %v223 = vor.u32 %v218, %v222
      %v225 = vshll.u32 %v211, 16
      %v227 = vrot.slane %v225, 1
      %v228 = vsel %vm216, %v223, %v227
      %v229 = vshrl.u32 %v211, 16
      %v231 = vor.u32 %v229, %v227
      %v233 = vshll.u32 %v212, 16
      %v235 = vrot.slane %v233, 1
      %v236 = vsel %vm216, %v231, %v235
      %v237 = vshrl.u32 %v212, 16
      %v239 = vor.u32 %v237, %v235
      %v241 = vshll.u32 %v213, 16
      %v243 = vrot.slane %v241, 1
      %v244 = vsel %vm216, %v239, %v243
      %v245 = vshrl.u32 %v213, 16
      %v247 = vor.u32 %v245, %v243
      %v249 = vshll.u32 %v214, 16
      %v251 = vrot.slane %v249, 1
      %v252 = vsel %vm216, %v247, %v251
      %v253 = vshrl.u32 %v214, 16
      %v255 = vor.u32 %v253, %v251
      %v257 = vshll.u32 %v215, 16
      %v259 = vrot.slane %v257, 1
      %v260 = vsel %vm216, %v255, %v259
      %vm261 = vcmask 31744
      %v263 = vsel %vm261, %v228, 0
      %v266 = vsel %vm261, %v236, 0
      %v269 = vsel %vm261, %v244, 0
      %v272 = vsel %vm261, %v252, 0
      %v275 = vsel %vm261, %v260, 0
      %vm277 = vcmask 1041408
      %v279 = vsel %vm277, %v187, 0
      %281 = vmatpush.bf16.msra.mxu0 0
      %282 = vmatpush.bf16.msra.mxu0 0
      %283 = vmatpush.bf16.msra.mxu0 0
      %284 = vmatpush.bf16.msra.mxu0 0
      %285 = vmatpush.bf16.msra.mxu0 0
      %286 = vmatpush.bf16.msra.mxu0 0
      %287 = vmatpush.bf16.msra.mxu0 0
      %288 = vmatpush.bf16.msra.mxu0 %v279
      %289 = vmatmul.bf16.gmra.mxu0 %v263
      %v290 = vpop.f32.mrf.mxu0
      %v291 = vadd.f32 0.0, %v290
      %v292 = vpop.f32.mrf.mxu0
      %v293 = vadd.f32 0.0, %v292
      %294 = vmatmul.bf16.gmra.mxu0 %v266
      %v295 = vpop.f32.mrf.mxu0
      %v296 = vadd.f32 0.0, %v295
      %v297 = vpop.f32.mrf.mxu0
      %v298 = vadd.f32 0.0, %v297
      %299 = vmatmul.bf16.gmra.mxu0 %v269
      %v300 = vpop.f32.mrf.mxu0
      %v301 = vadd.f32 0.0, %v300
      %v302 = vpop.f32.mrf.mxu0
      %v303 = vadd.f32 0.0, %v302
      %304 = vmatmul.bf16.gmra.mxu0 %v272
      %v305 = vpop.f32.mrf.mxu0
      %v306 = vadd.f32 0.0, %v305
      %v307 = vpop.f32.mrf.mxu0
      %v308 = vadd.f32 0.0, %v307
      %309 = vmatmul.bf16.gmra.mxu0 %v275
      %v310 = vpop.f32.mrf.mxu0
      %v311 = vadd.f32 0.0, %v310
      %v312 = vpop.f32.mrf.mxu0
      %v313 = vadd.f32 0.0, %v312
      %314 = vdwg.mxu0
      %v315 = vsel %vm261, %v210, 0
      %v317 = vsel %vm261, %v211, 0
      %v319 = vsel %vm261, %v212, 0
      %v321 = vsel %vm261, %v213, 0
      %v323 = vsel %vm261, %v214, 0
      %v326 = vsel %vm277, %v185, 0
      %328 = vmatpush.bf16.msra.mxu0 0
      %329 = vmatpush.bf16.msra.mxu0 0
      %330 = vmatpush.bf16.msra.mxu0 0
      %331 = vmatpush.bf16.msra.mxu0 0
      %332 = vmatpush.bf16.msra.mxu0 0
      %333 = vmatpush.bf16.msra.mxu0 0
      %334 = vmatpush.bf16.msra.mxu0 0
      %335 = vmatpush.bf16.msra.mxu0 %v326
      %336 = vmatmul.bf16.gmra.mxu0 %v315
      %v337 = vpop.f32.mrf.mxu0
      %v338 = vadd.f32 %v291, %v337
      %v339 = vpop.f32.mrf.mxu0
      %v340 = vadd.f32 %v293, %v339
      %341 = vmatmul.bf16.gmra.mxu0 %v317
      %v342 = vpop.f32.mrf.mxu0
      %v343 = vadd.f32 %v296, %v342
      %v344 = vpop.f32.mrf.mxu0
      %v345 = vadd.f32 %v298, %v344
      %346 = vmatmul.bf16.gmra.mxu0 %v319
      %v347 = vpop.f32.mrf.mxu0
      %v348 = vadd.f32 %v301, %v347
      %v349 = vpop.f32.mrf.mxu0
      %v350 = vadd.f32 %v303, %v349
      %351 = vmatmul.bf16.gmra.mxu0 %v321
      %v352 = vpop.f32.mrf.mxu0
      %v353 = vadd.f32 %v306, %v352
      %v354 = vpop.f32.mrf.mxu0
      %v355 = vadd.f32 %v308, %v354
      %356 = vmatmul.bf16.gmra.mxu0 %v323
      %v357 = vpop.f32.mrf.mxu0
      %v358 = vadd.f32 %v311, %v357
      %v359 = vpop.f32.mrf.mxu0
      %v360 = vadd.f32 %v313, %v359
      %361 = vdwg.mxu0
      %s362 = scalar_lea.vmem %s1, 4
      %v363 = vld [vmem:[%s362] sm:$0x3]
      %vm364 = vcmask 1046528
      %v365 = vrot.slane %v210, 1
      %v366 = vrot.slane %v211, 1
      %v367 = vsel %vm364, %v365, %v366
      %v368 = vrot.slane %v212, 1
      %v369 = vsel %vm364, %v366, %v368
      %v370 = vrot.slane %v213, 1
      %v371 = vsel %vm364, %v368, %v370
      %v372 = vrot.slane %v214, 1
      %v373 = vsel %vm364, %v370, %v372
      %v374 = vrot.slane %v215, 1
      %v375 = vsel %vm364, %v372, %v374
      %v377 = vsel %vm261, %v367, 0
      %v380 = vsel %vm261, %v369, 0
      %v383 = vsel %vm261, %v371, 0
      %v386 = vsel %vm261, %v373, 0
      %v389 = vsel %vm261, %v375, 0
      %v392 = vsel %vm277, %v363, 0
      %394 = vmatpush.bf16.msra.mxu0 0
      %395 = vmatpush.bf16.msra.mxu0 0
      %396 = vmatpush.bf16.msra.mxu0 0
      %397 = vmatpush.bf16.msra.mxu0 0
      %398 = vmatpush.bf16.msra.mxu0 0
      %399 = vmatpush.bf16.msra.mxu0 0
      %400 = vmatpush.bf16.msra.mxu0 0
      %401 = vmatpush.bf16.msra.mxu0 %v392
      %402 = vmatmul.bf16.gmra.mxu0 %v377
      %v403 = vpop.f32.mrf.mxu0
      %v404 = vadd.f32 0.0, %v403
      %v405 = vpop.f32.mrf.mxu0
      %v406 = vadd.f32 0.0, %v405
      %407 = vmatmul.bf16.gmra.mxu0 %v380
      %v408 = vpop.f32.mrf.mxu0
      %v409 = vadd.f32 0.0, %v408
      %v410 = vpop.f32.mrf.mxu0
      %v411 = vadd.f32 0.0, %v410
      %412 = vmatmul.bf16.gmra.mxu0 %v383
      %v413 = vpop.f32.mrf.mxu0
      %v414 = vadd.f32 0.0, %v413
      %v415 = vpop.f32.mrf.mxu0
      %v416 = vadd.f32 0.0, %v415
      %417 = vmatmul.bf16.gmra.mxu0 %v386
      %v418 = vpop.f32.mrf.mxu0
      %v419 = vadd.f32 0.0, %v418
      %v420 = vpop.f32.mrf.mxu0
      %v421 = vadd.f32 0.0, %v420
      %422 = vmatmul.bf16.gmra.mxu0 %v389
      %v423 = vpop.f32.mrf.mxu0
      %v424 = vadd.f32 0.0, %v423
      %v425 = vpop.f32.mrf.mxu0
      %v426 = vadd.f32 0.0, %v425
      %427 = vdwg.mxu0
      %v428 = vadd.f32 %v338, %v404
      %v429 = vadd.f32 %v340, %v406
      %v430 = vadd.f32 %v343, %v409
      %v431 = vadd.f32 %v345, %v411
      %v432 = vadd.f32 %v348, %v414
      %v433 = vadd.f32 %v350, %v416
      %v434 = vadd.f32 %v353, %v419
      %v435 = vadd.f32 %v355, %v421
      %v436 = vadd.f32 %v358, %v424
      %v437 = vadd.f32 %v360, %v426
      %s438 = scalar_lea.vmem %s1, 6
      %v439 = vld [vmem:[%s438] sm:$0x3]
      %v441 = vunpack.c.l.b16 %v183
      %v442 = vpack.c.b16 %v201, %v200
      %v443 = vpack.c.b16 %v203, %v202
      %v444 = vpack.c.b16 %v205, %v204
      %v445 = vpack.c.b16 %v207, %v206
      %v446 = vpack.c.b16 %v209, %v208
      %v447 = vpack.c.b16 %v441, %v441
      %v448 = vrot.slane %v442, 1
      %v449 = vrot.slane %v443, 1
      %v450 = vsel %vm364, %v448, %v449
      %v451 = vrot.slane %v444, 1
      %v452 = vsel %vm364, %v449, %v451
      %v453 = vrot.slane %v445, 1
      %v454 = vsel %vm364, %v451, %v453
      %v455 = vrot.slane %v446, 1
      %v456 = vsel %vm364, %v453, %v455
      %v457 = vrot.slane %v447, 1
      %v458 = vsel %vm364, %v455, %v457
      %v460 = vsel %vm261, %v450, 0
      %v463 = vsel %vm261, %v452, 0
      %v466 = vsel %vm261, %v454, 0
      %v469 = vsel %vm261, %v456, 0
      %v472 = vsel %vm261, %v458, 0
      %v475 = vsel %vm277, %v439, 0
      %477 = vmatpush.bf16.msra.mxu0 0
      %478 = vmatpush.bf16.msra.mxu0 0
      %479 = vmatpush.bf16.msra.mxu0 0
      %480 = vmatpush.bf16.msra.mxu0 0
      %481 = vmatpush.bf16.msra.mxu0 0
      %482 = vmatpush.bf16.msra.mxu0 0
      %483 = vmatpush.bf16.msra.mxu0 0
      %484 = vmatpush.bf16.msra.mxu0 %v475
      %485 = vmatmul.bf16.gmra.mxu0 %v460
      %v486 = vpop.f32.mrf.mxu0
      %v487 = vadd.f32 0.0, %v486
      %v488 = vpop.f32.mrf.mxu0
      %v489 = vadd.f32 0.0, %v488
      %490 = vmatmul.bf16.gmra.mxu0 %v463
      %v491 = vpop.f32.mrf.mxu0
      %v492 = vadd.f32 0.0, %v491
      %v493 = vpop.f32.mrf.mxu0
      %v494 = vadd.f32 0.0, %v493
      %495 = vmatmul.bf16.gmra.mxu0 %v466
      %v496 = vpop.f32.mrf.mxu0
      %v497 = vadd.f32 0.0, %v496
      %v498 = vpop.f32.mrf.mxu0
      %v499 = vadd.f32 0.0, %v498
      %500 = vmatmul.bf16.gmra.mxu0 %v469
      %v501 = vpop.f32.mrf.mxu0
      %v502 = vadd.f32 0.0, %v501
      %v503 = vpop.f32.mrf.mxu0
      %v504 = vadd.f32 0.0, %v503
      %505 = vmatmul.bf16.gmra.mxu0 %v472
      %v506 = vpop.f32.mrf.mxu0
      %v507 = vadd.f32 0.0, %v506
      %v508 = vpop.f32.mrf.mxu0
      %v509 = vadd.f32 0.0, %v508
      %510 = vdwg.mxu0
      %v511 = vadd.f32 %v428, %v487
      %v512 = vadd.f32 %v429, %v489
      %v513 = vadd.f32 %v430, %v492
      %v514 = vadd.f32 %v431, %v494
      %v515 = vadd.f32 %v432, %v497
      %v516 = vadd.f32 %v433, %v499
      %v517 = vadd.f32 %v434, %v502
      %v518 = vadd.f32 %v435, %v504
      %v519 = vadd.f32 %v436, %v507
      %v520 = vadd.f32 %v437, %v509
      %s521 = scalar_lea.vmem %s1, 8
      %v522 = vld [vmem:[%s521] sm:$0x3]
      %vm523 = vsmask.f32 6400
      %v525 = vshrl.u32 %v442, 16
      %v527 = vrot.slane %v525, 1
      %v528 = vshll.u32 %v442, 16
      %v530 = vrot.slane %v528, 2
      %v531 = vor.u32 %v527, %v530
      %v533 = vshrl.u32 %v443, 16
      %v535 = vrot.slane %v533, 1
      %v536 = vshll.u32 %v443, 16
      %v538 = vrot.slane %v536, 2
      %v539 = vor.u32 %v535, %v538
      %v540 = vsel %vm523, %v531, %v539
      %v542 = vshrl.u32 %v444, 16
      %v544 = vrot.slane %v542, 1
      %v545 = vshll.u32 %v444, 16
      %v547 = vrot.slane %v545, 2
      %v548 = vor.u32 %v544, %v547
      %v549 = vsel %vm523, %v539, %v548
      %v551 = vshrl.u32 %v445, 16
      %v553 = vrot.slane %v551, 1
      %v554 = vshll.u32 %v445, 16
      %v556 = vrot.slane %v554, 2
      %v557 = vor.u32 %v553, %v556
      %v558 = vsel %vm523, %v548, %v557
      %v560 = vshrl.u32 %v446, 16
      %v562 = vrot.slane %v560, 1
      %v563 = vshll.u32 %v446, 16
      %v565 = vrot.slane %v563, 2
      %v566 = vor.u32 %v562, %v565
      %v567 = vsel %vm523, %v557, %v566
      %v569 = vshrl.u32 %v447, 16
      %v571 = vrot.slane %v569, 1
      %v572 = vshll.u32 %v447, 16
      %v574 = vrot.slane %v572, 2
      %v575 = vor.u32 %v571, %v574
      %v576 = vsel %vm523, %v566, %v575
      %v578 = vsel %vm261, %v540, 0
      %v581 = vsel %vm261, %v549, 0
      %v584 = vsel %vm261, %v558, 0
      %v587 = vsel %vm261, %v567, 0
      %v590 = vsel %vm261, %v576, 0
      %v593 = vsel %vm277, %v522, 0
      %595 = vmatpush.bf16.msra.mxu0 0
      %596 = vmatpush.bf16.msra.mxu0 0
      %597 = vmatpush.bf16.msra.mxu0 0
      %598 = vmatpush.bf16.msra.mxu0 0
      %599 = vmatpush.bf16.msra.mxu0 0
      %600 = vmatpush.bf16.msra.mxu0 0
      %601 = vmatpush.bf16.msra.mxu0 0
      %602 = vmatpush.bf16.msra.mxu0 %v593
      %603 = vmatmul.bf16.gmra.mxu0 %v578
      %v604 = vpop.f32.mrf.mxu0
      %v605 = vadd.f32 0.0, %v604
      %v606 = vpop.f32.mrf.mxu0
      %v607 = vadd.f32 0.0, %v606
      %608 = vmatmul.bf16.gmra.mxu0 %v581
      %v609 = vpop.f32.mrf.mxu0
      %v610 = vadd.f32 0.0, %v609
      %v611 = vpop.f32.mrf.mxu0
      %v612 = vadd.f32 0.0, %v611
      %613 = vmatmul.bf16.gmra.mxu0 %v584
      %v614 = vpop.f32.mrf.mxu0
      %v615 = vadd.f32 0.0, %v614
      %v616 = vpop.f32.mrf.mxu0
      %v617 = vadd.f32 0.0, %v616
      %618 = vmatmul.bf16.gmra.mxu0 %v587
      %v619 = vpop.f32.mrf.mxu0
      %v620 = vadd.f32 0.0, %v619
      %v621 = vpop.f32.mrf.mxu0
      %v622 = vadd.f32 0.0, %v621
      %623 = vmatmul.bf16.gmra.mxu0 %v590
      %v624 = vpop.f32.mrf.mxu0
      %v625 = vadd.f32 0.0, %v624
      %v626 = vpop.f32.mrf.mxu0
      %v627 = vadd.f32 0.0, %v626
      %628 = vdwg.mxu0
      %v629 = vadd.f32 %v511, %v605
      %v630 = vadd.f32 %v512, %v607
      %v631 = vadd.f32 %v513, %v610
      %v632 = vadd.f32 %v514, %v612
      %v633 = vadd.f32 %v515, %v615
      %v634 = vadd.f32 %v516, %v617
      %v635 = vadd.f32 %v517, %v620
      %v636 = vadd.f32 %v518, %v622
      %v637 = vadd.f32 %v519, %v625
      %v638 = vadd.f32 %v520, %v627
      %s639 = scalar_lea.vmem %s1, 10
      %v640 = vld [vmem:[%s639] sm:$0x3]
      %vm641 = vcmask 1045504
      %v642 = vrot.slane %v442, 2
      %v643 = vrot.slane %v443, 2
      %v644 = vsel %vm641, %v642, %v643
      %v645 = vrot.slane %v444, 2
      %v646 = vsel %vm641, %v643, %v645
      %v647 = vrot.slane %v445, 2
      %v648 = vsel %vm641, %v645, %v647
      %v649 = vrot.slane %v446, 2
      %v650 = vsel %vm641, %v647, %v649
      %v651 = vrot.slane %v447, 2
      %v652 = vsel %vm641, %v649, %v651
      %v654 = vsel %vm261, %v644, 0
      %v657 = vsel %vm261, %v646, 0
      %v660 = vsel %vm261, %v648, 0
      %v663 = vsel %vm261, %v650, 0
      %v666 = vsel %vm261, %v652, 0
      %v669 = vsel %vm277, %v640, 0
      %671 = vmatpush.bf16.msra.mxu0 0
      %672 = vmatpush.bf16.msra.mxu0 0
      %673 = vmatpush.bf16.msra.mxu0 0
      %674 = vmatpush.bf16.msra.mxu0 0
      %675 = vmatpush.bf16.msra.mxu0 0
      %676 = vmatpush.bf16.msra.mxu0 0
      %677 = vmatpush.bf16.msra.mxu0 0
      %678 = vmatpush.bf16.msra.mxu0 %v669
      %679 = vmatmul.bf16.gmra.mxu0 %v654
      %v680 = vpop.f32.mrf.mxu0
      %v681 = vadd.f32 0.0, %v680
      %v682 = vpop.f32.mrf.mxu0
      %v683 = vadd.f32 0.0, %v682
      %684 = vmatmul.bf16.gmra.mxu0 %v657
      %v685 = vpop.f32.mrf.mxu0
      %v686 = vadd.f32 0.0, %v685
      %v687 = vpop.f32.mrf.mxu0
      %v688 = vadd.f32 0.0, %v687
      %689 = vmatmul.bf16.gmra.mxu0 %v660
      %v690 = vpop.f32.mrf.mxu0
      %v691 = vadd.f32 0.0, %v690
      %v692 = vpop.f32.mrf.mxu0
      %v693 = vadd.f32 0.0, %v692
      %694 = vmatmul.bf16.gmra.mxu0 %v663
      %v695 = vpop.f32.mrf.mxu0
      %v696 = vadd.f32 0.0, %v695
      %v697 = vpop.f32.mrf.mxu0
      %v698 = vadd.f32 0.0, %v697
      %699 = vmatmul.bf16.gmra.mxu0 %v666
      %v700 = vpop.f32.mrf.mxu0
      %v701 = vadd.f32 0.0, %v700
      %v702 = vpop.f32.mrf.mxu0
      %v703 = vadd.f32 0.0, %v702
      %704 = vdwg.mxu0
      %v705 = vadd.f32 %v629, %v681
      %v706 = vadd.f32 %v630, %v683
      %v707 = vadd.f32 %v631, %v686
      %v708 = vadd.f32 %v632, %v688
      %v709 = vadd.f32 %v633, %v691
      %v710 = vadd.f32 %v634, %v693
      %v711 = vadd.f32 %v635, %v696
      %v712 = vadd.f32 %v636, %v698
      %v713 = vadd.f32 %v637, %v701
      %v714 = vadd.f32 %v638, %v703
      %s715 = scalar_lea.vmem %s1, 12
      %v716 = vld [vmem:[%s715] sm:$0x3]
      %v718 = vunpack.c.l.b16 %v184
      %v719 = vpack.c.b16 %v441, %v209
      %v720 = vpack.c.b16 %v718, %v718
      %v721 = vrot.slane %v211, 2
      %v722 = vrot.slane %v212, 2
      %v723 = vsel %vm641, %v721, %v722
      %v724 = vrot.slane %v213, 2
      %v725 = vsel %vm641, %v722, %v724
      %v726 = vrot.slane %v214, 2
      %v727 = vsel %vm641, %v724, %v726
      %v728 = vrot.slane %v719, 2
      %v729 = vsel %vm641, %v726, %v728
      %v730 = vrot.slane %v720, 2
      %v731 = vsel %vm641, %v728, %v730
      %v733 = vsel %vm261, %v723, 0
      %v736 = vsel %vm261, %v725, 0
      %v739 = vsel %vm261, %v727, 0
      %v742 = vsel %vm261, %v729, 0
      %v745 = vsel %vm261, %v731, 0
      %v748 = vsel %vm277, %v716, 0
      %750 = vmatpush.bf16.msra.mxu0 0
      %751 = vmatpush.bf16.msra.mxu0 0
      %752 = vmatpush.bf16.msra.mxu0 0
      %753 = vmatpush.bf16.msra.mxu0 0
      %754 = vmatpush.bf16.msra.mxu0 0
      %755 = vmatpush.bf16.msra.mxu0 0
      %756 = vmatpush.bf16.msra.mxu0 0
      %757 = vmatpush.bf16.msra.mxu0 %v748
      %758 = vmatmul.bf16.gmra.mxu0 %v733
      %v759 = vpop.f32.mrf.mxu0
      %v760 = vadd.f32 0.0, %v759
      %v761 = vpop.f32.mrf.mxu0
      %v762 = vadd.f32 0.0, %v761
      %763 = vmatmul.bf16.gmra.mxu0 %v736
      %v764 = vpop.f32.mrf.mxu0
      %v765 = vadd.f32 0.0, %v764
      %v766 = vpop.f32.mrf.mxu0
      %v767 = vadd.f32 0.0, %v766
      %768 = vmatmul.bf16.gmra.mxu0 %v739
      %v769 = vpop.f32.mrf.mxu0
      %v770 = vadd.f32 0.0, %v769
      %v771 = vpop.f32.mrf.mxu0
      %v772 = vadd.f32 0.0, %v771
      %773 = vmatmul.bf16.gmra.mxu0 %v742
      %v774 = vpop.f32.mrf.mxu0
      %v775 = vadd.f32 0.0, %v774
      %v776 = vpop.f32.mrf.mxu0
      %v777 = vadd.f32 0.0, %v776
      %778 = vmatmul.bf16.gmra.mxu0 %v745
      %v779 = vpop.f32.mrf.mxu0
      %v780 = vadd.f32 0.0, %v779
      %v781 = vpop.f32.mrf.mxu0
      %v782 = vadd.f32 0.0, %v781
      %783 = vdwg.mxu0
      %v784 = vadd.f32 %v705, %v760
      %v785 = vadd.f32 %v706, %v762
      %v786 = vadd.f32 %v707, %v765
      %v787 = vadd.f32 %v708, %v767
      %v788 = vadd.f32 %v709, %v770
      %v789 = vadd.f32 %v710, %v772
      %v790 = vadd.f32 %v711, %v775
      %v791 = vadd.f32 %v712, %v777
      %v792 = vadd.f32 %v713, %v780
      %v793 = vadd.f32 %v714, %v782
      %s794 = scalar_lea.vmem %s1, 14
      %v795 = vld [vmem:[%s794] sm:$0x3]
      %vm796 = vsmask.f32 5376
      %v797 = vrot.slane %v229, 2
      %v798 = vrot.slane %v225, 3
      %v799 = vor.u32 %v797, %v798
      %v800 = vrot.slane %v237, 2
      %v801 = vrot.slane %v233, 3
      %v802 = vor.u32 %v800, %v801
      %v803 = vsel %vm796, %v799, %v802
      %v804 = vrot.slane %v245, 2
      %v805 = vrot.slane %v241, 3
      %v806 = vor.u32 %v804, %v805
      %v807 = vsel %vm796, %v802, %v806
      %v808 = vrot.slane %v253, 2
      %v809 = vrot.slane %v249, 3
      %v810 = vor.u32 %v808, %v809
      %v811 = vsel %vm796, %v806, %v810
      %v813 = vshrl.u32 %v719, 16
      %v815 = vrot.slane %v813, 2
      %v816 = vshll.u32 %v719, 16
      %v818 = vrot.slane %v816, 3
      %v819 = vor.u32 %v815, %v818
      %v820 = vsel %vm796, %v810, %v819
      %v822 = vshrl.u32 %v720, 16
      %v824 = vrot.slane %v822, 2
      %v825 = vshll.u32 %v720, 16
      %v827 = vrot.slane %v825, 3
      %v828 = vor.u32 %v824, %v827
      %v829 = vsel %vm796, %v819, %v828
      %v831 = vsel %vm261, %v803, 0
      %v834 = vsel %vm261, %v807, 0
      %v837 = vsel %vm261, %v811, 0
      %v840 = vsel %vm261, %v820, 0
      %v843 = vsel %vm261, %v829, 0
      %v846 = vsel %vm277, %v795, 0
      %848 = vmatpush.bf16.msra.mxu0 0
      %849 = vmatpush.bf16.msra.mxu0 0
      %850 = vmatpush.bf16.msra.mxu0 0
      %851 = vmatpush.bf16.msra.mxu0 0
      %852 = vmatpush.bf16.msra.mxu0 0
      %853 = vmatpush.bf16.msra.mxu0 0
      %854 = vmatpush.bf16.msra.mxu0 0
      %855 = vmatpush.bf16.msra.mxu0 %v846
      %856 = vmatmul.bf16.gmra.mxu0 %v831
      %v857 = vpop.f32.mrf.mxu0
      %v858 = vadd.f32 0.0, %v857
      %v859 = vpop.f32.mrf.mxu0
      %v860 = vadd.f32 0.0, %v859
      %861 = vmatmul.bf16.gmra.mxu0 %v834
      %v862 = vpop.f32.mrf.mxu0
      %v863 = vadd.f32 0.0, %v862
      %v864 = vpop.f32.mrf.mxu0
      %v865 = vadd.f32 0.0, %v864
      %866 = vmatmul.bf16.gmra.mxu0 %v837
      %v867 = vpop.f32.mrf.mxu0
      %v868 = vadd.f32 0.0, %v867
      %v869 = vpop.f32.mrf.mxu0
      %v870 = vadd.f32 0.0, %v869
      %871 = vmatmul.bf16.gmra.mxu0 %v840
      %v872 = vpop.f32.mrf.mxu0
      %v873 = vadd.f32 0.0, %v872
      %v874 = vpop.f32.mrf.mxu0
      %v875 = vadd.f32 0.0, %v874
      %876 = vmatmul.bf16.gmra.mxu0 %v843
      %v877 = vpop.f32.mrf.mxu0
      %v878 = vadd.f32 0.0, %v877
      %v879 = vpop.f32.mrf.mxu0
      %v880 = vadd.f32 0.0, %v879
      %881 = vdwg.mxu0
      %v882 = vadd.f32 %v784, %v858
      %v883 = vadd.f32 %v785, %v860
      %v884 = vadd.f32 %v786, %v863
      %v885 = vadd.f32 %v787, %v865
      %v886 = vadd.f32 %v788, %v868
      %v887 = vadd.f32 %v789, %v870
      %v888 = vadd.f32 %v790, %v873
      %v889 = vadd.f32 %v791, %v875
      %v890 = vadd.f32 %v792, %v878
      %v891 = vadd.f32 %v793, %v880
      %s892 = scalar_lea.vmem %s1, 16
      %v893 = vld [vmem:[%s892] sm:$0x3]
      %vm894 = vcmask 1044480
      %v895 = vrot.slane %v211, 3
      %v896 = vrot.slane %v212, 3
      %v897 = vsel %vm894, %v895, %v896
      %v898 = vrot.slane %v213, 3
      %v899 = vsel %vm894, %v896, %v898
      %v900 = vrot.slane %v214, 3
      %v901 = vsel %vm894, %v898, %v900
      %v902 = vrot.slane %v719, 3
      %v903 = vsel %vm894, %v900, %v902
      %v904 = vrot.slane %v720, 3
      %v905 = vsel %vm894, %v902, %v904
      %v907 = vsel %vm261, %v897, 0
      %v910 = vsel %vm261, %v899, 0
      %v913 = vsel %vm261, %v901, 0
      %v916 = vsel %vm261, %v903, 0
      %v919 = vsel %vm261, %v905, 0
      %v922 = vsel %vm277, %v893, 0
      %924 = vmatpush.bf16.msra.mxu0 0
      %925 = vmatpush.bf16.msra.mxu0 0
      %926 = vmatpush.bf16.msra.mxu0 0
      %927 = vmatpush.bf16.msra.mxu0 0
      %928 = vmatpush.bf16.msra.mxu0 0
      %929 = vmatpush.bf16.msra.mxu0 0
      %930 = vmatpush.bf16.msra.mxu0 0
      %931 = vmatpush.bf16.msra.mxu0 %v922
      %932 = vmatmul.bf16.gmra.mxu0 %v907
      %v933 = vpop.f32.mrf.mxu0
      %v934 = vadd.f32 0.0, %v933
      %v935 = vpop.f32.mrf.mxu0
      %v936 = vadd.f32 0.0, %v935
      %937 = vmatmul.bf16.gmra.mxu0 %v910
      %v938 = vpop.f32.mrf.mxu0
      %v939 = vadd.f32 0.0, %v938
      %v940 = vpop.f32.mrf.mxu0
      %v941 = vadd.f32 0.0, %v940
      %942 = vmatmul.bf16.gmra.mxu0 %v913
      %v943 = vpop.f32.mrf.mxu0
      %v944 = vadd.f32 0.0, %v943
      %v945 = vpop.f32.mrf.mxu0
      %v946 = vadd.f32 0.0, %v945
      %947 = vmatmul.bf16.gmra.mxu0 %v916
      %v948 = vpop.f32.mrf.mxu0
      %v949 = vadd.f32 0.0, %v948
      %v950 = vpop.f32.mrf.mxu0
      %v951 = vadd.f32 0.0, %v950
      %952 = vmatmul.bf16.gmra.mxu0 %v919
      %v953 = vpop.f32.mrf.mxu0
      %v954 = vadd.f32 0.0, %v953
      %v955 = vpop.f32.mrf.mxu0
      %v956 = vadd.f32 0.0, %v955
      %957 = vdwg.mxu0
      %v958 = vadd.f32 %v882, %v934
      %v959 = vadd.f32 %v883, %v936
      %v960 = vadd.f32 %v884, %v939
      %v961 = vadd.f32 %v885, %v941
      %v962 = vadd.f32 %v886, %v944
      %v963 = vadd.f32 %v887, %v946
      %v964 = vadd.f32 %v888, %v949
      %v965 = vadd.f32 %v889, %v951
      %v966 = vadd.f32 %v890, %v954
      %v967 = vadd.f32 %v891, %v956
      %v968 = vld [vmem:[%s2] sm:$0x1]
      %v970 = vperm.slane %v968, 0
      %v972 = vadd.f32 %v958, %v970
      %v973 = vadd.f32 %v959, %v970
      %v974 = vadd.f32 %v960, %v970
      %v975 = vadd.f32 %v961, %v970
      %v976 = vadd.f32 %v962, %v970
      %v977 = vadd.f32 %v963, %v970
      %v978 = vadd.f32 %v964, %v970
      %v979 = vadd.f32 %v965, %v970
      %v980 = vadd.f32 %v966, %v970
      %v981 = vadd.f32 %v967, %v970
      %v982 = vmin.f32 %v972, 20.0
      %v983 = vmin.f32 %v973, 20.0
      %v984 = vmin.f32 %v974, 20.0
      %v985 = vmin.f32 %v975, 20.0
      %v986 = vmin.f32 %v976, 20.0
      %v987 = vmin.f32 %v977, 20.0
      %v988 = vmin.f32 %v978, 20.0
      %v989 = vmin.f32 %v979, 20.0
      %v990 = vmin.f32 %v980, 20.0
      %v991 = vmin.f32 %v981, 20.0
      %v992 = vmul.f32 %v982, 1.442695
      %v993 = vpow.pop %v992
      %v994 = vmul.f32 %v983, 1.442695
      %v995 = vpow.pop %v994
      %v996 = vmul.f32 %v984, 1.442695
      %v997 = vpow.pop %v996
      %v998 = vmul.f32 %v985, 1.442695
      %v999 = vpow.pop %v998
      %v1000 = vmul.f32 %v986, 1.442695
      %v1001 = vpow.pop %v1000
      %v1002 = vmul.f32 %v987, 1.442695
      %v1003 = vpow.pop %v1002
      %v1004 = vmul.f32 %v988, 1.442695
      %v1005 = vpow.pop %v1004
      %v1006 = vmul.f32 %v989, 1.442695
      %v1007 = vpow.pop %v1006
      %v1008 = vmul.f32 %v990, 1.442695
      %v1009 = vpow.pop %v1008
      %v1010 = vmul.f32 %v991, 1.442695
      %v1011 = vpow.pop %v1010
      %v1012 = vadd.f32 %v993, 2.0
      %v1013 = vadd.f32 %v995, 2.0
      %v1014 = vadd.f32 %v997, 2.0
      %v1015 = vadd.f32 %v999, 2.0
      %v1016 = vadd.f32 %v1001, 2.0
      %v1017 = vadd.f32 %v1003, 2.0
      %v1018 = vadd.f32 %v1005, 2.0
      %v1019 = vadd.f32 %v1007, 2.0
      %v1020 = vadd.f32 %v1009, 2.0
      %v1021 = vadd.f32 %v1011, 2.0
      %v1022 = vmul.f32 %v993, %v1012
      %v1023 = vmul.f32 %v995, %v1013
      %v1024 = vmul.f32 %v997, %v1014
      %v1025 = vmul.f32 %v999, %v1015
      %v1026 = vmul.f32 %v1001, %v1016
      %v1027 = vmul.f32 %v1003, %v1017
      %v1028 = vmul.f32 %v1005, %v1018
      %v1029 = vmul.f32 %v1007, %v1019
      %v1030 = vmul.f32 %v1009, %v1020
      %v1031 = vmul.f32 %v1011, %v1021
      %v1032 = vadd.f32 %v1022, 2.0
      %v1033 = vadd.f32 %v1023, 2.0
      %v1034 = vadd.f32 %v1024, 2.0
      %v1035 = vadd.f32 %v1025, 2.0
      %v1036 = vadd.f32 %v1026, 2.0
      %v1037 = vadd.f32 %v1027, 2.0
      %v1038 = vadd.f32 %v1028, 2.0
      %v1039 = vadd.f32 %v1029, 2.0
      %v1040 = vadd.f32 %v1030, 2.0
      %v1041 = vadd.f32 %v1031, 2.0
      %v1042 = vrcp.pop %v1032
      %v1043 = vrcp.pop %v1033
      %v1044 = vrcp.pop %v1034
      %v1045 = vrcp.pop %v1035
      %v1046 = vrcp.pop %v1036
      %v1047 = vrcp.pop %v1037
      %v1048 = vrcp.pop %v1038
      %v1049 = vrcp.pop %v1039
      %v1050 = vrcp.pop %v1040
      %v1051 = vrcp.pop %v1041
      %v1052 = vmul.f32 %v1022, %v1042
      %v1053 = vmul.f32 %v1023, %v1043
      %v1054 = vmul.f32 %v1024, %v1044
      %v1055 = vmul.f32 %v1025, %v1045
      %v1056 = vmul.f32 %v1026, %v1046
      %v1057 = vmul.f32 %v1027, %v1047
      %v1058 = vmul.f32 %v1028, %v1048
      %v1059 = vmul.f32 %v1029, %v1049
      %v1060 = vmul.f32 %v1030, %v1050
      %v1061 = vmul.f32 %v1031, %v1051
      %v1062 = vmul.f32 %v972, %v1052
      %v1063 = vmul.f32 %v973, %v1053
      %v1064 = vmul.f32 %v974, %v1054
      %v1065 = vmul.f32 %v975, %v1055
      %v1066 = vmul.f32 %v976, %v1056
      %v1067 = vmul.f32 %v977, %v1057
      %v1068 = vmul.f32 %v978, %v1058
      %v1069 = vmul.f32 %v979, %v1059
      %v1070 = vmul.f32 %v980, %v1060
      %v1071 = vmul.f32 %v981, %v1061
      %v1072 = vpack.c.bf16 %v1062, %v1062
      %v1073 = vpack.c.bf16 %v1063, %v1063
      %v1074 = vpack.c.bf16 %v1064, %v1064
      %v1075 = vpack.c.bf16 %v1065, %v1065
      %v1076 = vpack.c.bf16 %v1066, %v1066
      %v1077 = vpack.c.bf16 %v1067, %v1067
      %v1078 = vpack.c.bf16 %v1068, %v1068
      %v1079 = vpack.c.bf16 %v1069, %v1069
      %v1080 = vpack.c.bf16 %v1070, %v1070
      %v1081 = vpack.c.bf16 %v1071, %v1071
      %vm1082 = vcmask 60416
      %1083 = vst.msk [vmem:[%s170] sm:$0xf] %vm1082, %v1072
      %1084 = vst.msk [vmem:[%s170 + $0x4] sm:$0xf] %vm1082, %v1073
      %1085 = vst.msk [vmem:[%s170 + $0x8] sm:$0xf] %vm1082, %v1074
      %1086 = vst.msk [vmem:[%s170 + $0xc] sm:$0xf] %vm1082, %v1075
      %1087 = vst.msk [vmem:[%s170 + $0x10] sm:$0xf] %vm1082, %v1076
      %1088 = vst.msk [vmem:[%s170 + $0x14] sm:$0xf] %vm1082, %v1077
      %1089 = vst.msk [vmem:[%s170 + $0x18] sm:$0xf] %vm1082, %v1078
      %1090 = vst.msk [vmem:[%s170 + $0x1c] sm:$0xf] %vm1082, %v1079
      %1091 = vst.msk [vmem:[%s170 + $0x20] sm:$0xf] %vm1082, %v1080
      %1092 = vst.msk [vmem:[%s170 + $0x24] sm:$0xf] %vm1082, %v1081
      %p1093 = scmp.lt.s32.totalorder %s14, 1
      %s1094 = scalar_select %p1093, %s14, 1
      %s1095 = smul.addr %s1094, 10
      %s1096 = smul.addr %s1095, 4
      %s1097 = scalar_lea.vmem %s3, %s1096
      // Predicated region
      $region33: #{resblock_body_forward.11} parent=31 // pred_check
        %p1098 = pneg %p100
      $region34: #{resblock_body_forward.11} parent=31 // pred_check_branch
        %1100 = sbr.rel (%p1098) target = $region36
      $region35: #{resblock_body_forward.11} parent=31 // pred_region
        _
      $region36: #{resblock_body_forward.11} parent=31 // pred_fallthru
        _
    $region32: #{resblock_body_forward.11} parent=5 // pred_fallthru
      _
    %p1101 = scmp.le.s32.totalorder 2, %s9
    // Predicated region
    $region37: #{resblock_body_forward.11} parent=5 // pred_check
      %p1102 = pneg %p1101
    $region38: #{resblock_body_forward.11} parent=5 // pred_check_branch
      %1104 = sbr.rel (%p1102) target = $region40
    $region39: #{resblock_body_forward.11} parent=5 // pred_region
      %s1105 = ssub.s32 %s9, 2
      // Predicated region
      $region41: #{resblock_body_forward.11} parent=39 // pred_check
        %p1106 = pneg %p106
      $region42: #{resblock_body_forward.11} parent=39 // pred_check_branch
        %1108 = sbr.rel (%p1106) target = $region44
      $region43: #{resblock_body_forward.11} parent=39 // pred_region
        %p1109 = scmp.lt.s32.totalorder %s15, 1
        %s1110 = scalar_select %p1109, %s15, 1
        %s1111 = smul.addr %s1110, 10
        %s1112 = smul.addr %s1111, 4
        %s1113 = scalar_lea.vmem %s3, %s1112
      $region44: #{resblock_body_forward.11} parent=39 // pred_fallthru
        _
    $region40: #{resblock_body_forward.11} parent=5 // pred_fallthru
      _
  $region6: #{resblock_body_forward.11} parent=0 // loop_footer
    %s13 = sadd.s32 1, %s9
  $region7: #{resblock_body_forward.11} parent=0 // loop_footer_branch
    %8 = sbr.rel target = $region3
  $region8: #{resblock_body_forward.11} parent=0 // loop_exit
    _

</llo_original>
